<compile_context>
chip_gen: v7x
topology: tpu7x:2x2x1
jax: 0.10.0
libtpu: 0.0.40
codegen_flags: <defaults>
</compile_context>

<pallas_src>
import functools

import jax
import jax.numpy as jnp
from jax.experimental import pallas as pl
from jax.experimental.pallas import tpu as pltpu

INPUT_DIM = 784
HIDDEN_DIM = 400
LATENT_DIM = 20
NUM_CLASSES = 10
H2 = HIDDEN_DIM // 2          # 200
ML_WIDTH = 256                # lane-aligned fused mu|logvar head width
LV_OFF = 128                  # logvar columns start at lane 128 (128-aligned slice)


def _cvae_kernel(
    x_ref, c_ref, eps_ref,                     # batch-tiled inputs
    w1x_ref, w1c_ref, b1_ref,                  # encoder layer 1 (x part / class part)
    w2_ref, b2_ref,                            # encoder layer 2
    wml_ref, bml_ref,                          # fused, lane-aligned fc_mu | fc_logvar
    wd1z_ref, wd1c_ref, bd1_ref,               # decoder layer 1 (z part / class part)
    wd2_ref, bd2_ref,                          # decoder layer 2
    wd3_ref, bd3_ref,                          # decoder layer 3
    recon_ref, mu_ref, logvar_ref,
):
    f32 = jnp.float32
    bf16 = jnp.bfloat16

    # x arrives as f32 rows from HBM; cast on the VPU (free) right before the MXU.
    x = x_ref[...].astype(bf16)                      # (BM, 784)
    eps = eps_ref[...]                               # (BM, 20) f32

    # one_hot(c) built in-kernel from the (BM, 1) int32 label column.
    cls = c_ref[...]                                 # (BM, 1) int32
    iota = jax.lax.broadcasted_iota(jnp.int32, (cls.shape[0], NUM_CLASSES), 1)
    onehot = (iota == cls).astype(bf16)              # (BM, 10)

    # ---- encoder ----
    # Linear([x | onehot]) split into an x-part matmul and a tiny K=10 class matmul.
    h1 = (jnp.dot(x, w1x_ref[...], preferred_element_type=f32)
          + jnp.dot(onehot, w1c_ref[...], preferred_element_type=f32)
          + b1_ref[...])
    h1 = jnp.maximum(h1, 0.0)

    h2 = jnp.dot(h1.astype(bf16), w2_ref[...], preferred_element_type=f32) + b2_ref[...]
    h2 = jnp.maximum(h2, 0.0)

    # fused mu|logvar head: one (200 -> 256) matmul, mu at lanes [0,20),
    # logvar at lanes [128,148) -> both slices start on a 128-lane boundary.
    ml = jnp.dot(h2.astype(bf16), wml_ref[...], preferred_element_type=f32) + bml_ref[...]
    mu = ml[:, :LATENT_DIM]
    logvar = ml[:, LV_OFF:LV_OFF + LATENT_DIM]

    # ---- reparameterize ----
    z = mu + eps * jnp.exp(0.5 * logvar)

    # ---- decoder ----
    d1 = (jnp.dot(z.astype(bf16), wd1z_ref[...], preferred_element_type=f32)
          + jnp.dot(onehot, wd1c_ref[...], preferred_element_type=f32)
          + bd1_ref[...])
    d1 = jnp.maximum(d1, 0.0)

    d2 = jnp.dot(d1.astype(bf16), wd2_ref[...], preferred_element_type=f32) + bd2_ref[...]
    d2 = jnp.maximum(d2, 0.0)

    d3 = jnp.dot(d2.astype(bf16), wd3_ref[...], preferred_element_type=f32) + bd3_ref[...]

    # TODO(synk): recon could be emitted as bf16 to halve the dominant output DMA;
    # kept f32 here to preserve reconstruction / BCE-loss precision.
    recon_ref[...] = jax.nn.sigmoid(d3)
    mu_ref[...] = mu
    logvar_ref[...] = logvar


def init_params(key):
    """Deterministic synthetic parameters, (in, out) layout, bias as (1, out), f32."""
    ks = jax.random.split(key, 16)
    s = 0.05

    def w(k, shape):
        return (s * jax.random.normal(k, shape)).astype(jnp.float32)

    return {
        # encoder layer 1: Linear(input+classes -> hidden), split into x / class parts
        "w1x": w(ks[0], (INPUT_DIM, HIDDEN_DIM)),
        "w1c": w(ks[1], (NUM_CLASSES, HIDDEN_DIM)),
        "b1": w(ks[2], (1, HIDDEN_DIM)),
        # encoder layer 2: Linear(hidden -> hidden//2)
        "w2": w(ks[3], (HIDDEN_DIM, H2)),
        "b2": w(ks[4], (1, H2)),
        # fc_mu / fc_logvar: Linear(hidden//2 -> latent)
        "wmu": w(ks[5], (H2, LATENT_DIM)),
        "bmu": w(ks[6], (1, LATENT_DIM)),
        "wlv": w(ks[7], (H2, LATENT_DIM)),
        "blv": w(ks[8], (1, LATENT_DIM)),
        # decoder layer 1: Linear(latent+classes -> hidden//2), split
        "wd1z": w(ks[9], (LATENT_DIM, H2)),
        "wd1c": w(ks[10], (NUM_CLASSES, H2)),
        "bd1": w(ks[11], (1, H2)),
        # decoder layer 2: Linear(hidden//2 -> hidden)
        "wd2": w(ks[12], (H2, HIDDEN_DIM)),
        "bd2": w(ks[13], (1, HIDDEN_DIM)),
        # decoder layer 3: Linear(hidden -> input_dim)
        "wd3": w(ks[14], (HIDDEN_DIM, INPUT_DIM)),
        "bd3": w(ks[15], (1, INPUT_DIM)),
    }


def prepare_params(params):
    """One-time, per-model weight preparation (hoisted off the per-call path):
    bf16 casts for all matmul weights and the lane-aligned fused mu|logvar head."""
    bf16 = jnp.bfloat16
    f32 = jnp.float32

    wml = jnp.zeros((H2, ML_WIDTH), f32)
    wml = wml.at[:, :LATENT_DIM].set(params["wmu"])
    wml = wml.at[:, LV_OFF:LV_OFF + LATENT_DIM].set(params["wlv"])
    bml = jnp.zeros((1, ML_WIDTH), f32)
    bml = bml.at[:, :LATENT_DIM].set(params["bmu"])
    bml = bml.at[:, LV_OFF:LV_OFF + LATENT_DIM].set(params["blv"])

    return {
        "w1x": params["w1x"].astype(bf16),
        "w1c": params["w1c"].astype(bf16),
        "b1": params["b1"].astype(f32),
        "w2": params["w2"].astype(bf16),
        "b2": params["b2"].astype(f32),
        "wml": wml.astype(bf16),
        "bml": bml,
        "wd1z": params["wd1z"].astype(bf16),
        "wd1c": params["wd1c"].astype(bf16),
        "bd1": params["bd1"].astype(f32),
        "wd2": params["wd2"].astype(bf16),
        "bd2": params["bd2"].astype(f32),
        "wd3": params["wd3"].astype(bf16),
        "bd3": params["bd3"].astype(f32),
    }


def cvae_forward(x, c, eps, kp, *, block_m=512, vmem_limit_bytes=32 << 20):
    """Pallas-backed ConditionalVAE.forward.

    x:   (B, 784) float32 (already flattened, equivalent to x.view(-1, 784))
    c:   (B,) int32 class labels
    eps: (B, latent) float32 noise (stands in for torch.randn_like)
    kp:  prepare_params(init_params(...)) output
    returns (recon, mu, logvar), all float32
    """
    B = x.shape[0]
    f32 = jnp.float32

    def round_up(a, m):
        return (a + m - 1) // m * m

    # Batch tile: multiple of 8 sublanes, at most block_m, and at most half the
    # batch so dimension_semantics=("parallel",) yields >=2 grid steps whenever
    # B > 8 (both v7x TensorCores run).  block_m=512 amortizes per-step overhead
    # on v5e/v6e while staying comfortably inside v7x's 64 MiB VMEM.
    BM = min(block_m, round_up(pl.cdiv(B, 2), 8))
    Bp = round_up(B, BM)
    if Bp != B:
        pad = Bp - B
        x = jnp.pad(x, ((0, pad), (0, 0)))
        c = jnp.pad(c, ((0, pad),))
        eps = jnp.pad(eps, ((0, pad), (0, 0)))

    x = x.astype(f32)                         # streamed f32; cast to bf16 in-kernel
    c_col = c.astype(jnp.int32).reshape(Bp, 1)
    eps = eps.astype(f32)

    grid = (Bp // BM,)

    def batch_spec(n):
        return pl.BlockSpec((BM, n), lambda i: (i, 0))

    def const_spec(arr):
        # Full-array block with a constant index_map -> weight stays resident in
        # VMEM across all grid steps (DMA'd once).
        return pl.BlockSpec(arr.shape, lambda i: (0, 0))

    in_specs = [
        batch_spec(INPUT_DIM),       # x
        batch_spec(1),               # c (int32 column)
        batch_spec(LATENT_DIM),      # eps
        const_spec(kp["w1x"]), const_spec(kp["w1c"]), const_spec(kp["b1"]),
        const_spec(kp["w2"]), const_spec(kp["b2"]),
        const_spec(kp["wml"]), const_spec(kp["bml"]),
        const_spec(kp["wd1z"]), const_spec(kp["wd1c"]), const_spec(kp["bd1"]),
        const_spec(kp["wd2"]), const_spec(kp["bd2"]),
        const_spec(kp["wd3"]), const_spec(kp["bd3"]),
    ]
    out_specs = (
        batch_spec(INPUT_DIM),
        batch_spec(LATENT_DIM),
        batch_spec(LATENT_DIM),
    )

    # Advisory cost estimate for XLA's scheduler (now matches the in-kernel work:
    # f32 x/recon rows + int32 label + eps, weights read once).
    mac = (INPUT_DIM * HIDDEN_DIM + NUM_CLASSES * HIDDEN_DIM
           + HIDDEN_DIM * H2 + H2 * (2 * LATENT_DIM)
           + LATENT_DIM * H2 + NUM_CLASSES * H2
           + H2 * HIDDEN_DIM + HIDDEN_DIM * INPUT_DIM)
    weight_bytes = sum(int(v.size) * v.dtype.itemsize for v in kp.values())
    row_bytes = (4 * INPUT_DIM + 4 + 4 * LATENT_DIM          # x, c, eps in
                 + 4 * INPUT_DIM + 2 * 4 * LATENT_DIM)       # recon, mu, logvar out
    cost = pl.CostEstimate(
        flops=2 * mac * Bp,
        transcendentals=(LATENT_DIM + INPUT_DIM) * Bp,       # exp + sigmoid
        bytes_accessed=weight_bytes + row_bytes * Bp,
    )

    recon, mu, logvar = pl.pallas_call(
        _cvae_kernel,
        out_shape=(
            jax.ShapeDtypeStruct((Bp, INPUT_DIM), f32),
            jax.ShapeDtypeStruct((Bp, LATENT_DIM), f32),
            jax.ShapeDtypeStruct((Bp, LATENT_DIM), f32),
        ),
        grid_spec=pltpu.PrefetchScalarGridSpec(
            num_scalar_prefetch=0,
            grid=grid,
            in_specs=in_specs,
            out_specs=out_specs,
        ),
        compiler_params=pltpu.CompilerParams(
            dimension_semantics=("parallel",),   # megacore sharding on v7x
            vmem_limit_bytes=vmem_limit_bytes,   # ~18 MiB peak at BM=512
        ),
        cost_estimate=cost,
    )(x, c_col, eps,
      kp["w1x"], kp["w1c"], kp["b1"],
      kp["w2"], kp["b2"],
      kp["wml"], kp["bml"],
      kp["wd1z"], kp["wd1c"], kp["bd1"],
      kp["wd2"], kp["bd2"],
      kp["wd3"], kp["bd3"])

    return recon[:B], mu[:B], logvar[:B]


def cvae_forward_ref(x, c, eps, params):
    """Pure-JAX reference mirroring the PyTorch module (bf16 matmuls, f32 accum)."""
    bf16 = jnp.bfloat16
    f32 = jnp.float32
    dot = functools.partial(jnp.dot, preferred_element_type=f32)
    onehot = jax.nn.one_hot(c, NUM_CLASSES, dtype=bf16)

    h1 = jax.nn.relu(dot(x.astype(bf16), params["w1x"].astype(bf16))
                     + dot(onehot, params["w1c"].astype(bf16)) + params["b1"])
    h2 = jax.nn.relu(dot(h1.astype(bf16), params["w2"].astype(bf16)) + params["b2"])
    mu = dot(h2.astype(bf16), params["wmu"].astype(bf16)) + params["bmu"]
    logvar = dot(h2.astype(bf16), params["wlv"].astype(bf16)) + params["blv"]
    z = mu + eps * jnp.exp(0.5 * logvar)
    d1 = jax.nn.relu(dot(z.astype(bf16), params["wd1z"].astype(bf16))
                     + dot(onehot, params["wd1c"].astype(bf16)) + params["bd1"])
    d2 = jax.nn.relu(dot(d1.astype(bf16), params["wd2"].astype(bf16)) + params["bd2"])
    recon = jax.nn.sigmoid(dot(d2.astype(bf16), params["wd3"].astype(bf16)) + params["bd3"])
    return recon, mu, logvar


if __name__ == "__main__":
    key = jax.random.PRNGKey(0)
    k_param, k_x, k_c, k_eps = jax.random.split(key, 4)

    B = 8
    params = init_params(k_param)
    kernel_params = prepare_params(params)      # one-time weight prep (off hot path)

    x = jax.random.uniform(k_x, (B, INPUT_DIM), dtype=jnp.float32)       # "image" in [0,1)
    c = jax.random.randint(k_c, (B,), 0, NUM_CLASSES, dtype=jnp.int32)   # class labels
    eps = jax.random.normal(k_eps, (B, LATENT_DIM), dtype=jnp.float32)   # reparam noise

    recon, mu, logvar = jax.block_until_ready(cvae_forward(x, c, eps, kernel_params))

    r_ref, mu_ref, lv_ref = cvae_forward_ref(x, c, eps, params)
    assert recon.shape == (B, INPUT_DIM)
    assert mu.shape == (B, LATENT_DIM) and logvar.shape == (B, LATENT_DIM)
    # bf16 matmuls (f32 accumulation) -> compare against a bf16-matched reference.
    assert jnp.allclose(recon, r_ref, atol=5e-3, rtol=5e-3)
    assert jnp.allclose(mu, mu_ref, atol=5e-3, rtol=5e-3)
    assert jnp.allclose(logvar, lv_ref, atol=5e-3, rtol=5e-3)

    print("KERNEL_OK")
</pallas_src>

<mosaic_0001>
module attributes {stable_mosaic.version = 11 : i64} {
  func.func @_cvae_kernel(%arg0: i32, %arg1: memref<8x784xf32, #tpu.memory_space<vmem>>, %arg2: memref<8x1xi32, #tpu.memory_space<vmem>>, %arg3: memref<8x20xf32, #tpu.memory_space<vmem>>, %arg4: memref<784x400xbf16, #tpu.memory_space<vmem>>, %arg5: memref<10x400xbf16, #tpu.memory_space<vmem>>, %arg6: memref<1x400xf32, #tpu.memory_space<vmem>>, %arg7: memref<400x200xbf16, #tpu.memory_space<vmem>>, %arg8: memref<1x200xf32, #tpu.memory_space<vmem>>, %arg9: memref<200x256xbf16, #tpu.memory_space<vmem>>, %arg10: memref<1x256xf32, #tpu.memory_space<vmem>>, %arg11: memref<20x200xbf16, #tpu.memory_space<vmem>>, %arg12: memref<10x200xbf16, #tpu.memory_space<vmem>>, %arg13: memref<1x200xf32, #tpu.memory_space<vmem>>, %arg14: memref<200x400xbf16, #tpu.memory_space<vmem>>, %arg15: memref<1x400xf32, #tpu.memory_space<vmem>>, %arg16: memref<400x784xbf16, #tpu.memory_space<vmem>>, %arg17: memref<1x784xf32, #tpu.memory_space<vmem>>, %arg18: memref<8x784xf32, #tpu.memory_space<vmem>>, %arg19: memref<8x20xf32, #tpu.memory_space<vmem>>, %arg20: memref<8x20xf32, #tpu.memory_space<vmem>>) attributes {dimension_semantics = [#tpu.dimension_semantics<parallel>], iteration_bounds = array<i64: 1>, scalar_prefetch = 0 : i64, scratch_operands = 0 : i64, tpu.core_type = #tpu.core_type<tc>, window_params = [{transform_indices = @transform_0, window_bounds = array<i64: 8, 784>}, {transform_indices = @transform_1, window_bounds = array<i64: 8, 1>}, {transform_indices = @transform_2, window_bounds = array<i64: 8, 20>}, {pipeline_mode = #tpu.pipeline_mode<synchronous>, transform_indices = @transform_3, window_bounds = array<i64: 784, 400>}, {pipeline_mode = #tpu.pipeline_mode<synchronous>, transform_indices = @transform_4, window_bounds = array<i64: 10, 400>}, {pipeline_mode = #tpu.pipeline_mode<synchronous>, transform_indices = @transform_5, window_bounds = array<i64: 1, 400>}, {pipeline_mode = #tpu.pipeline_mode<synchronous>, transform_indices = @transform_6, window_bounds = array<i64: 400, 200>}, {pipeline_mode = #tpu.pipeline_mode<synchronous>, transform_indices = @transform_7, window_bounds = array<i64: 1, 200>}, {pipeline_mode = #tpu.pipeline_mode<synchronous>, transform_indices = @transform_8, window_bounds = array<i64: 200, 256>}, {pipeline_mode = #tpu.pipeline_mode<synchronous>, transform_indices = @transform_9, window_bounds = array<i64: 1, 256>}, {pipeline_mode = #tpu.pipeline_mode<synchronous>, transform_indices = @transform_10, window_bounds = array<i64: 20, 200>}, {pipeline_mode = #tpu.pipeline_mode<synchronous>, transform_indices = @transform_11, window_bounds = array<i64: 10, 200>}, {pipeline_mode = #tpu.pipeline_mode<synchronous>, transform_indices = @transform_12, window_bounds = array<i64: 1, 200>}, {pipeline_mode = #tpu.pipeline_mode<synchronous>, transform_indices = @transform_13, window_bounds = array<i64: 200, 400>}, {pipeline_mode = #tpu.pipeline_mode<synchronous>, transform_indices = @transform_14, window_bounds = array<i64: 1, 400>}, {pipeline_mode = #tpu.pipeline_mode<synchronous>, transform_indices = @transform_15, window_bounds = array<i64: 400, 784>}, {pipeline_mode = #tpu.pipeline_mode<synchronous>, transform_indices = @transform_16, window_bounds = array<i64: 1, 784>}, {transform_indices = @transform_17, window_bounds = array<i64: 8, 784>}, {transform_indices = @transform_18, window_bounds = array<i64: 8, 20>}, {transform_indices = @transform_19, window_bounds = array<i64: 8, 20>}]} {
    %c0 = arith.constant 0 : index
    %c0_0 = arith.constant 0 : index
    %0 = vector.load %arg1[%c0, %c0_0] : memref<8x784xf32, #tpu.memory_space<vmem>>, vector<8x784xf32>
    %1 = arith.truncf %0 : vector<8x784xf32> to vector<8x784xbf16>
    %c0_1 = arith.constant 0 : index
    %c0_2 = arith.constant 0 : index
    %2 = vector.load %arg3[%c0_1, %c0_2] : memref<8x20xf32, #tpu.memory_space<vmem>>, vector<8x20xf32>
    %c0_3 = arith.constant 0 : index
    %c0_4 = arith.constant 0 : index
    %3 = vector.load %arg2[%c0_3, %c0_4] : memref<8x1xi32, #tpu.memory_space<vmem>>, vector<8x1xi32>
    %4 = tpu.iota {dimensions = array<i32: 1>} : vector<8x10xi32>
    %5 = vector.broadcast %3 : vector<8x1xi32> to vector<8x10xi32>
    %6 = arith.cmpi eq, %4, %5 : vector<8x10xi32>
    %7 = arith.extui %6 : vector<8x10xi1> to vector<8x10xi32>
    %8 = arith.sitofp %7 : vector<8x10xi32> to vector<8x10xf32>
    %9 = arith.truncf %8 : vector<8x10xf32> to vector<8x10xbf16>
    %c0_5 = arith.constant 0 : index
    %c0_6 = arith.constant 0 : index
    %10 = vector.load %arg4[%c0_5, %c0_6] : memref<784x400xbf16, #tpu.memory_space<vmem>>, vector<784x400xbf16>
    %cst = arith.constant dense<0.000000e+00> : vector<8x400xf32>
    %11 = tpu.matmul %1, %10, %cst {dimension_numbers = #tpu.dot_dimension_numbers<[1], [0], [0], [1], [0, 0, 1, 1], [], []>} : vector<8x784xbf16>, vector<784x400xbf16>, vector<8x400xf32> -> vector<8x400xf32>
    %c0_7 = arith.constant 0 : index
    %c0_8 = arith.constant 0 : index
    %12 = vector.load %arg5[%c0_7, %c0_8] : memref<10x400xbf16, #tpu.memory_space<vmem>>, vector<10x400xbf16>
    %cst_9 = arith.constant dense<0.000000e+00> : vector<8x400xf32>
    %13 = tpu.matmul %9, %12, %cst_9 {dimension_numbers = #tpu.dot_dimension_numbers<[1], [0], [0], [1], [0, 0, 1, 1], [], []>} : vector<8x10xbf16>, vector<10x400xbf16>, vector<8x400xf32> -> vector<8x400xf32>
    %14 = arith.addf %11, %13 : vector<8x400xf32>
    %c0_10 = arith.constant 0 : index
    %c0_11 = arith.constant 0 : index
    %15 = vector.load %arg6[%c0_10, %c0_11] : memref<1x400xf32, #tpu.memory_space<vmem>>, vector<1x400xf32>
    %16 = vector.broadcast %15 : vector<1x400xf32> to vector<8x400xf32>
    %17 = arith.addf %14, %16 : vector<8x400xf32>
    %cst_12 = arith.constant 0.000000e+00 : f32
    %18 = vector.broadcast %cst_12 : f32 to vector<8x400xf32>
    %19 = arith.maximumf %17, %18 : vector<8x400xf32>
    %20 = arith.truncf %19 : vector<8x400xf32> to vector<8x400xbf16>
    %c0_13 = arith.constant 0 : index
    %c0_14 = arith.constant 0 : index
    %21 = vector.load %arg7[%c0_13, %c0_14] : memref<400x200xbf16, #tpu.memory_space<vmem>>, vector<400x200xbf16>
    %cst_15 = arith.constant dense<0.000000e+00> : vector<8x200xf32>
    %22 = tpu.matmul %20, %21, %cst_15 {dimension_numbers = #tpu.dot_dimension_numbers<[1], [0], [0], [1], [0, 0, 1, 1], [], []>} : vector<8x400xbf16>, vector<400x200xbf16>, vector<8x200xf32> -> vector<8x200xf32>
    %c0_16 = arith.constant 0 : index
    %c0_17 = arith.constant 0 : index
    %23 = vector.load %arg8[%c0_16, %c0_17] : memref<1x200xf32, #tpu.memory_space<vmem>>, vector<1x200xf32>
    %24 = vector.broadcast %23 : vector<1x200xf32> to vector<8x200xf32>
    %25 = arith.addf %22, %24 : vector<8x200xf32>
    %cst_18 = arith.constant 0.000000e+00 : f32
    %26 = vector.broadcast %cst_18 : f32 to vector<8x200xf32>
    %27 = arith.maximumf %25, %26 : vector<8x200xf32>
    %28 = arith.truncf %27 : vector<8x200xf32> to vector<8x200xbf16>
    %c0_19 = arith.constant 0 : index
    %c0_20 = arith.constant 0 : index
    %29 = vector.load %arg9[%c0_19, %c0_20] : memref<200x256xbf16, #tpu.memory_space<vmem>>, vector<200x256xbf16>
    %cst_21 = arith.constant dense<0.000000e+00> : vector<8x256xf32>
    %30 = tpu.matmul %28, %29, %cst_21 {dimension_numbers = #tpu.dot_dimension_numbers<[1], [0], [0], [1], [0, 0, 1, 1], [], []>} : vector<8x200xbf16>, vector<200x256xbf16>, vector<8x256xf32> -> vector<8x256xf32>
    %c0_22 = arith.constant 0 : index
    %c0_23 = arith.constant 0 : index
    %31 = vector.load %arg10[%c0_22, %c0_23] : memref<1x256xf32, #tpu.memory_space<vmem>>, vector<1x256xf32>
    %32 = vector.broadcast %31 : vector<1x256xf32> to vector<8x256xf32>
    %33 = arith.addf %30, %32 : vector<8x256xf32>
    %34 = vector.extract_strided_slice %33 {offsets = [0, 0], sizes = [8, 20], strides = [1, 1]} : vector<8x256xf32> to vector<8x20xf32>
    %35 = vector.extract_strided_slice %33 {offsets = [0, 128], sizes = [8, 20], strides = [1, 1]} : vector<8x256xf32> to vector<8x20xf32>
    %cst_24 = arith.constant 5.000000e-01 : f32
    %36 = vector.broadcast %cst_24 : f32 to vector<8x20xf32>
    %37 = arith.mulf %36, %35 : vector<8x20xf32>
    %38 = math.exp %37 : vector<8x20xf32>
    %39 = arith.mulf %2, %38 : vector<8x20xf32>
    %40 = arith.addf %34, %39 : vector<8x20xf32>
    %41 = arith.truncf %40 : vector<8x20xf32> to vector<8x20xbf16>
    %c0_25 = arith.constant 0 : index
    %c0_26 = arith.constant 0 : index
    %42 = vector.load %arg11[%c0_25, %c0_26] : memref<20x200xbf16, #tpu.memory_space<vmem>>, vector<20x200xbf16>
    %cst_27 = arith.constant dense<0.000000e+00> : vector<8x200xf32>
    %43 = tpu.matmul %41, %42, %cst_27 {dimension_numbers = #tpu.dot_dimension_numbers<[1], [0], [0], [1], [0, 0, 1, 1], [], []>} : vector<8x20xbf16>, vector<20x200xbf16>, vector<8x200xf32> -> vector<8x200xf32>
    %c0_28 = arith.constant 0 : index
    %c0_29 = arith.constant 0 : index
    %44 = vector.load %arg12[%c0_28, %c0_29] : memref<10x200xbf16, #tpu.memory_space<vmem>>, vector<10x200xbf16>
    %cst_30 = arith.constant dense<0.000000e+00> : vector<8x200xf32>
    %45 = tpu.matmul %9, %44, %cst_30 {dimension_numbers = #tpu.dot_dimension_numbers<[1], [0], [0], [1], [0, 0, 1, 1], [], []>} : vector<8x10xbf16>, vector<10x200xbf16>, vector<8x200xf32> -> vector<8x200xf32>
    %46 = arith.addf %43, %45 : vector<8x200xf32>
    %c0_31 = arith.constant 0 : index
    %c0_32 = arith.constant 0 : index
    %47 = vector.load %arg13[%c0_31, %c0_32] : memref<1x200xf32, #tpu.memory_space<vmem>>, vector<1x200xf32>
    %48 = vector.broadcast %47 : vector<1x200xf32> to vector<8x200xf32>
    %49 = arith.addf %46, %48 : vector<8x200xf32>
    %cst_33 = arith.constant 0.000000e+00 : f32
    %50 = vector.broadcast %cst_33 : f32 to vector<8x200xf32>
    %51 = arith.maximumf %49, %50 : vector<8x200xf32>
    %52 = arith.truncf %51 : vector<8x200xf32> to vector<8x200xbf16>
    %c0_34 = arith.constant 0 : index
    %c0_35 = arith.constant 0 : index
    %53 = vector.load %arg14[%c0_34, %c0_35] : memref<200x400xbf16, #tpu.memory_space<vmem>>, vector<200x400xbf16>
    %cst_36 = arith.constant dense<0.000000e+00> : vector<8x400xf32>
    %54 = tpu.matmul %52, %53, %cst_36 {dimension_numbers = #tpu.dot_dimension_numbers<[1], [0], [0], [1], [0, 0, 1, 1], [], []>} : vector<8x200xbf16>, vector<200x400xbf16>, vector<8x400xf32> -> vector<8x400xf32>
    %c0_37 = arith.constant 0 : index
    %c0_38 = arith.constant 0 : index
    %55 = vector.load %arg15[%c0_37, %c0_38] : memref<1x400xf32, #tpu.memory_space<vmem>>, vector<1x400xf32>
    %56 = vector.broadcast %55 : vector<1x400xf32> to vector<8x400xf32>
    %57 = arith.addf %54, %56 : vector<8x400xf32>
    %cst_39 = arith.constant 0.000000e+00 : f32
    %58 = vector.broadcast %cst_39 : f32 to vector<8x400xf32>
    %59 = arith.maximumf %57, %58 : vector<8x400xf32>
    %60 = arith.truncf %59 : vector<8x400xf32> to vector<8x400xbf16>
    %c0_40 = arith.constant 0 : index
    %c0_41 = arith.constant 0 : index
    %61 = vector.load %arg16[%c0_40, %c0_41] : memref<400x784xbf16, #tpu.memory_space<vmem>>, vector<400x784xbf16>
    %cst_42 = arith.constant dense<0.000000e+00> : vector<8x784xf32>
    %62 = tpu.matmul %60, %61, %cst_42 {dimension_numbers = #tpu.dot_dimension_numbers<[1], [0], [0], [1], [0, 0, 1, 1], [], []>} : vector<8x400xbf16>, vector<400x784xbf16>, vector<8x784xf32> -> vector<8x784xf32>
    %c0_43 = arith.constant 0 : index
    %c0_44 = arith.constant 0 : index
    %63 = vector.load %arg17[%c0_43, %c0_44] : memref<1x784xf32, #tpu.memory_space<vmem>>, vector<1x784xf32>
    %64 = vector.broadcast %63 : vector<1x784xf32> to vector<8x784xf32>
    %65 = arith.addf %62, %64 : vector<8x784xf32>
    %66 = arith.negf %65 : vector<8x784xf32>
    %67 = math.exp %66 : vector<8x784xf32>
    %cst_45 = arith.constant 1.000000e+00 : f32
    %68 = vector.broadcast %cst_45 : f32 to vector<8x784xf32>
    %69 = arith.addf %68, %67 : vector<8x784xf32>
    %70 = arith.divf %68, %69 : vector<8x784xf32>
    %c0_46 = arith.constant 0 : index
    %c0_47 = arith.constant 0 : index
    %71 = vector.load %arg18[%c0_46, %c0_47] : memref<8x784xf32, #tpu.memory_space<vmem>>, vector<8x784xf32>
    tpu.vector_store %arg18[%c0_46, %c0_47], %70 {strides = array<i32>} : memref<8x784xf32, #tpu.memory_space<vmem>>, vector<8x784xf32>,
    %c0_48 = arith.constant 0 : index
    %c0_49 = arith.constant 0 : index
    %72 = vector.load %arg19[%c0_48, %c0_49] : memref<8x20xf32, #tpu.memory_space<vmem>>, vector<8x20xf32>
    tpu.vector_store %arg19[%c0_48, %c0_49], %34 {strides = array<i32>} : memref<8x20xf32, #tpu.memory_space<vmem>>, vector<8x20xf32>,
    %c0_50 = arith.constant 0 : index
    %c0_51 = arith.constant 0 : index
    %73 = vector.load %arg20[%c0_50, %c0_51] : memref<8x20xf32, #tpu.memory_space<vmem>>, vector<8x20xf32>
    tpu.vector_store %arg20[%c0_50, %c0_51], %35 {strides = array<i32>} : memref<8x20xf32, #tpu.memory_space<vmem>>, vector<8x20xf32>,
    return
  }
  func.func @transform_0(%arg0: i32) -> (i32, i32) {
    %c0_i32 = arith.constant 0 : i32
    %c0_i32_0 = arith.constant 0 : i32
    return %arg0, %c0_i32 : i32, i32
  }
  func.func @transform_1(%arg0: i32) -> (i32, i32) {
    %c0_i32 = arith.constant 0 : i32
    %c0_i32_0 = arith.constant 0 : i32
    return %arg0, %c0_i32 : i32, i32
  }
  func.func @transform_2(%arg0: i32) -> (i32, i32) {
    %c0_i32 = arith.constant 0 : i32
    %c0_i32_0 = arith.constant 0 : i32
    return %arg0, %c0_i32 : i32, i32
  }
  func.func @transform_3(%arg0: i32) -> (i32, i32) {
    %c0_i32 = arith.constant 0 : i32
    %c0_i32_0 = arith.constant 0 : i32
    %c0_i32_1 = arith.constant 0 : i32
    return %c0_i32, %c0_i32_0 : i32, i32
  }
  func.func @transform_4(%arg0: i32) -> (i32, i32) {
    %c0_i32 = arith.constant 0 : i32
    %c0_i32_0 = arith.constant 0 : i32
    %c0_i32_1 = arith.constant 0 : i32
    return %c0_i32, %c0_i32_0 : i32, i32
  }
  func.func @transform_5(%arg0: i32) -> (i32, i32) {
    %c0_i32 = arith.constant 0 : i32
    %c0_i32_0 = arith.constant 0 : i32
    %c0_i32_1 = arith.constant 0 : i32
    return %c0_i32, %c0_i32_0 : i32, i32
  }
  func.func @transform_6(%arg0: i32) -> (i32, i32) {
    %c0_i32 = arith.constant 0 : i32
    %c0_i32_0 = arith.constant 0 : i32
    %c0_i32_1 = arith.constant 0 : i32
    return %c0_i32, %c0_i32_0 : i32, i32
  }
  func.func @transform_7(%arg0: i32) -> (i32, i32) {
    %c0_i32 = arith.constant 0 : i32
    %c0_i32_0 = arith.constant 0 : i32
    %c0_i32_1 = arith.constant 0 : i32
    return %c0_i32, %c0_i32_0 : i32, i32
  }
  func.func @transform_8(%arg0: i32) -> (i32, i32) {
    %c0_i32 = arith.constant 0 : i32
    %c0_i32_0 = arith.constant 0 : i32
    %c0_i32_1 = arith.constant 0 : i32
    return %c0_i32, %c0_i32_0 : i32, i32
  }
  func.func @transform_9(%arg0: i32) -> (i32, i32) {
    %c0_i32 = arith.constant 0 : i32
    %c0_i32_0 = arith.constant 0 : i32
    %c0_i32_1 = arith.constant 0 : i32
    return %c0_i32, %c0_i32_0 : i32, i32
  }
  func.func @transform_10(%arg0: i32) -> (i32, i32) {
    %c0_i32 = arith.constant 0 : i32
    %c0_i32_0 = arith.constant 0 : i32
    %c0_i32_1 = arith.constant 0 : i32
    return %c0_i32, %c0_i32_0 : i32, i32
  }
  func.func @transform_11(%arg0: i32) -> (i32, i32) {
    %c0_i32 = arith.constant 0 : i32
    %c0_i32_0 = arith.constant 0 : i32
    %c0_i32_1 = arith.constant 0 : i32
    return %c0_i32, %c0_i32_0 : i32, i32
  }
  func.func @transform_12(%arg0: i32) -> (i32, i32) {
    %c0_i32 = arith.constant 0 : i32
    %c0_i32_0 = arith.constant 0 : i32
    %c0_i32_1 = arith.constant 0 : i32
    return %c0_i32, %c0_i32_0 : i32, i32
  }
  func.func @transform_13(%arg0: i32) -> (i32, i32) {
    %c0_i32 = arith.constant 0 : i32
    %c0_i32_0 = arith.constant 0 : i32
    %c0_i32_1 = arith.constant 0 : i32
    return %c0_i32, %c0_i32_0 : i32, i32
  }
  func.func @transform_14(%arg0: i32) -> (i32, i32) {
    %c0_i32 = arith.constant 0 : i32
    %c0_i32_0 = arith.constant 0 : i32
    %c0_i32_1 = arith.constant 0 : i32
    return %c0_i32, %c0_i32_0 : i32, i32
  }
  func.func @transform_15(%arg0: i32) -> (i32, i32) {
    %c0_i32 = arith.constant 0 : i32
    %c0_i32_0 = arith.constant 0 : i32
    %c0_i32_1 = arith.constant 0 : i32
    return %c0_i32, %c0_i32_0 : i32, i32
  }
  func.func @transform_16(%arg0: i32) -> (i32, i32) {
    %c0_i32 = arith.constant 0 : i32
    %c0_i32_0 = arith.constant 0 : i32
    %c0_i32_1 = arith.constant 0 : i32
    return %c0_i32, %c0_i32_0 : i32, i32
  }
  func.func @transform_17(%arg0: i32) -> (i32, i32) {
    %c0_i32 = arith.constant 0 : i32
    %c0_i32_0 = arith.constant 0 : i32
    return %arg0, %c0_i32 : i32, i32
  }
  func.func @transform_18(%arg0: i32) -> (i32, i32) {
    %c0_i32 = arith.constant 0 : i32
    %c0_i32_0 = arith.constant 0 : i32
    return %arg0, %c0_i32 : i32, i32
  }
  func.func @transform_19(%arg0: i32) -> (i32, i32) {
    %c0_i32 = arith.constant 0 : i32
    %c0_i32_0 = arith.constant 0 : i32
    return %arg0, %c0_i32 : i32, i32
  }
}

</mosaic_0001>

<llo_original>
// kernel: tpu_custom_call.1
$region0: #{tpu_custom_call.1}
  #allocation0 [shape = 'u32[]', space=smem, size = 0x4, offset = 0x4, fixed_abs, tag = 'smem constant byte address 0x4 - core index']
  #allocation1 [shape = 'u32[144,128]{1,0:T(1,128)}', space=vmem, size = 0x12000, scoped, tag = 'internal scratch']
  %s0 = inlined_call_operand.vmem [shape: f32[8,784], index: 0, kind: input, shape index: {}]
  %s1 = inlined_call_operand.vmem [shape: s32[8,1], index: 1, kind: input, shape index: {}]
  %s2 = inlined_call_operand.vmem [shape: f32[8,20], index: 2, kind: input, shape index: {}]
  %s3 = inlined_call_operand.vmem [shape: bf16[784,400], index: 3, kind: input, shape index: {}]
  %s4 = inlined_call_operand.vmem [shape: bf16[10,400], index: 4, kind: input, shape index: {}]
  %s5 = inlined_call_operand.vmem [shape: f32[1,400], index: 5, kind: input, shape index: {}]
  %s6 = inlined_call_operand.vmem [shape: bf16[400,200], index: 6, kind: input, shape index: {}]
  %s7 = inlined_call_operand.vmem [shape: f32[1,200], index: 7, kind: input, shape index: {}]
  %s8 = inlined_call_operand.vmem [shape: bf16[200,256], index: 8, kind: input, shape index: {}]
  %s9 = inlined_call_operand.vmem [shape: f32[1,256], index: 9, kind: input, shape index: {}]
  %s10 = inlined_call_operand.vmem [shape: bf16[20,200], index: 10, kind: input, shape index: {}]
  %s11 = inlined_call_operand.vmem [shape: bf16[10,200], index: 11, kind: input, shape index: {}]
  %s12 = inlined_call_operand.vmem [shape: f32[1,200], index: 12, kind: input, shape index: {}]
  %s13 = inlined_call_operand.vmem [shape: bf16[200,400], index: 13, kind: input, shape index: {}]
  %s14 = inlined_call_operand.vmem [shape: f32[1,400], index: 14, kind: input, shape index: {}]
  %s15 = inlined_call_operand.vmem [shape: bf16[400,784], index: 15, kind: input, shape index: {}]
  %s16 = inlined_call_operand.vmem [shape: f32[1,784], index: 16, kind: input, shape index: {}]
  %s17 = inlined_call_operand.hbm [shape: f32[8,784], index: 17, kind: output, shape index: {0}]
  %s18 = inlined_call_operand.hbm [shape: f32[8,20], index: 18, kind: output, shape index: {1}]
  %s19 = inlined_call_operand.hbm [shape: f32[8,20], index: 19, kind: output, shape index: {2}]
  %20 = xla_tuple %s17, %s18, %s19
  %s21 = sld [smem:[#allocation0]]
  $region94: #{tpu_custom_call.1} parent=0
    _
  %s23 = ssub.s32 1, %s21
  %s24 = scalar_select 0, %s23, %s21
  $region1: #{tpu_custom_call.1} parent=0
    #allocation2 [shape = 'u8[28672]{0}', space=vmem, size = 0x7000, scoped, tag = 'output window, operand 0, single buffered']
    #allocation3 [shape = 's32[1]{0}', space=sflag, size = 0x4, scoped, tag = 'scoped memory for tpu_custom_call.1']
    #allocation4 [shape = 'u8[4096]{0}', space=vmem, size = 0x1000, scoped, tag = 'output window, operand 1, single buffered']
    #allocation5 [shape = 's32[1]{0}', space=sflag, size = 0x4, scoped, tag = 'scoped memory for tpu_custom_call.1']
    #allocation6 [shape = 'u8[4096]{0}', space=vmem, size = 0x1000, scoped, tag = 'output window, operand 2, single buffered']
    %25 = vsyncpa [#allocation3], 0
    %26 = vsyncpa [#allocation5], 0
    // Predicated region
    $region2: #{tpu_custom_call.1} parent=1 // pred_check
      _
    $region3: #{tpu_custom_call.1} parent=1 // pred_check_branch
      %28 = sbr.rel (0) target = $region5
    $region4: #{tpu_custom_call.1} parent=1 // pred_region
      _
    $region5: #{tpu_custom_call.1} parent=1 // pred_fallthru
      _
    // Predicated region
    $region6: #{tpu_custom_call.1} parent=1 // pred_check
      _
    $region7: #{tpu_custom_call.1} parent=1 // pred_check_branch
      %30 = sbr.rel (0) target = $region9
    $region8: #{tpu_custom_call.1} parent=1 // pred_region
      _
    $region9: #{tpu_custom_call.1} parent=1 // pred_fallthru
      _
    // Predicated region
    $region10: #{tpu_custom_call.1} parent=1 // pred_check
      _
    $region11: #{tpu_custom_call.1} parent=1 // pred_check_branch
      %32 = sbr.rel (0) target = $region13
    $region12: #{tpu_custom_call.1} parent=1 // pred_region
      _
    $region13: #{tpu_custom_call.1} parent=1 // pred_fallthru
      _
    // Predicated region
    $region14: #{tpu_custom_call.1} parent=1 // pred_check
      _
    $region15: #{tpu_custom_call.1} parent=1 // pred_check_branch
      %34 = sbr.rel (0) target = $region17
    $region16: #{tpu_custom_call.1} parent=1 // pred_region
      _
    $region17: #{tpu_custom_call.1} parent=1 // pred_fallthru
      _
    // Predicated region
    $region18: #{tpu_custom_call.1} parent=1 // pred_check
      _
    $region19: #{tpu_custom_call.1} parent=1 // pred_check_branch
      %36 = sbr.rel (0) target = $region21
    $region20: #{tpu_custom_call.1} parent=1 // pred_region
      _
    $region21: #{tpu_custom_call.1} parent=1 // pred_fallthru
      _
    // Predicated region
    $region22: #{tpu_custom_call.1} parent=1 // pred_check
      _
    $region23: #{tpu_custom_call.1} parent=1 // pred_check_branch
      %38 = sbr.rel (0) target = $region25
    $region24: #{tpu_custom_call.1} parent=1 // pred_region
      _
    $region25: #{tpu_custom_call.1} parent=1 // pred_fallthru
      _
    // Predicated region
    $region26: #{tpu_custom_call.1} parent=1 // pred_check
      _
    $region27: #{tpu_custom_call.1} parent=1 // pred_check_branch
      %40 = sbr.rel (0) target = $region29
    $region28: #{tpu_custom_call.1} parent=1 // pred_region
      _
    $region29: #{tpu_custom_call.1} parent=1 // pred_fallthru
      _
    // Predicated region
    $region30: #{tpu_custom_call.1} parent=1 // pred_check
      _
    $region31: #{tpu_custom_call.1} parent=1 // pred_check_branch
      %42 = sbr.rel (0) target = $region33
    $region32: #{tpu_custom_call.1} parent=1 // pred_region
      _
    $region33: #{tpu_custom_call.1} parent=1 // pred_fallthru
      _
    // Predicated region
    $region34: #{tpu_custom_call.1} parent=1 // pred_check
      _
    $region35: #{tpu_custom_call.1} parent=1 // pred_check_branch
      %44 = sbr.rel (0) target = $region37
    $region36: #{tpu_custom_call.1} parent=1 // pred_region
      _
    $region37: #{tpu_custom_call.1} parent=1 // pred_fallthru
      _
    // Predicated region
    $region38: #{tpu_custom_call.1} parent=1 // pred_check
      _
    $region39: #{tpu_custom_call.1} parent=1 // pred_check_branch
      %46 = sbr.rel (0) target = $region41
    $region40: #{tpu_custom_call.1} parent=1 // pred_region
      _
    $region41: #{tpu_custom_call.1} parent=1 // pred_fallthru
      _
    // Predicated region
    $region42: #{tpu_custom_call.1} parent=1 // pred_check
      _
    $region43: #{tpu_custom_call.1} parent=1 // pred_check_branch
      %48 = sbr.rel (0) target = $region45
    $region44: #{tpu_custom_call.1} parent=1 // pred_region
      _
    $region45: #{tpu_custom_call.1} parent=1 // pred_fallthru
      _
    // Predicated region
    $region46: #{tpu_custom_call.1} parent=1 // pred_check
      _
    $region47: #{tpu_custom_call.1} parent=1 // pred_check_branch
      %50 = sbr.rel (0) target = $region49
    $region48: #{tpu_custom_call.1} parent=1 // pred_region
      _
    $region49: #{tpu_custom_call.1} parent=1 // pred_fallthru
      _
    // Predicated region
    $region50: #{tpu_custom_call.1} parent=1 // pred_check
      _
    $region51: #{tpu_custom_call.1} parent=1 // pred_check_branch
      %52 = sbr.rel (0) target = $region53
    $region52: #{tpu_custom_call.1} parent=1 // pred_region
      _
    $region53: #{tpu_custom_call.1} parent=1 // pred_fallthru
      _
    // Predicated region
    $region54: #{tpu_custom_call.1} parent=1 // pred_check
      _
    $region55: #{tpu_custom_call.1} parent=1 // pred_check_branch
      %54 = sbr.rel (0) target = $region57
    $region56: #{tpu_custom_call.1} parent=1 // pred_region
      _
    $region57: #{tpu_custom_call.1} parent=1 // pred_fallthru
      _
    // Predicated region
    $region58: #{tpu_custom_call.1} parent=1 // pred_check
      _
    $region59: #{tpu_custom_call.1} parent=1 // pred_check_branch
      %56 = sbr.rel (0) target = $region61
    $region60: #{tpu_custom_call.1} parent=1 // pred_region
      _
    $region61: #{tpu_custom_call.1} parent=1 // pred_fallthru
      _
    // Predicated region
    $region62: #{tpu_custom_call.1} parent=1 // pred_check
      _
    $region63: #{tpu_custom_call.1} parent=1 // pred_check_branch
      %58 = sbr.rel (0) target = $region65
    $region64: #{tpu_custom_call.1} parent=1 // pred_region
      _
    $region65: #{tpu_custom_call.1} parent=1 // pred_fallthru
      _
    // Predicated region
    $region66: #{tpu_custom_call.1} parent=1 // pred_check
      _
    $region67: #{tpu_custom_call.1} parent=1 // pred_check_branch
      %60 = sbr.rel (0) target = $region69
    $region68: #{tpu_custom_call.1} parent=1 // pred_region
      _
    $region69: #{tpu_custom_call.1} parent=1 // pred_fallthru
      _
    %v62 = vld [vmem:[%s0] sm:$0xff]
    %v63 = vld [vmem:[%s0 + $0x8] sm:$0xff]
    %v64 = vld [vmem:[%s0 + $0x10] sm:$0xff]
    %v65 = vld [vmem:[%s0 + $0x18] sm:$0xff]
    %v66 = vld [vmem:[%s0 + $0x20] sm:$0xff]
    %v67 = vld [vmem:[%s0 + $0x28] sm:$0xff]
    %v68 = vld [vmem:[%s0 + $0x30] sm:$0xff]
    %v69 = vpack.c.bf16 %v62, %v62
    %v70 = vpack.c.bf16 %v63, %v63
    %v71 = vpack.c.bf16 %v64, %v64
    %v72 = vpack.c.bf16 %v65, %v65
    %v73 = vpack.c.bf16 %v66, %v66
    %v74 = vpack.c.bf16 %v67, %v67
    %v75 = vpack.c.bf16 %v68, %v68
    %v76 = vld [vmem:[%s2] sm:$0xff]
    %v77 = vld [vmem:[%s1] sm:$0xff]
    %v78 = vlaneseq
    %v79 = vand.u32 %v78, 127
    %80 = vset.pattern.permute.xlu0 0
    %81 = vperm.xlu0 %80, %v77
    %v82 = vpop.permute.xlu0 %81
    %vm83 = vcmp.eq.s32.totalorder %v79, %v82
    %v84 = vsel %vm83, 1, 0
    %v85 = vcvt.s32.f32 %v84
    %v86 = vpack.c.bf16 %v85, %v85
    %v87 = vld [vmem:[%s3] sm:$0xff]
    %v88 = vld [vmem:[%s3 + $0x8] sm:$0xff]
    %v89 = vld [vmem:[%s3 + $0x10] sm:$0xff]
    %v90 = vld [vmem:[%s3 + $0x18] sm:$0xff]
    %v91 = vld [vmem:[%s3 + $0x20] sm:$0xff]
    %v92 = vld [vmem:[%s3 + $0x28] sm:$0xff]
    %v93 = vld [vmem:[%s3 + $0x30] sm:$0xff]
    %v94 = vld [vmem:[%s3 + $0x38] sm:$0xff]
    %v95 = vld [vmem:[%s3 + $0x40] sm:$0xff]
    %v96 = vld [vmem:[%s3 + $0x48] sm:$0xff]
    %v97 = vld [vmem:[%s3 + $0x50] sm:$0xff]
    %v98 = vld [vmem:[%s3 + $0x58] sm:$0xff]
    %v99 = vld [vmem:[%s3 + $0x60] sm:$0xff]
    %v100 = vld [vmem:[%s3 + $0x68] sm:$0xff]
    %v101 = vld [vmem:[%s3 + $0x70] sm:$0xff]
    %v102 = vld [vmem:[%s3 + $0x78] sm:$0xff]
    %v103 = vld [vmem:[%s3 + $0x80] sm:$0xff]
    %v104 = vld [vmem:[%s3 + $0x88] sm:$0xff]
    %v105 = vld [vmem:[%s3 + $0x90] sm:$0xff]
    %v106 = vld [vmem:[%s3 + $0x98] sm:$0xff]
    %v107 = vld [vmem:[%s3 + $0xa0] sm:$0xff]
    %v108 = vld [vmem:[%s3 + $0xa8] sm:$0xff]
    %v109 = vld [vmem:[%s3 + $0xb0] sm:$0xff]
    %v110 = vld [vmem:[%s3 + $0xb8] sm:$0xff]
    %v111 = vld [vmem:[%s3 + $0xc0] sm:$0xff]
    %v112 = vld [vmem:[%s3 + $0xc8] sm:$0xff]
    %v113 = vld [vmem:[%s3 + $0xd0] sm:$0xff]
    %v114 = vld [vmem:[%s3 + $0xd8] sm:$0xff]
    %v115 = vld [vmem:[%s3 + $0xe0] sm:$0xff]
    %v116 = vld [vmem:[%s3 + $0xe8] sm:$0xff]
    %v117 = vld [vmem:[%s3 + $0xf0] sm:$0xff]
    %v118 = vld [vmem:[%s3 + $0xf8] sm:$0xff]
    %v119 = vld [vmem:[%s3 + $0x100] sm:$0xff]
    %v120 = vld [vmem:[%s3 + $0x108] sm:$0xff]
    %v121 = vld [vmem:[%s3 + $0x110] sm:$0xff]
    %v122 = vld [vmem:[%s3 + $0x118] sm:$0xff]
    %v123 = vld [vmem:[%s3 + $0x120] sm:$0xff]
    %v124 = vld [vmem:[%s3 + $0x128] sm:$0xff]
    %v125 = vld [vmem:[%s3 + $0x130] sm:$0xff]
    %v126 = vld [vmem:[%s3 + $0x138] sm:$0xff]
    %v127 = vld [vmem:[%s3 + $0x140] sm:$0xff]
    %v128 = vld [vmem:[%s3 + $0x148] sm:$0xff]
    %v129 = vld [vmem:[%s3 + $0x150] sm:$0xff]
    %v130 = vld [vmem:[%s3 + $0x158] sm:$0xff]
    %v131 = vld [vmem:[%s3 + $0x160] sm:$0xff]
    %v132 = vld [vmem:[%s3 + $0x168] sm:$0xff]
    %v133 = vld [vmem:[%s3 + $0x170] sm:$0xff]
    %v134 = vld [vmem:[%s3 + $0x178] sm:$0xff]
    %v135 = vld [vmem:[%s3 + $0x180] sm:$0xff]
    %v136 = vld [vmem:[%s3 + $0x188] sm:$0xff]
    %v137 = vld [vmem:[%s3 + $0x190] sm:$0xff]
    %v138 = vld [vmem:[%s3 + $0x198] sm:$0xff]
    %v139 = vld [vmem:[%s3 + $0x1a0] sm:$0xff]
    %v140 = vld [vmem:[%s3 + $0x1a8] sm:$0xff]
    %v141 = vld [vmem:[%s3 + $0x1b0] sm:$0xff]
    %v142 = vld [vmem:[%s3 + $0x1b8] sm:$0xff]
    %v143 = vld [vmem:[%s3 + $0x1c0] sm:$0xff]
    %v144 = vld [vmem:[%s3 + $0x1c8] sm:$0xff]
    %v145 = vld [vmem:[%s3 + $0x1d0] sm:$0xff]
    %v146 = vld [vmem:[%s3 + $0x1d8] sm:$0xff]
    %v147 = vld [vmem:[%s3 + $0x1e0] sm:$0xff]
    %v148 = vld [vmem:[%s3 + $0x1e8] sm:$0xff]
    %v149 = vld [vmem:[%s3 + $0x1f0] sm:$0xff]
    %v150 = vld [vmem:[%s3 + $0x1f8] sm:$0xff]
    %v151 = vld [vmem:[%s3 + $0x200] sm:$0xff]
    %v152 = vld [vmem:[%s3 + $0x208] sm:$0xff]
    %v153 = vld [vmem:[%s3 + $0x210] sm:$0xff]
    %v154 = vld [vmem:[%s3 + $0x218] sm:$0xff]
    %v155 = vld [vmem:[%s3 + $0x220] sm:$0xff]
    %v156 = vld [vmem:[%s3 + $0x228] sm:$0xff]
    %v157 = vld [vmem:[%s3 + $0x230] sm:$0xff]
    %v158 = vld [vmem:[%s3 + $0x238] sm:$0xff]
    %v159 = vld [vmem:[%s3 + $0x240] sm:$0xff]
    %v160 = vld [vmem:[%s3 + $0x248] sm:$0xff]
    %v161 = vld [vmem:[%s3 + $0x250] sm:$0xff]
    %v162 = vld [vmem:[%s3 + $0x258] sm:$0xff]
    %v163 = vld [vmem:[%s3 + $0x260] sm:$0xff]
    %v164 = vld [vmem:[%s3 + $0x268] sm:$0xff]
    %v165 = vld [vmem:[%s3 + $0x270] sm:$0xff]
    %v166 = vld [vmem:[%s3 + $0x278] sm:$0xff]
    %v167 = vld [vmem:[%s3 + $0x280] sm:$0xff]
    %v168 = vld [vmem:[%s3 + $0x288] sm:$0xff]
    %v169 = vld [vmem:[%s3 + $0x290] sm:$0xff]
    %v170 = vld [vmem:[%s3 + $0x298] sm:$0xff]
    %v171 = vld [vmem:[%s3 + $0x2a0] sm:$0xff]
    %v172 = vld [vmem:[%s3 + $0x2a8] sm:$0xff]
    %v173 = vld [vmem:[%s3 + $0x2b0] sm:$0xff]
    %v174 = vld [vmem:[%s3 + $0x2b8] sm:$0xff]
    %v175 = vld [vmem:[%s3 + $0x2c0] sm:$0xff]
    %v176 = vld [vmem:[%s3 + $0x2c8] sm:$0xff]
    %v177 = vld [vmem:[%s3 + $0x2d0] sm:$0xff]
    %v178 = vld [vmem:[%s3 + $0x2d8] sm:$0xff]
    %v179 = vld [vmem:[%s3 + $0x2e0] sm:$0xff]
    %v180 = vld [vmem:[%s3 + $0x2e8] sm:$0xff]
    %v181 = vld [vmem:[%s3 + $0x2f0] sm:$0xff]
    %v182 = vld [vmem:[%s3 + $0x2f8] sm:$0xff]
    %v183 = vld [vmem:[%s3 + $0x300] sm:$0xff]
    %v184 = vld [vmem:[%s3 + $0x308] sm:$0xff]
    %v185 = vld [vmem:[%s3 + $0x310] sm:$0xff]
    %v186 = vld [vmem:[%s3 + $0x318] sm:$0xff]
    %v187 = vld [vmem:[%s3 + $0x320] sm:$0xff]
    %v188 = vld [vmem:[%s3 + $0x328] sm:$0xff]
    %v189 = vld [vmem:[%s3 + $0x330] sm:$0xff]
    %v190 = vld [vmem:[%s3 + $0x338] sm:$0xff]
    %v191 = vld [vmem:[%s3 + $0x340] sm:$0xff]
    %v192 = vld [vmem:[%s3 + $0x348] sm:$0xff]
    %v193 = vld [vmem:[%s3 + $0x350] sm:$0xff]
    %v194 = vld [vmem:[%s3 + $0x358] sm:$0xff]
    %v195 = vld [vmem:[%s3 + $0x360] sm:$0xff]
    %v196 = vld [vmem:[%s3 + $0x368] sm:$0xff]
    %v197 = vld [vmem:[%s3 + $0x370] sm:$0xff]
    %v198 = vld [vmem:[%s3 + $0x378] sm:$0xff]
    %v199 = vld [vmem:[%s3 + $0x380] sm:$0xff]
    %v200 = vld [vmem:[%s3 + $0x388] sm:$0xff]
    %v201 = vld [vmem:[%s3 + $0x390] sm:$0xff]
    %v202 = vld [vmem:[%s3 + $0x398] sm:$0xff]
    %v203 = vld [vmem:[%s3 + $0x3a0] sm:$0xff]
    %v204 = vld [vmem:[%s3 + $0x3a8] sm:$0xff]
    %v205 = vld [vmem:[%s3 + $0x3b0] sm:$0xff]
    %v206 = vld [vmem:[%s3 + $0x3b8] sm:$0xff]
    %v207 = vld [vmem:[%s3 + $0x3c0] sm:$0xff]
    %v208 = vld [vmem:[%s3 + $0x3c8] sm:$0xff]
    %v209 = vld [vmem:[%s3 + $0x3d0] sm:$0xff]
    %v210 = vld [vmem:[%s3 + $0x3d8] sm:$0xff]
    %v211 = vld [vmem:[%s3 + $0x3e0] sm:$0xff]
    %v212 = vld [vmem:[%s3 + $0x3e8] sm:$0xff]
    %v213 = vld [vmem:[%s3 + $0x3f0] sm:$0xff]
    %v214 = vld [vmem:[%s3 + $0x3f8] sm:$0xff]
    %v215 = vld [vmem:[%s3 + $0x400] sm:$0xff]
    %v216 = vld [vmem:[%s3 + $0x408] sm:$0xff]
    %v217 = vld [vmem:[%s3 + $0x410] sm:$0xff]
    %v218 = vld [vmem:[%s3 + $0x418] sm:$0xff]
    %v219 = vld [vmem:[%s3 + $0x420] sm:$0xff]
    %v220 = vld [vmem:[%s3 + $0x428] sm:$0xff]
    %v221 = vld [vmem:[%s3 + $0x430] sm:$0xff]
    %v222 = vld [vmem:[%s3 + $0x438] sm:$0xff]
    %v223 = vld [vmem:[%s3 + $0x440] sm:$0xff]
    %v224 = vld [vmem:[%s3 + $0x448] sm:$0xff]
    %v225 = vld [vmem:[%s3 + $0x450] sm:$0xff]
    %v226 = vld [vmem:[%s3 + $0x458] sm:$0xff]
    %v227 = vld [vmem:[%s3 + $0x460] sm:$0xff]
    %v228 = vld [vmem:[%s3 + $0x468] sm:$0xff]
    %v229 = vld [vmem:[%s3 + $0x470] sm:$0xff]
    %v230 = vld [vmem:[%s3 + $0x478] sm:$0xff]
    %v231 = vld [vmem:[%s3 + $0x480] sm:$0xff]
    %v232 = vld [vmem:[%s3 + $0x488] sm:$0xff]
    %v233 = vld [vmem:[%s3 + $0x490] sm:$0xff]
    %v234 = vld [vmem:[%s3 + $0x498] sm:$0xff]
    %v235 = vld [vmem:[%s3 + $0x4a0] sm:$0xff]
    %v236 = vld [vmem:[%s3 + $0x4a8] sm:$0xff]
    %v237 = vld [vmem:[%s3 + $0x4b0] sm:$0xff]
    %v238 = vld [vmem:[%s3 + $0x4b8] sm:$0xff]
    %v239 = vld [vmem:[%s3 + $0x4c0] sm:$0xff]
    %v240 = vld [vmem:[%s3 + $0x4c8] sm:$0xff]
    %v241 = vld [vmem:[%s3 + $0x4d0] sm:$0xff]
    %v242 = vld [vmem:[%s3 + $0x4d8] sm:$0xff]
    %v243 = vld [vmem:[%s3 + $0x4e0] sm:$0xff]
    %v244 = vld [vmem:[%s3 + $0x4e8] sm:$0xff]
    %v245 = vld [vmem:[%s3 + $0x4f0] sm:$0xff]
    %v246 = vld [vmem:[%s3 + $0x4f8] sm:$0xff]
    %v247 = vld [vmem:[%s3 + $0x500] sm:$0xff]
    %v248 = vld [vmem:[%s3 + $0x508] sm:$0xff]
    %v249 = vld [vmem:[%s3 + $0x510] sm:$0xff]
    %v250 = vld [vmem:[%s3 + $0x518] sm:$0xff]
    %v251 = vld [vmem:[%s3 + $0x520] sm:$0xff]
    %v252 = vld [vmem:[%s3 + $0x528] sm:$0xff]
    %v253 = vld [vmem:[%s3 + $0x530] sm:$0xff]
    %v254 = vld [vmem:[%s3 + $0x538] sm:$0xff]
    %v255 = vld [vmem:[%s3 + $0x540] sm:$0xff]
    %v256 = vld [vmem:[%s3 + $0x548] sm:$0xff]
    %v257 = vld [vmem:[%s3 + $0x550] sm:$0xff]
    %v258 = vld [vmem:[%s3 + $0x558] sm:$0xff]
    %v259 = vld [vmem:[%s3 + $0x560] sm:$0xff]
    %v260 = vld [vmem:[%s3 + $0x568] sm:$0xff]
    %v261 = vld [vmem:[%s3 + $0x570] sm:$0xff]
    %v262 = vld [vmem:[%s3 + $0x578] sm:$0xff]
    %v263 = vld [vmem:[%s3 + $0x580] sm:$0xff]
    %v264 = vld [vmem:[%s3 + $0x588] sm:$0xff]
    %v265 = vld [vmem:[%s3 + $0x590] sm:$0xff]
    %v266 = vld [vmem:[%s3 + $0x598] sm:$0xff]
    %v267 = vld [vmem:[%s3 + $0x5a0] sm:$0xff]
    %v268 = vld [vmem:[%s3 + $0x5a8] sm:$0xff]
    %v269 = vld [vmem:[%s3 + $0x5b0] sm:$0xff]
    %v270 = vld [vmem:[%s3 + $0x5b8] sm:$0xff]
    %v271 = vld [vmem:[%s3 + $0x5c0] sm:$0xff]
    %v272 = vld [vmem:[%s3 + $0x5c8] sm:$0xff]
    %v273 = vld [vmem:[%s3 + $0x5d0] sm:$0xff]
    %v274 = vld [vmem:[%s3 + $0x5d8] sm:$0xff]
    %v275 = vld [vmem:[%s3 + $0x5e0] sm:$0xff]
    %v276 = vld [vmem:[%s3 + $0x5e8] sm:$0xff]
    %v277 = vld [vmem:[%s3 + $0x5f0] sm:$0xff]
    %v278 = vld [vmem:[%s3 + $0x5f8] sm:$0xff]
    %v279 = vld [vmem:[%s3 + $0x600] sm:$0xff]
    %v280 = vld [vmem:[%s3 + $0x608] sm:$0xff]
    %v281 = vld [vmem:[%s3 + $0x610] sm:$0xff]
    %v282 = vld [vmem:[%s3 + $0x618] sm:$0xff]
    %v283 = vld [vmem:[%s4] sm:$0xff]
    %v284 = vld [vmem:[%s4 + $0x8] sm:$0xff]
    %v285 = vld [vmem:[%s4 + $0x10] sm:$0x11]
    %v286 = vld [vmem:[%s4 + $0x18] sm:$0x11]
    %v291 = vunpack.c.l.b16 %v283
    %v292 = vunpack.c.h.b16 %v283
    %v293 = vunpack.c.l.b16 %v284
    %v294 = vunpack.c.h.b16 %v284
    %v295 = vunpack.c.l.b16 %v285
    %v296 = vunpack.c.h.b16 %v285
    %v297 = vunpack.c.l.b16 %v286
    %v298 = vunpack.c.h.b16 %v286
    %v299 = vpack.c.b16 %v295, %v291
    %v300 = vpack.c.b16 %v296, %v292
    %v301 = vpack.c.b16 %v297, %v293
    %v302 = vpack.c.b16 %v298, %v294
    %vm303 = vcmask 80896
    %v305 = vsel %vm303, %v86, 0
    %vm307 = vcmask 1044480
    %v309 = vsel %vm307, %v299, 0
    %v312 = vsel %vm307, %v300, 0
    %v315 = vsel %vm307, %v301, 0
    %v318 = vsel %vm307, %v302, 0
    %320 = vmatprep.subr.bf16.mxu0 %v312
    %321 = vmatpush1.bf16.msra.mxu0 %v309
    %322 = vmatprep.subr.bf16.mxu0 0
    %323 = vmatpush1.bf16.msra.mxu0 0
    %324 = vmatprep.subr.bf16.mxu0 0
    %325 = vmatpush1.bf16.msra.mxu0 0
    %326 = vmatprep.subr.bf16.mxu0 0
    %327 = vmatpush1.bf16.msra.mxu0 0
    %328 = vmatprep.subr.bf16.mxu0 0
    %329 = vmatpush1.bf16.msra.mxu0 0
    %330 = vmatprep.subr.bf16.mxu0 0
    %331 = vmatpush1.bf16.msra.mxu0 0
    %332 = vmatprep.subr.bf16.mxu0 0
    %333 = vmatpush1.bf16.msra.mxu0 0
    %334 = vmatprep.subr.bf16.mxu0 0
    %335 = vmatpush1.bf16.msra.mxu0 0
    %336 = vmatprep.subr.bf16.mxu0 0
    %337 = vmatpush1.bf16.msra.mxu0 0
    %338 = vmatprep.subr.bf16.mxu0 0
    %339 = vmatpush1.bf16.msra.mxu0 0
    %340 = vmatprep.subr.bf16.mxu0 0
    %341 = vmatpush1.bf16.msra.mxu0 0
    %342 = vmatprep.subr.bf16.mxu0 0
    %343 = vmatpush1.bf16.msra.mxu0 0
    %344 = vmatprep.subr.bf16.mxu0 0
    %345 = vmatpush1.bf16.msra.mxu0 0
    %346 = vmatprep.subr.bf16.mxu0 0
    %347 = vmatpush1.bf16.msra.mxu0 0
    %348 = vmatprep.subr.bf16.mxu0 0
    %349 = vmatpush1.bf16.msra.mxu0 0
    %350 = vmatprep.subr.bf16.mxu0 0
    %351 = vmatpush1.bf16.msra.mxu0 0
    %352 = vmatprep.mubr.bf16.mxu0 0
    %353 = vmatmul.mubr.bf16.gmra.mrb[0].mxu0 %v305
    %v354 = vpop.f32.mrb[0].mxu0
    %v355 = vadd.f32 0.0, %v354
    %v356 = vpop.f32.mrb[0].mxu0
    %v357 = vadd.f32 0.0, %v356
    %v358 = vpop.f32.mrb[0].mxu0
    %v359 = vpop.f32.mrb[0].mxu0
    %360 = vdwg.mxu0
    %361 = vmatprep.subr.bf16.mxu0 %v318
    %362 = vmatpush1.bf16.msra.mxu0 %v315
    %363 = vmatprep.subr.bf16.mxu0 0
    %364 = vmatpush1.bf16.msra.mxu0 0
    %365 = vmatprep.subr.bf16.mxu0 0
    %366 = vmatpush1.bf16.msra.mxu0 0
    %367 = vmatprep.subr.bf16.mxu0 0
    %368 = vmatpush1.bf16.msra.mxu0 0
    %369 = vmatprep.subr.bf16.mxu0 0
    %370 = vmatpush1.bf16.msra.mxu0 0
    %371 = vmatprep.subr.bf16.mxu0 0
    %372 = vmatpush1.bf16.msra.mxu0 0
    %373 = vmatprep.subr.bf16.mxu0 0
    %374 = vmatpush1.bf16.msra.mxu0 0
    %375 = vmatprep.subr.bf16.mxu0 0
    %376 = vmatpush1.bf16.msra.mxu0 0
    %377 = vmatprep.subr.bf16.mxu0 0
    %378 = vmatpush1.bf16.msra.mxu0 0
    %379 = vmatprep.subr.bf16.mxu0 0
    %380 = vmatpush1.bf16.msra.mxu0 0
    %381 = vmatprep.subr.bf16.mxu0 0
    %382 = vmatpush1.bf16.msra.mxu0 0
    %383 = vmatprep.subr.bf16.mxu0 0
    %384 = vmatpush1.bf16.msra.mxu0 0
    %385 = vmatprep.subr.bf16.mxu0 0
    %386 = vmatpush1.bf16.msra.mxu0 0
    %387 = vmatprep.subr.bf16.mxu0 0
    %388 = vmatpush1.bf16.msra.mxu0 0
    %389 = vmatprep.subr.bf16.mxu0 0
    %390 = vmatpush1.bf16.msra.mxu0 0
    %391 = vmatprep.subr.bf16.mxu0 0
    %392 = vmatpush1.bf16.msra.mxu0 0
    %393 = vmatprep.mubr.bf16.mxu0 0
    %394 = vmatmul.mubr.bf16.gmra.mrb[0].mxu0 %v305
    %v395 = vpop.f32.mrb[0].mxu0
    %v396 = vadd.f32 0.0, %v395
    %v397 = vpop.f32.mrb[0].mxu0
    %v398 = vadd.f32 0.0, %v397
    %v399 = vpop.f32.mrb[0].mxu0
    %v400 = vpop.f32.mrb[0].mxu0
    %401 = vdwg.mxu0
    %v598 = vunpack.c.l.b16 %v87
    %v599 = vunpack.c.h.b16 %v87
    %v600 = vunpack.c.l.b16 %v88
    %v601 = vunpack.c.h.b16 %v88
    %v602 = vunpack.c.l.b16 %v89
    %v603 = vunpack.c.h.b16 %v89
    %v604 = vunpack.c.l.b16 %v90
    %v605 = vunpack.c.h.b16 %v90
    %v606 = vunpack.c.l.b16 %v91
    %v607 = vunpack.c.h.b16 %v91
    %v608 = vunpack.c.l.b16 %v92
    %v609 = vunpack.c.h.b16 %v92
    %v610 = vunpack.c.l.b16 %v93
    %v611 = vunpack.c.h.b16 %v93
    %v612 = vunpack.c.l.b16 %v94
    %v613 = vunpack.c.h.b16 %v94
    %v614 = vunpack.c.l.b16 %v95
    %v615 = vunpack.c.h.b16 %v95
    %v616 = vunpack.c.l.b16 %v96
    %v617 = vunpack.c.h.b16 %v96
    %v618 = vunpack.c.l.b16 %v97
    %v619 = vunpack.c.h.b16 %v97
    %v620 = vunpack.c.l.b16 %v98
    %v621 = vunpack.c.h.b16 %v98
    %v622 = vunpack.c.l.b16 %v99
    %v623 = vunpack.c.h.b16 %v99
    %v624 = vunpack.c.l.b16 %v100
    %v625 = vunpack.c.h.b16 %v100
    %v626 = vunpack.c.l.b16 %v101
    %v627 = vunpack.c.h.b16 %v101
    %v628 = vunpack.c.l.b16 %v102
    %v629 = vunpack.c.h.b16 %v102
    %v630 = vunpack.c.l.b16 %v103
    %v631 = vunpack.c.h.b16 %v103
    %v632 = vunpack.c.l.b16 %v104
    %v633 = vunpack.c.h.b16 %v104
    %v634 = vunpack.c.l.b16 %v105
    %v635 = vunpack.c.h.b16 %v105
    %v636 = vunpack.c.l.b16 %v106
    %v637 = vunpack.c.h.b16 %v106
    %v638 = vunpack.c.l.b16 %v107
    %v639 = vunpack.c.h.b16 %v107
    %v640 = vunpack.c.l.b16 %v108
    %v641 = vunpack.c.h.b16 %v108
    %v642 = vunpack.c.l.b16 %v109
    %v643 = vunpack.c.h.b16 %v109
    %v644 = vunpack.c.l.b16 %v110
    %v645 = vunpack.c.h.b16 %v110
    %v646 = vunpack.c.l.b16 %v111
    %v647 = vunpack.c.h.b16 %v111
    %v648 = vunpack.c.l.b16 %v112
    %v649 = vunpack.c.h.b16 %v112
    %v650 = vunpack.c.l.b16 %v113
    %v651 = vunpack.c.h.b16 %v113
    %v652 = vunpack.c.l.b16 %v114
    %v653 = vunpack.c.h.b16 %v114
    %v654 = vunpack.c.l.b16 %v115
    %v655 = vunpack.c.h.b16 %v115
    %v656 = vunpack.c.l.b16 %v116
    %v657 = vunpack.c.h.b16 %v116
    %v658 = vunpack.c.l.b16 %v117
    %v659 = vunpack.c.h.b16 %v117
    %v660 = vunpack.c.l.b16 %v118
    %v661 = vunpack.c.h.b16 %v118
    %v662 = vunpack.c.l.b16 %v119
    %v663 = vunpack.c.h.b16 %v119
    %v664 = vunpack.c.l.b16 %v120
    %v665 = vunpack.c.h.b16 %v120
    %v666 = vunpack.c.l.b16 %v121
    %v667 = vunpack.c.h.b16 %v121
    %v668 = vunpack.c.l.b16 %v122
    %v669 = vunpack.c.h.b16 %v122
    %v670 = vunpack.c.l.b16 %v123
    %v671 = vunpack.c.h.b16 %v123
    %v672 = vunpack.c.l.b16 %v124
    %v673 = vunpack.c.h.b16 %v124
    %v674 = vunpack.c.l.b16 %v125
    %v675 = vunpack.c.h.b16 %v125
    %v676 = vunpack.c.l.b16 %v126
    %v677 = vunpack.c.h.b16 %v126
    %v678 = vunpack.c.l.b16 %v127
    %v679 = vunpack.c.h.b16 %v127
    %v680 = vunpack.c.l.b16 %v128
    %v681 = vunpack.c.h.b16 %v128
    %v682 = vunpack.c.l.b16 %v129
    %v683 = vunpack.c.h.b16 %v129
    %v684 = vunpack.c.l.b16 %v130
    %v685 = vunpack.c.h.b16 %v130
    %v686 = vunpack.c.l.b16 %v131
    %v687 = vunpack.c.h.b16 %v131
    %v688 = vunpack.c.l.b16 %v132
    %v689 = vunpack.c.h.b16 %v132
    %v690 = vunpack.c.l.b16 %v133
    %v691 = vunpack.c.h.b16 %v133
    %v692 = vunpack.c.l.b16 %v134
    %v693 = vunpack.c.h.b16 %v134
    %v694 = vunpack.c.l.b16 %v135
    %v695 = vunpack.c.h.b16 %v135
    %v696 = vunpack.c.l.b16 %v136
    %v697 = vunpack.c.h.b16 %v136
    %v698 = vunpack.c.l.b16 %v137
    %v699 = vunpack.c.h.b16 %v137
    %v700 = vunpack.c.l.b16 %v138
    %v701 = vunpack.c.h.b16 %v138
    %v702 = vunpack.c.l.b16 %v139
    %v703 = vunpack.c.h.b16 %v139
    %v704 = vunpack.c.l.b16 %v140
    %v705 = vunpack.c.h.b16 %v140
    %v706 = vunpack.c.l.b16 %v141
    %v707 = vunpack.c.h.b16 %v141
    %v708 = vunpack.c.l.b16 %v142
    %v709 = vunpack.c.h.b16 %v142
    %v710 = vunpack.c.l.b16 %v143
    %v711 = vunpack.c.h.b16 %v143
    %v712 = vunpack.c.l.b16 %v144
    %v713 = vunpack.c.h.b16 %v144
    %v714 = vunpack.c.l.b16 %v145
    %v715 = vunpack.c.h.b16 %v145
    %v716 = vunpack.c.l.b16 %v146
    %v717 = vunpack.c.h.b16 %v146
    %v718 = vunpack.c.l.b16 %v147
    %v719 = vunpack.c.h.b16 %v147
    %v720 = vunpack.c.l.b16 %v148
    %v721 = vunpack.c.h.b16 %v148
    %v722 = vunpack.c.l.b16 %v149
    %v723 = vunpack.c.h.b16 %v149
    %v724 = vunpack.c.l.b16 %v150
    %v725 = vunpack.c.h.b16 %v150
    %v726 = vunpack.c.l.b16 %v151
    %v727 = vunpack.c.h.b16 %v151
    %v728 = vunpack.c.l.b16 %v152
    %v729 = vunpack.c.h.b16 %v152
    %v730 = vunpack.c.l.b16 %v153
    %v731 = vunpack.c.h.b16 %v153
    %v732 = vunpack.c.l.b16 %v154
    %v733 = vunpack.c.h.b16 %v154
    %v734 = vunpack.c.l.b16 %v155
    %v735 = vunpack.c.h.b16 %v155
    %v736 = vunpack.c.l.b16 %v156
    %v737 = vunpack.c.h.b16 %v156
    %v738 = vunpack.c.l.b16 %v157
    %v739 = vunpack.c.h.b16 %v157
    %v740 = vunpack.c.l.b16 %v158
    %v741 = vunpack.c.h.b16 %v158
    %v742 = vunpack.c.l.b16 %v159
    %v743 = vunpack.c.h.b16 %v159
    %v744 = vunpack.c.l.b16 %v160
    %v745 = vunpack.c.h.b16 %v160
    %v746 = vunpack.c.l.b16 %v161
    %v747 = vunpack.c.h.b16 %v161
    %v748 = vunpack.c.l.b16 %v162
    %v749 = vunpack.c.h.b16 %v162
    %v750 = vunpack.c.l.b16 %v163
    %v751 = vunpack.c.h.b16 %v163
    %v752 = vunpack.c.l.b16 %v164
    %v753 = vunpack.c.h.b16 %v164
    %v754 = vunpack.c.l.b16 %v165
    %v755 = vunpack.c.h.b16 %v165
    %v756 = vunpack.c.l.b16 %v166
    %v757 = vunpack.c.h.b16 %v166
    %v758 = vunpack.c.l.b16 %v167
    %v759 = vunpack.c.h.b16 %v167
    %v760 = vunpack.c.l.b16 %v168
    %v761 = vunpack.c.h.b16 %v168
    %v762 = vunpack.c.l.b16 %v169
    %v763 = vunpack.c.h.b16 %v169
    %v764 = vunpack.c.l.b16 %v170
    %v765 = vunpack.c.h.b16 %v170
    %v766 = vunpack.c.l.b16 %v171
    %v767 = vunpack.c.h.b16 %v171
    %v768 = vunpack.c.l.b16 %v172
    %v769 = vunpack.c.h.b16 %v172
    %v770 = vunpack.c.l.b16 %v173
    %v771 = vunpack.c.h.b16 %v173
    %v772 = vunpack.c.l.b16 %v174
    %v773 = vunpack.c.h.b16 %v174
    %v774 = vunpack.c.l.b16 %v175
    %v775 = vunpack.c.h.b16 %v175
    %v776 = vunpack.c.l.b16 %v176
    %v777 = vunpack.c.h.b16 %v176
    %v778 = vunpack.c.l.b16 %v177
    %v779 = vunpack.c.h.b16 %v177
    %v780 = vunpack.c.l.b16 %v178
    %v781 = vunpack.c.h.b16 %v178
    %v782 = vunpack.c.l.b16 %v179
    %v783 = vunpack.c.h.b16 %v179
    %v784 = vunpack.c.l.b16 %v180
    %v785 = vunpack.c.h.b16 %v180
    %v786 = vunpack.c.l.b16 %v181
    %v787 = vunpack.c.h.b16 %v181
    %v788 = vunpack.c.l.b16 %v182
    %v789 = vunpack.c.h.b16 %v182
    %v790 = vunpack.c.l.b16 %v183
    %v791 = vunpack.c.h.b16 %v183
    %v792 = vunpack.c.l.b16 %v184
    %v793 = vunpack.c.h.b16 %v184
    %v794 = vunpack.c.l.b16 %v185
    %v795 = vunpack.c.h.b16 %v185
    %v796 = vunpack.c.l.b16 %v186
    %v797 = vunpack.c.h.b16 %v186
    %v798 = vunpack.c.l.b16 %v187
    %v799 = vunpack.c.h.b16 %v187
    %v800 = vunpack.c.l.b16 %v188
    %v801 = vunpack.c.h.b16 %v188
    %v802 = vunpack.c.l.b16 %v189
    %v803 = vunpack.c.h.b16 %v189
    %v804 = vunpack.c.l.b16 %v190
    %v805 = vunpack.c.h.b16 %v190
    %v806 = vunpack.c.l.b16 %v191
    %v807 = vunpack.c.h.b16 %v191
    %v808 = vunpack.c.l.b16 %v192
    %v809 = vunpack.c.h.b16 %v192
    %v810 = vunpack.c.l.b16 %v193
    %v811 = vunpack.c.h.b16 %v193
    %v812 = vunpack.c.l.b16 %v194
    %v813 = vunpack.c.h.b16 %v194
    %v814 = vunpack.c.l.b16 %v195
    %v815 = vunpack.c.h.b16 %v195
    %v816 = vunpack.c.l.b16 %v196
    %v817 = vunpack.c.h.b16 %v196
    %v818 = vunpack.c.l.b16 %v197
    %v819 = vunpack.c.h.b16 %v197
    %v820 = vunpack.c.l.b16 %v198
    %v821 = vunpack.c.h.b16 %v198
    %v822 = vunpack.c.l.b16 %v199
    %v823 = vunpack.c.h.b16 %v199
    %v824 = vunpack.c.l.b16 %v200
    %v825 = vunpack.c.h.b16 %v200
    %v826 = vunpack.c.l.b16 %v201
    %v827 = vunpack.c.h.b16 %v201
    %v828 = vunpack.c.l.b16 %v202
    %v829 = vunpack.c.h.b16 %v202
    %v830 = vunpack.c.l.b16 %v203
    %v831 = vunpack.c.h.b16 %v203
    %v832 = vunpack.c.l.b16 %v204
    %v833 = vunpack.c.h.b16 %v204
    %v834 = vunpack.c.l.b16 %v205
    %v835 = vunpack.c.h.b16 %v205
    %v836 = vunpack.c.l.b16 %v206
    %v837 = vunpack.c.h.b16 %v206
    %v838 = vunpack.c.l.b16 %v207
    %v839 = vunpack.c.h.b16 %v207
    %v840 = vunpack.c.l.b16 %v208
    %v841 = vunpack.c.h.b16 %v208
    %v842 = vunpack.c.l.b16 %v209
    %v843 = vunpack.c.h.b16 %v209
    %v844 = vunpack.c.l.b16 %v210
    %v845 = vunpack.c.h.b16 %v210
    %v846 = vunpack.c.l.b16 %v211
    %v847 = vunpack.c.h.b16 %v211
    %v848 = vunpack.c.l.b16 %v212
    %v849 = vunpack.c.h.b16 %v212
    %v850 = vunpack.c.l.b16 %v213
    %v851 = vunpack.c.h.b16 %v213
    %v852 = vunpack.c.l.b16 %v214
    %v853 = vunpack.c.h.b16 %v214
    %v854 = vunpack.c.l.b16 %v215
    %v855 = vunpack.c.h.b16 %v215
    %v856 = vunpack.c.l.b16 %v216
    %v857 = vunpack.c.h.b16 %v216
    %v858 = vunpack.c.l.b16 %v217
    %v859 = vunpack.c.h.b16 %v217
    %v860 = vunpack.c.l.b16 %v218
    %v861 = vunpack.c.h.b16 %v218
    %v862 = vunpack.c.l.b16 %v219
    %v863 = vunpack.c.h.b16 %v219
    %v864 = vunpack.c.l.b16 %v220
    %v865 = vunpack.c.h.b16 %v220
    %v866 = vunpack.c.l.b16 %v221
    %v867 = vunpack.c.h.b16 %v221
    %v868 = vunpack.c.l.b16 %v222
    %v869 = vunpack.c.h.b16 %v222
    %v870 = vunpack.c.l.b16 %v223
    %v871 = vunpack.c.h.b16 %v223
    %v872 = vunpack.c.l.b16 %v224
    %v873 = vunpack.c.h.b16 %v224
    %v874 = vunpack.c.l.b16 %v225
    %v875 = vunpack.c.h.b16 %v225
    %v876 = vunpack.c.l.b16 %v226
    %v877 = vunpack.c.h.b16 %v226
    %v878 = vunpack.c.l.b16 %v227
    %v879 = vunpack.c.h.b16 %v227
    %v880 = vunpack.c.l.b16 %v228
    %v881 = vunpack.c.h.b16 %v228
    %v882 = vunpack.c.l.b16 %v229
    %v883 = vunpack.c.h.b16 %v229
    %v884 = vunpack.c.l.b16 %v230
    %v885 = vunpack.c.h.b16 %v230
    %v886 = vunpack.c.l.b16 %v231
    %v887 = vunpack.c.h.b16 %v231
    %v888 = vunpack.c.l.b16 %v232
    %v889 = vunpack.c.h.b16 %v232
    %v890 = vunpack.c.l.b16 %v233
    %v891 = vunpack.c.h.b16 %v233
    %v892 = vunpack.c.l.b16 %v234
    %v893 = vunpack.c.h.b16 %v234
    %v894 = vunpack.c.l.b16 %v235
    %v895 = vunpack.c.h.b16 %v235
    %v896 = vunpack.c.l.b16 %v236
    %v897 = vunpack.c.h.b16 %v236
    %v898 = vunpack.c.l.b16 %v237
    %v899 = vunpack.c.h.b16 %v237
    %v900 = vunpack.c.l.b16 %v238
    %v901 = vunpack.c.h.b16 %v238
    %v902 = vunpack.c.l.b16 %v239
    %v903 = vunpack.c.h.b16 %v239
    %v904 = vunpack.c.l.b16 %v240
    %v905 = vunpack.c.h.b16 %v240
    %v906 = vunpack.c.l.b16 %v241
    %v907 = vunpack.c.h.b16 %v241
    %v908 = vunpack.c.l.b16 %v242
    %v909 = vunpack.c.h.b16 %v242
    %v910 = vunpack.c.l.b16 %v243
    %v911 = vunpack.c.h.b16 %v243
    %v912 = vunpack.c.l.b16 %v244
    %v913 = vunpack.c.h.b16 %v244
    %v914 = vunpack.c.l.b16 %v245
    %v915 = vunpack.c.h.b16 %v245
    %v916 = vunpack.c.l.b16 %v246
    %v917 = vunpack.c.h.b16 %v246
    %v918 = vunpack.c.l.b16 %v247
    %v919 = vunpack.c.h.b16 %v247
    %v920 = vunpack.c.l.b16 %v248
    %v921 = vunpack.c.h.b16 %v248
    %v922 = vunpack.c.l.b16 %v249
    %v923 = vunpack.c.h.b16 %v249
    %v924 = vunpack.c.l.b16 %v250
    %v925 = vunpack.c.h.b16 %v250
    %v926 = vunpack.c.l.b16 %v251
    %v927 = vunpack.c.h.b16 %v251
    %v928 = vunpack.c.l.b16 %v252
    %v929 = vunpack.c.h.b16 %v252
    %v930 = vunpack.c.l.b16 %v253
    %v931 = vunpack.c.h.b16 %v253
    %v932 = vunpack.c.l.b16 %v254
    %v933 = vunpack.c.h.b16 %v254
    %v934 = vunpack.c.l.b16 %v255
    %v935 = vunpack.c.h.b16 %v255
    %v936 = vunpack.c.l.b16 %v256
    %v937 = vunpack.c.h.b16 %v256
    %v938 = vunpack.c.l.b16 %v257
    %v939 = vunpack.c.h.b16 %v257
    %v940 = vunpack.c.l.b16 %v258
    %v941 = vunpack.c.h.b16 %v258
    %v942 = vunpack.c.l.b16 %v259
    %v943 = vunpack.c.h.b16 %v259
    %v944 = vunpack.c.l.b16 %v260
    %v945 = vunpack.c.h.b16 %v260
    %v946 = vunpack.c.l.b16 %v261
    %v947 = vunpack.c.h.b16 %v261
    %v948 = vunpack.c.l.b16 %v262
    %v949 = vunpack.c.h.b16 %v262
    %v950 = vunpack.c.l.b16 %v263
    %v951 = vunpack.c.h.b16 %v263
    %v952 = vunpack.c.l.b16 %v264
    %v953 = vunpack.c.h.b16 %v264
    %v954 = vunpack.c.l.b16 %v265
    %v955 = vunpack.c.h.b16 %v265
    %v956 = vunpack.c.l.b16 %v266
    %v957 = vunpack.c.h.b16 %v266
    %v958 = vunpack.c.l.b16 %v267
    %v959 = vunpack.c.h.b16 %v267
    %v960 = vunpack.c.l.b16 %v268
    %v961 = vunpack.c.h.b16 %v268
    %v962 = vunpack.c.l.b16 %v269
    %v963 = vunpack.c.h.b16 %v269
    %v964 = vunpack.c.l.b16 %v270
    %v965 = vunpack.c.h.b16 %v270
    %v966 = vunpack.c.l.b16 %v271
    %v967 = vunpack.c.h.b16 %v271
    %v968 = vunpack.c.l.b16 %v272
    %v969 = vunpack.c.h.b16 %v272
    %v970 = vunpack.c.l.b16 %v273
    %v971 = vunpack.c.h.b16 %v273
    %v972 = vunpack.c.l.b16 %v274
    %v973 = vunpack.c.h.b16 %v274
    %v974 = vunpack.c.l.b16 %v275
    %v975 = vunpack.c.h.b16 %v275
    %v976 = vunpack.c.l.b16 %v276
    %v977 = vunpack.c.h.b16 %v276
    %v978 = vunpack.c.l.b16 %v277
    %v979 = vunpack.c.h.b16 %v277
    %v980 = vunpack.c.l.b16 %v278
    %v981 = vunpack.c.h.b16 %v278
    %v982 = vunpack.c.l.b16 %v279
    %v983 = vunpack.c.h.b16 %v279
    %v984 = vunpack.c.l.b16 %v280
    %v985 = vunpack.c.h.b16 %v280
    %v986 = vunpack.c.l.b16 %v281
    %v987 = vunpack.c.h.b16 %v281
    %v988 = vunpack.c.l.b16 %v282
    %v989 = vunpack.c.h.b16 %v282
    %v990 = vpack.c.b16 %v602, %v598
    %v991 = vpack.c.b16 %v603, %v599
    %v992 = vpack.c.b16 %v604, %v600
    %v993 = vpack.c.b16 %v605, %v601
    %v994 = vpack.c.b16 %v610, %v606
    %v995 = vpack.c.b16 %v611, %v607
    %v996 = vpack.c.b16 %v612, %v608
    %v997 = vpack.c.b16 %v613, %v609
    %v998 = vpack.c.b16 %v618, %v614
    %v999 = vpack.c.b16 %v619, %v615
    %v1000 = vpack.c.b16 %v620, %v616
    %v1001 = vpack.c.b16 %v621, %v617
    %v1002 = vpack.c.b16 %v626, %v622
    %v1003 = vpack.c.b16 %v627, %v623
    %v1004 = vpack.c.b16 %v628, %v624
    %v1005 = vpack.c.b16 %v629, %v625
    %v1006 = vpack.c.b16 %v634, %v630
    %v1007 = vpack.c.b16 %v635, %v631
    %v1008 = vpack.c.b16 %v636, %v632
    %v1009 = vpack.c.b16 %v637, %v633
    %v1010 = vpack.c.b16 %v642, %v638
    %v1011 = vpack.c.b16 %v643, %v639
    %v1012 = vpack.c.b16 %v644, %v640
    %v1013 = vpack.c.b16 %v645, %v641
    %v1014 = vpack.c.b16 %v650, %v646
    %v1015 = vpack.c.b16 %v651, %v647
    %v1016 = vpack.c.b16 %v652, %v648
    %v1017 = vpack.c.b16 %v653, %v649
    %v1018 = vpack.c.b16 %v658, %v654
    %v1019 = vpack.c.b16 %v659, %v655
    %v1020 = vpack.c.b16 %v660, %v656
    %v1021 = vpack.c.b16 %v661, %v657
    %v1022 = vpack.c.b16 %v666, %v662
    %v1023 = vpack.c.b16 %v667, %v663
    %v1024 = vpack.c.b16 %v668, %v664
    %v1025 = vpack.c.b16 %v669, %v665
    %v1026 = vpack.c.b16 %v674, %v670
    %v1027 = vpack.c.b16 %v675, %v671
    %v1028 = vpack.c.b16 %v676, %v672
    %v1029 = vpack.c.b16 %v677, %v673
    %v1030 = vpack.c.b16 %v682, %v678
    %v1031 = vpack.c.b16 %v683, %v679
    %v1032 = vpack.c.b16 %v684, %v680
    %v1033 = vpack.c.b16 %v685, %v681
    %v1034 = vpack.c.b16 %v690, %v686
    %v1035 = vpack.c.b16 %v691, %v687
    %v1036 = vpack.c.b16 %v692, %v688
    %v1037 = vpack.c.b16 %v693, %v689
    %v1038 = vpack.c.b16 %v698, %v694
    %v1039 = vpack.c.b16 %v699, %v695
    %v1040 = vpack.c.b16 %v700, %v696
    %v1041 = vpack.c.b16 %v701, %v697
    %v1042 = vpack.c.b16 %v706, %v702
    %v1043 = vpack.c.b16 %v707, %v703
    %v1044 = vpack.c.b16 %v708, %v704
    %v1045 = vpack.c.b16 %v709, %v705
    %v1046 = vpack.c.b16 %v714, %v710
    %v1047 = vpack.c.b16 %v715, %v711
    %v1048 = vpack.c.b16 %v716, %v712
    %v1049 = vpack.c.b16 %v717, %v713
    %v1050 = vpack.c.b16 %v722, %v718
    %v1051 = vpack.c.b16 %v723, %v719
    %v1052 = vpack.c.b16 %v724, %v720
    %v1053 = vpack.c.b16 %v725, %v721
    %v1054 = vpack.c.b16 %v730, %v726
    %v1055 = vpack.c.b16 %v731, %v727
    %v1056 = vpack.c.b16 %v732, %v728
    %v1057 = vpack.c.b16 %v733, %v729
    %v1058 = vpack.c.b16 %v738, %v734
    %v1059 = vpack.c.b16 %v739, %v735
    %v1060 = vpack.c.b16 %v740, %v736
    %v1061 = vpack.c.b16 %v741, %v737
    %v1062 = vpack.c.b16 %v746, %v742
    %v1063 = vpack.c.b16 %v747, %v743
    %v1064 = vpack.c.b16 %v748, %v744
    %v1065 = vpack.c.b16 %v749, %v745
    %v1066 = vpack.c.b16 %v754, %v750
    %v1067 = vpack.c.b16 %v755, %v751
    %v1068 = vpack.c.b16 %v756, %v752
    %v1069 = vpack.c.b16 %v757, %v753
    %v1070 = vpack.c.b16 %v762, %v758
    %v1071 = vpack.c.b16 %v763, %v759
    %v1072 = vpack.c.b16 %v764, %v760
    %v1073 = vpack.c.b16 %v765, %v761
    %v1074 = vpack.c.b16 %v770, %v766
    %v1075 = vpack.c.b16 %v771, %v767
    %v1076 = vpack.c.b16 %v772, %v768
    %v1077 = vpack.c.b16 %v773, %v769
    %v1078 = vpack.c.b16 %v778, %v774
    %v1079 = vpack.c.b16 %v779, %v775
    %v1080 = vpack.c.b16 %v780, %v776
    %v1081 = vpack.c.b16 %v781, %v777
    %v1082 = vpack.c.b16 %v786, %v782
    %v1083 = vpack.c.b16 %v787, %v783
    %v1084 = vpack.c.b16 %v788, %v784
    %v1085 = vpack.c.b16 %v789, %v785
    %v1086 = vpack.c.b16 %v794, %v790
    %v1087 = vpack.c.b16 %v795, %v791
    %v1088 = vpack.c.b16 %v796, %v792
    %v1089 = vpack.c.b16 %v797, %v793
    %v1090 = vpack.c.b16 %v802, %v798
    %v1091 = vpack.c.b16 %v803, %v799
    %v1092 = vpack.c.b16 %v804, %v800
    %v1093 = vpack.c.b16 %v805, %v801
    %v1094 = vpack.c.b16 %v810, %v806
    %v1095 = vpack.c.b16 %v811, %v807
    %v1096 = vpack.c.b16 %v812, %v808
    %v1097 = vpack.c.b16 %v813, %v809
    %v1098 = vpack.c.b16 %v818, %v814
    %v1099 = vpack.c.b16 %v819, %v815
    %v1100 = vpack.c.b16 %v820, %v816
    %v1101 = vpack.c.b16 %v821, %v817
    %v1102 = vpack.c.b16 %v826, %v822
    %v1103 = vpack.c.b16 %v827, %v823
    %v1104 = vpack.c.b16 %v828, %v824
    %v1105 = vpack.c.b16 %v829, %v825
    %v1106 = vpack.c.b16 %v834, %v830
    %v1107 = vpack.c.b16 %v835, %v831
    %v1108 = vpack.c.b16 %v836, %v832
    %v1109 = vpack.c.b16 %v837, %v833
    %v1110 = vpack.c.b16 %v842, %v838
    %v1111 = vpack.c.b16 %v843, %v839
    %v1112 = vpack.c.b16 %v844, %v840
    %v1113 = vpack.c.b16 %v845, %v841
    %v1114 = vpack.c.b16 %v850, %v846
    %v1115 = vpack.c.b16 %v851, %v847
    %v1116 = vpack.c.b16 %v852, %v848
    %v1117 = vpack.c.b16 %v853, %v849
    %v1118 = vpack.c.b16 %v858, %v854
    %v1119 = vpack.c.b16 %v859, %v855
    %v1120 = vpack.c.b16 %v860, %v856
    %v1121 = vpack.c.b16 %v861, %v857
    %v1122 = vpack.c.b16 %v866, %v862
    %v1123 = vpack.c.b16 %v867, %v863
    %v1124 = vpack.c.b16 %v868, %v864
    %v1125 = vpack.c.b16 %v869, %v865
    %v1126 = vpack.c.b16 %v874, %v870
    %v1127 = vpack.c.b16 %v875, %v871
    %v1128 = vpack.c.b16 %v876, %v872
    %v1129 = vpack.c.b16 %v877, %v873
    %v1130 = vpack.c.b16 %v882, %v878
    %v1131 = vpack.c.b16 %v883, %v879
    %v1132 = vpack.c.b16 %v884, %v880
    %v1133 = vpack.c.b16 %v885, %v881
    %v1134 = vpack.c.b16 %v890, %v886
    %v1135 = vpack.c.b16 %v891, %v887
    %v1136 = vpack.c.b16 %v892, %v888
    %v1137 = vpack.c.b16 %v893, %v889
    %v1138 = vpack.c.b16 %v898, %v894
    %v1139 = vpack.c.b16 %v899, %v895
    %v1140 = vpack.c.b16 %v900, %v896
    %v1141 = vpack.c.b16 %v901, %v897
    %v1142 = vpack.c.b16 %v906, %v902
    %v1143 = vpack.c.b16 %v907, %v903
    %v1144 = vpack.c.b16 %v908, %v904
    %v1145 = vpack.c.b16 %v909, %v905
    %v1146 = vpack.c.b16 %v914, %v910
    %v1147 = vpack.c.b16 %v915, %v911
    %v1148 = vpack.c.b16 %v916, %v912
    %v1149 = vpack.c.b16 %v917, %v913
    %v1150 = vpack.c.b16 %v922, %v918
    %v1151 = vpack.c.b16 %v923, %v919
    %v1152 = vpack.c.b16 %v924, %v920
    %v1153 = vpack.c.b16 %v925, %v921
    %v1154 = vpack.c.b16 %v930, %v926
    %v1155 = vpack.c.b16 %v931, %v927
    %v1156 = vpack.c.b16 %v932, %v928
    %v1157 = vpack.c.b16 %v933, %v929
    %v1158 = vpack.c.b16 %v938, %v934
    %v1159 = vpack.c.b16 %v939, %v935
    %v1160 = vpack.c.b16 %v940, %v936
    %v1161 = vpack.c.b16 %v941, %v937
    %v1162 = vpack.c.b16 %v946, %v942
    %v1163 = vpack.c.b16 %v947, %v943
    %v1164 = vpack.c.b16 %v948, %v944
    %v1165 = vpack.c.b16 %v949, %v945
    %v1166 = vpack.c.b16 %v954, %v950
    %v1167 = vpack.c.b16 %v955, %v951
    %v1168 = vpack.c.b16 %v956, %v952
    %v1169 = vpack.c.b16 %v957, %v953
    %v1170 = vpack.c.b16 %v962, %v958
    %v1171 = vpack.c.b16 %v963, %v959
    %v1172 = vpack.c.b16 %v964, %v960
    %v1173 = vpack.c.b16 %v965, %v961
    %v1174 = vpack.c.b16 %v970, %v966
    %v1175 = vpack.c.b16 %v971, %v967
    %v1176 = vpack.c.b16 %v972, %v968
    %v1177 = vpack.c.b16 %v973, %v969
    %v1178 = vpack.c.b16 %v978, %v974
    %v1179 = vpack.c.b16 %v979, %v975
    %v1180 = vpack.c.b16 %v980, %v976
    %v1181 = vpack.c.b16 %v981, %v977
    %v1182 = vpack.c.b16 %v986, %v982
    %v1183 = vpack.c.b16 %v987, %v983
    %v1184 = vpack.c.b16 %v988, %v984
    %v1185 = vpack.c.b16 %v989, %v985
    %vm1382 = vcmask 130048
    %v1384 = vsel %vm1382, %v75, 0
    %1386 = vmatprep.subr.bf16.mxu0 %v991
    %1387 = vmatpush1.bf16.msra.mxu0 %v990
    %1388 = vmatprep.subr.bf16.mxu0 %v995
    %1389 = vmatpush1.bf16.msra.mxu0 %v994
    %1390 = vmatprep.subr.bf16.mxu0 %v999
    %1391 = vmatpush1.bf16.msra.mxu0 %v998
    %1392 = vmatprep.subr.bf16.mxu0 %v1003
    %1393 = vmatpush1.bf16.msra.mxu0 %v1002
    %1394 = vmatprep.subr.bf16.mxu0 %v1007
    %1395 = vmatpush1.bf16.msra.mxu0 %v1006
    %1396 = vmatprep.subr.bf16.mxu0 %v1011
    %1397 = vmatpush1.bf16.msra.mxu0 %v1010
    %1398 = vmatprep.subr.bf16.mxu0 %v1015
    %1399 = vmatpush1.bf16.msra.mxu0 %v1014
    %1400 = vmatprep.subr.bf16.mxu0 %v1019
    %1401 = vmatpush1.bf16.msra.mxu0 %v1018
    %1402 = vmatprep.subr.bf16.mxu0 %v1023
    %1403 = vmatpush1.bf16.msra.mxu0 %v1022
    %1404 = vmatprep.subr.bf16.mxu0 %v1027
    %1405 = vmatpush1.bf16.msra.mxu0 %v1026
    %1406 = vmatprep.subr.bf16.mxu0 %v1031
    %1407 = vmatpush1.bf16.msra.mxu0 %v1030
    %1408 = vmatprep.subr.bf16.mxu0 %v1035
    %1409 = vmatpush1.bf16.msra.mxu0 %v1034
    %1410 = vmatprep.subr.bf16.mxu0 %v1039
    %1411 = vmatpush1.bf16.msra.mxu0 %v1038
    %1412 = vmatprep.subr.bf16.mxu0 %v1043
    %1413 = vmatpush1.bf16.msra.mxu0 %v1042
    %1414 = vmatprep.subr.bf16.mxu0 %v1047
    %1415 = vmatpush1.bf16.msra.mxu0 %v1046
    %1416 = vmatprep.subr.bf16.mxu0 %v1051
    %1417 = vmatpush1.bf16.msra.mxu0 %v1050
    %1418 = vmatprep.mubr.bf16.mxu0 %v70
    %1419 = vmatmul.mubr.bf16.gmra.mrb[0].mxu0 %v69
    %v1420 = vpop.f32.mrb[0].mxu0
    %v1421 = vadd.f32 %v355, %v1420
    %v1422 = vpop.f32.mrb[0].mxu0
    %v1423 = vadd.f32 %v357, %v1422
    %v1424 = vpop.f32.mrb[0].mxu0
    %v1425 = vpop.f32.mrb[0].mxu0
    %1426 = vdwg.mxu0
    %1427 = vmatprep.subr.bf16.mxu0 %v1055
    %1428 = vmatpush1.bf16.msra.mxu0 %v1054
    %1429 = vmatprep.subr.bf16.mxu0 %v1059
    %1430 = vmatpush1.bf16.msra.mxu0 %v1058
    %1431 = vmatprep.subr.bf16.mxu0 %v1063
    %1432 = vmatpush1.bf16.msra.mxu0 %v1062
    %1433 = vmatprep.subr.bf16.mxu0 %v1067
    %1434 = vmatpush1.bf16.msra.mxu0 %v1066
    %1435 = vmatprep.subr.bf16.mxu0 %v1071
    %1436 = vmatpush1.bf16.msra.mxu0 %v1070
    %1437 = vmatprep.subr.bf16.mxu0 %v1075
    %1438 = vmatpush1.bf16.msra.mxu0 %v1074
    %1439 = vmatprep.subr.bf16.mxu0 %v1079
    %1440 = vmatpush1.bf16.msra.mxu0 %v1078
    %1441 = vmatprep.subr.bf16.mxu0 %v1083
    %1442 = vmatpush1.bf16.msra.mxu0 %v1082
    %1443 = vmatprep.subr.bf16.mxu0 %v1087
    %1444 = vmatpush1.bf16.msra.mxu0 %v1086
    %1445 = vmatprep.subr.bf16.mxu0 %v1091
    %1446 = vmatpush1.bf16.msra.mxu0 %v1090
    %1447 = vmatprep.subr.bf16.mxu0 %v1095
    %1448 = vmatpush1.bf16.msra.mxu0 %v1094
    %1449 = vmatprep.subr.bf16.mxu0 %v1099
    %1450 = vmatpush1.bf16.msra.mxu0 %v1098
    %1451 = vmatprep.subr.bf16.mxu0 %v1103
    %1452 = vmatpush1.bf16.msra.mxu0 %v1102
    %1453 = vmatprep.subr.bf16.mxu0 %v1107
    %1454 = vmatpush1.bf16.msra.mxu0 %v1106
    %1455 = vmatprep.subr.bf16.mxu0 %v1111
    %1456 = vmatpush1.bf16.msra.mxu0 %v1110
    %1457 = vmatprep.subr.bf16.mxu0 %v1115
    %1458 = vmatpush1.bf16.msra.mxu0 %v1114
    %1459 = vmatprep.mubr.bf16.mxu0 %v72
    %1460 = vmatmul.mubr.bf16.gmra.mrb[0].mxu0 %v71
    %v1461 = vpop.f32.mrb[0].mxu0
    %v1462 = vadd.f32 %v1421, %v1461
    %v1463 = vpop.f32.mrb[0].mxu0
    %v1464 = vadd.f32 %v1423, %v1463
    %v1465 = vpop.f32.mrb[0].mxu0
    %v1466 = vpop.f32.mrb[0].mxu0
    %1467 = vdwg.mxu0
    %1468 = vmatprep.subr.bf16.mxu0 %v1119
    %1469 = vmatpush1.bf16.msra.mxu0 %v1118
    %1470 = vmatprep.subr.bf16.mxu0 %v1123
    %1471 = vmatpush1.bf16.msra.mxu0 %v1122
    %1472 = vmatprep.subr.bf16.mxu0 %v1127
    %1473 = vmatpush1.bf16.msra.mxu0 %v1126
    %1474 = vmatprep.subr.bf16.mxu0 %v1131
    %1475 = vmatpush1.bf16.msra.mxu0 %v1130
    %1476 = vmatprep.subr.bf16.mxu0 %v1135
    %1477 = vmatpush1.bf16.msra.mxu0 %v1134
    %1478 = vmatprep.subr.bf16.mxu0 %v1139
    %1479 = vmatpush1.bf16.msra.mxu0 %v1138
    %1480 = vmatprep.subr.bf16.mxu0 %v1143
    %1481 = vmatpush1.bf16.msra.mxu0 %v1142
    %1482 = vmatprep.subr.bf16.mxu0 %v1147
    %1483 = vmatpush1.bf16.msra.mxu0 %v1146
    %1484 = vmatprep.subr.bf16.mxu0 %v1151
    %1485 = vmatpush1.bf16.msra.mxu0 %v1150
    %1486 = vmatprep.subr.bf16.mxu0 %v1155
    %1487 = vmatpush1.bf16.msra.mxu0 %v1154
    %1488 = vmatprep.subr.bf16.mxu0 %v1159
    %1489 = vmatpush1.bf16.msra.mxu0 %v1158
    %1490 = vmatprep.subr.bf16.mxu0 %v1163
    %1491 = vmatpush1.bf16.msra.mxu0 %v1162
    %1492 = vmatprep.subr.bf16.mxu0 %v1167
    %1493 = vmatpush1.bf16.msra.mxu0 %v1166
    %1494 = vmatprep.subr.bf16.mxu0 %v1171
    %1495 = vmatpush1.bf16.msra.mxu0 %v1170
    %1496 = vmatprep.subr.bf16.mxu0 %v1175
    %1497 = vmatpush1.bf16.msra.mxu0 %v1174
    %1498 = vmatprep.subr.bf16.mxu0 %v1179
    %1499 = vmatpush1.bf16.msra.mxu0 %v1178
    %1500 = vmatprep.mubr.bf16.mxu0 %v74
    %1501 = vmatmul.mubr.bf16.gmra.mrb[0].mxu0 %v73
    %v1502 = vpop.f32.mrb[0].mxu0
    %v1503 = vadd.f32 %v1462, %v1502
    %v1504 = vpop.f32.mrb[0].mxu0
    %v1505 = vadd.f32 %v1464, %v1504
    %v1506 = vpop.f32.mrb[0].mxu0
    %v1507 = vpop.f32.mrb[0].mxu0
    %1508 = vdwg.mxu0
    %1509 = vmatprep.subr.bf16.mxu0 %v1183
    %1510 = vmatpush1.bf16.msra.mxu0 %v1182
    %1511 = vmatprep.subr.bf16.mxu0 0
    %1512 = vmatpush1.bf16.msra.mxu0 0
    %1513 = vmatprep.subr.bf16.mxu0 0
    %1514 = vmatpush1.bf16.msra.mxu0 0
    %1515 = vmatprep.subr.bf16.mxu0 0
    %1516 = vmatpush1.bf16.msra.mxu0 0
    %1517 = vmatprep.subr.bf16.mxu0 0
    %1518 = vmatpush1.bf16.msra.mxu0 0
    %1519 = vmatprep.subr.bf16.mxu0 0
    %1520 = vmatpush1.bf16.msra.mxu0 0
    %1521 = vmatprep.subr.bf16.mxu0 0
    %1522 = vmatpush1.bf16.msra.mxu0 0
    %1523 = vmatprep.subr.bf16.mxu0 0
    %1524 = vmatpush1.bf16.msra.mxu0 0
    %1525 = vmatprep.subr.bf16.mxu0 0
    %1526 = vmatpush1.bf16.msra.mxu0 0
    %1527 = vmatprep.subr.bf16.mxu0 0
    %1528 = vmatpush1.bf16.msra.mxu0 0
    %1529 = vmatprep.subr.bf16.mxu0 0
    %1530 = vmatpush1.bf16.msra.mxu0 0
    %1531 = vmatprep.subr.bf16.mxu0 0
    %1532 = vmatpush1.bf16.msra.mxu0 0
    %1533 = vmatprep.subr.bf16.mxu0 0
    %1534 = vmatpush1.bf16.msra.mxu0 0
    %1535 = vmatprep.subr.bf16.mxu0 0
    %1536 = vmatpush1.bf16.msra.mxu0 0
    %1537 = vmatprep.subr.bf16.mxu0 0
    %1538 = vmatpush1.bf16.msra.mxu0 0
    %1539 = vmatprep.subr.bf16.mxu0 0
    %1540 = vmatpush1.bf16.msra.mxu0 0
    %1541 = vmatprep.mubr.bf16.mxu0 0
    %1542 = vmatmul.mubr.bf16.gmra.mrb[0].mxu0 %v1384
    %v1543 = vpop.f32.mrb[0].mxu0
    %v1544 = vadd.f32 %v1503, %v1543
    %v1545 = vpop.f32.mrb[0].mxu0
    %v1546 = vadd.f32 %v1505, %v1545
    %v1547 = vpop.f32.mrb[0].mxu0
    %v1548 = vpop.f32.mrb[0].mxu0
    %1549 = vdwg.mxu0
    %1550 = vmatprep.subr.bf16.mxu0 %v993
    %1551 = vmatpush1.bf16.msra.mxu0 %v992
    %1552 = vmatprep.subr.bf16.mxu0 %v997
    %1553 = vmatpush1.bf16.msra.mxu0 %v996
    %1554 = vmatprep.subr.bf16.mxu0 %v1001
    %1555 = vmatpush1.bf16.msra.mxu0 %v1000
    %1556 = vmatprep.subr.bf16.mxu0 %v1005
    %1557 = vmatpush1.bf16.msra.mxu0 %v1004
    %1558 = vmatprep.subr.bf16.mxu0 %v1009
    %1559 = vmatpush1.bf16.msra.mxu0 %v1008
    %1560 = vmatprep.subr.bf16.mxu0 %v1013
    %1561 = vmatpush1.bf16.msra.mxu0 %v1012
    %1562 = vmatprep.subr.bf16.mxu0 %v1017
    %1563 = vmatpush1.bf16.msra.mxu0 %v1016
    %1564 = vmatprep.subr.bf16.mxu0 %v1021
    %1565 = vmatpush1.bf16.msra.mxu0 %v1020
    %1566 = vmatprep.subr.bf16.mxu0 %v1025
    %1567 = vmatpush1.bf16.msra.mxu0 %v1024
    %1568 = vmatprep.subr.bf16.mxu0 %v1029
    %1569 = vmatpush1.bf16.msra.mxu0 %v1028
    %1570 = vmatprep.subr.bf16.mxu0 %v1033
    %1571 = vmatpush1.bf16.msra.mxu0 %v1032
    %1572 = vmatprep.subr.bf16.mxu0 %v1037
    %1573 = vmatpush1.bf16.msra.mxu0 %v1036
    %1574 = vmatprep.subr.bf16.mxu0 %v1041
    %1575 = vmatpush1.bf16.msra.mxu0 %v1040
    %1576 = vmatprep.subr.bf16.mxu0 %v1045
    %1577 = vmatpush1.bf16.msra.mxu0 %v1044
    %1578 = vmatprep.subr.bf16.mxu0 %v1049
    %1579 = vmatpush1.bf16.msra.mxu0 %v1048
    %1580 = vmatprep.subr.bf16.mxu0 %v1053
    %1581 = vmatpush1.bf16.msra.mxu0 %v1052
    %1582 = vmatprep.mubr.bf16.mxu0 %v70
    %1583 = vmatmul.mubr.bf16.gmra.mrb[0].mxu0 %v69
    %v1584 = vpop.f32.mrb[0].mxu0
    %v1585 = vadd.f32 %v396, %v1584
    %v1586 = vpop.f32.mrb[0].mxu0
    %v1587 = vadd.f32 %v398, %v1586
    %v1588 = vpop.f32.mrb[0].mxu0
    %v1589 = vpop.f32.mrb[0].mxu0
    %1590 = vdwg.mxu0
    %1591 = vmatprep.subr.bf16.mxu0 %v1057
    %1592 = vmatpush1.bf16.msra.mxu0 %v1056
    %1593 = vmatprep.subr.bf16.mxu0 %v1061
    %1594 = vmatpush1.bf16.msra.mxu0 %v1060
    %1595 = vmatprep.subr.bf16.mxu0 %v1065
    %1596 = vmatpush1.bf16.msra.mxu0 %v1064
    %1597 = vmatprep.subr.bf16.mxu0 %v1069
    %1598 = vmatpush1.bf16.msra.mxu0 %v1068
    %1599 = vmatprep.subr.bf16.mxu0 %v1073
    %1600 = vmatpush1.bf16.msra.mxu0 %v1072
    %1601 = vmatprep.subr.bf16.mxu0 %v1077
    %1602 = vmatpush1.bf16.msra.mxu0 %v1076
    %1603 = vmatprep.subr.bf16.mxu0 %v1081
    %1604 = vmatpush1.bf16.msra.mxu0 %v1080
    %1605 = vmatprep.subr.bf16.mxu0 %v1085
    %1606 = vmatpush1.bf16.msra.mxu0 %v1084
    %1607 = vmatprep.subr.bf16.mxu0 %v1089
    %1608 = vmatpush1.bf16.msra.mxu0 %v1088
    %1609 = vmatprep.subr.bf16.mxu0 %v1093
    %1610 = vmatpush1.bf16.msra.mxu0 %v1092
    %1611 = vmatprep.subr.bf16.mxu0 %v1097
    %1612 = vmatpush1.bf16.msra.mxu0 %v1096
    %1613 = vmatprep.subr.bf16.mxu0 %v1101
    %1614 = vmatpush1.bf16.msra.mxu0 %v1100
    %1615 = vmatprep.subr.bf16.mxu0 %v1105
    %1616 = vmatpush1.bf16.msra.mxu0 %v1104
    %1617 = vmatprep.subr.bf16.mxu0 %v1109
    %1618 = vmatpush1.bf16.msra.mxu0 %v1108
    %1619 = vmatprep.subr.bf16.mxu0 %v1113
    %1620 = vmatpush1.bf16.msra.mxu0 %v1112
    %1621 = vmatprep.subr.bf16.mxu0 %v1117
    %1622 = vmatpush1.bf16.msra.mxu0 %v1116
    %1623 = vmatprep.mubr.bf16.mxu0 %v72
    %1624 = vmatmul.mubr.bf16.gmra.mrb[0].mxu0 %v71
    %v1625 = vpop.f32.mrb[0].mxu0
    %v1626 = vadd.f32 %v1585, %v1625
    %v1627 = vpop.f32.mrb[0].mxu0
    %v1628 = vadd.f32 %v1587, %v1627
    %v1629 = vpop.f32.mrb[0].mxu0
    %v1630 = vpop.f32.mrb[0].mxu0
    %1631 = vdwg.mxu0
    %1632 = vmatprep.subr.bf16.mxu0 %v1121
    %1633 = vmatpush1.bf16.msra.mxu0 %v1120
    %1634 = vmatprep.subr.bf16.mxu0 %v1125
    %1635 = vmatpush1.bf16.msra.mxu0 %v1124
    %1636 = vmatprep.subr.bf16.mxu0 %v1129
    %1637 = vmatpush1.bf16.msra.mxu0 %v1128
    %1638 = vmatprep.subr.bf16.mxu0 %v1133
    %1639 = vmatpush1.bf16.msra.mxu0 %v1132
    %1640 = vmatprep.subr.bf16.mxu0 %v1137
    %1641 = vmatpush1.bf16.msra.mxu0 %v1136
    %1642 = vmatprep.subr.bf16.mxu0 %v1141
    %1643 = vmatpush1.bf16.msra.mxu0 %v1140
    %1644 = vmatprep.subr.bf16.mxu0 %v1145
    %1645 = vmatpush1.bf16.msra.mxu0 %v1144
    %1646 = vmatprep.subr.bf16.mxu0 %v1149
    %1647 = vmatpush1.bf16.msra.mxu0 %v1148
    %1648 = vmatprep.subr.bf16.mxu0 %v1153
    %1649 = vmatpush1.bf16.msra.mxu0 %v1152
    %1650 = vmatprep.subr.bf16.mxu0 %v1157
    %1651 = vmatpush1.bf16.msra.mxu0 %v1156
    %1652 = vmatprep.subr.bf16.mxu0 %v1161
    %1653 = vmatpush1.bf16.msra.mxu0 %v1160
    %1654 = vmatprep.subr.bf16.mxu0 %v1165
    %1655 = vmatpush1.bf16.msra.mxu0 %v1164
    %1656 = vmatprep.subr.bf16.mxu0 %v1169
    %1657 = vmatpush1.bf16.msra.mxu0 %v1168
    %1658 = vmatprep.subr.bf16.mxu0 %v1173
    %1659 = vmatpush1.bf16.msra.mxu0 %v1172
    %1660 = vmatprep.subr.bf16.mxu0 %v1177
    %1661 = vmatpush1.bf16.msra.mxu0 %v1176
    %1662 = vmatprep.subr.bf16.mxu0 %v1181
    %1663 = vmatpush1.bf16.msra.mxu0 %v1180
    %1664 = vmatprep.mubr.bf16.mxu0 %v74
    %1665 = vmatmul.mubr.bf16.gmra.mrb[0].mxu0 %v73
    %v1666 = vpop.f32.mrb[0].mxu0
    %v1667 = vadd.f32 %v1626, %v1666
    %v1668 = vpop.f32.mrb[0].mxu0
    %v1669 = vadd.f32 %v1628, %v1668
    %v1670 = vpop.f32.mrb[0].mxu0
    %v1671 = vpop.f32.mrb[0].mxu0
    %1672 = vdwg.mxu0
    %1673 = vmatprep.subr.bf16.mxu0 %v1185
    %1674 = vmatpush1.bf16.msra.mxu0 %v1184
    %1675 = vmatprep.subr.bf16.mxu0 0
    %1676 = vmatpush1.bf16.msra.mxu0 0
    %1677 = vmatprep.subr.bf16.mxu0 0
    %1678 = vmatpush1.bf16.msra.mxu0 0
    %1679 = vmatprep.subr.bf16.mxu0 0
    %1680 = vmatpush1.bf16.msra.mxu0 0
    %1681 = vmatprep.subr.bf16.mxu0 0
    %1682 = vmatpush1.bf16.msra.mxu0 0
    %1683 = vmatprep.subr.bf16.mxu0 0
    %1684 = vmatpush1.bf16.msra.mxu0 0
    %1685 = vmatprep.subr.bf16.mxu0 0
    %1686 = vmatpush1.bf16.msra.mxu0 0
    %1687 = vmatprep.subr.bf16.mxu0 0
    %1688 = vmatpush1.bf16.msra.mxu0 0
    %1689 = vmatprep.subr.bf16.mxu0 0
    %1690 = vmatpush1.bf16.msra.mxu0 0
    %1691 = vmatprep.subr.bf16.mxu0 0
    %1692 = vmatpush1.bf16.msra.mxu0 0
    %1693 = vmatprep.subr.bf16.mxu0 0
    %1694 = vmatpush1.bf16.msra.mxu0 0
    %1695 = vmatprep.subr.bf16.mxu0 0
    %1696 = vmatpush1.bf16.msra.mxu0 0
    %1697 = vmatprep.subr.bf16.mxu0 0
    %1698 = vmatpush1.bf16.msra.mxu0 0
    %1699 = vmatprep.subr.bf16.mxu0 0
    %1700 = vmatpush1.bf16.msra.mxu0 0
    %1701 = vmatprep.subr.bf16.mxu0 0
    %1702 = vmatpush1.bf16.msra.mxu0 0
    %1703 = vmatprep.subr.bf16.mxu0 0
    %1704 = vmatpush1.bf16.msra.mxu0 0
    %1705 = vmatprep.mubr.bf16.mxu0 0
    %1706 = vmatmul.mubr.bf16.gmra.mrb[0].mxu0 %v1384
    %v1707 = vpop.f32.mrb[0].mxu0
    %v1708 = vadd.f32 %v1667, %v1707
    %v1709 = vpop.f32.mrb[0].mxu0
    %v1710 = vadd.f32 %v1669, %v1709
    %v1711 = vpop.f32.mrb[0].mxu0
    %v1712 = vpop.f32.mrb[0].mxu0
    %1713 = vdwg.mxu0
    %v1714 = vld [vmem:[%s5] sm:$0xf]
    %v1716 = vlaneseq
    %v1717 = vshrl.u32 %v1716, 7
    %v1718 = vsub.s32 0, %v1717
    %v1719 = vrot.slane %v1714, %v1718
    %v1720 = vlaneseq
    %v1721 = vshrl.u32 %v1720, 7
    %v1722 = vsub.s32 1, %v1721
    %v1723 = vrot.slane %v1714, %v1722
    %v1724 = vlaneseq
    %v1725 = vshrl.u32 %v1724, 7
    %v1726 = vsub.s32 2, %v1725
    %v1727 = vrot.slane %v1714, %v1726
    %v1728 = vlaneseq
    %v1729 = vshrl.u32 %v1728, 7
    %v1730 = vsub.s32 3, %v1729
    %v1731 = vrot.slane %v1714, %v1730
    %v1736 = vadd.f32 %v1544, %v1719
    %v1737 = vadd.f32 %v1546, %v1723
    %v1738 = vadd.f32 %v1708, %v1727
    %v1739 = vadd.f32 %v1710, %v1731
    %v1740 = vmax.f32 %v1736, 0.0
    %v1741 = vmax.f32 %v1737, 0.0
    %v1742 = vmax.f32 %v1738, 0.0
    %v1743 = vmax.f32 %v1739, 0.0
    %v1744 = vpack.c.bf16 %v1740, %v1740
    %v1745 = vpack.c.bf16 %v1741, %v1741
    %v1746 = vpack.c.bf16 %v1742, %v1742
    %v1747 = vpack.c.bf16 %v1743, %v1743
    %v1748 = vld [vmem:[%s6] sm:$0xff]
    %v1749 = vld [vmem:[%s6 + $0x8] sm:$0xff]
    %v1750 = vld [vmem:[%s6 + $0x10] sm:$0xff]
    %v1751 = vld [vmem:[%s6 + $0x18] sm:$0xff]
    %v1752 = vld [vmem:[%s6 + $0x20] sm:$0xff]
    %v1753 = vld [vmem:[%s6 + $0x28] sm:$0xff]
    %v1754 = vld [vmem:[%s6 + $0x30] sm:$0xff]
    %v1755 = vld [vmem:[%s6 + $0x38] sm:$0xff]
    %v1756 = vld [vmem:[%s6 + $0x40] sm:$0xff]
    %v1757 = vld [vmem:[%s6 + $0x48] sm:$0xff]
    %v1758 = vld [vmem:[%s6 + $0x50] sm:$0xff]
    %v1759 = vld [vmem:[%s6 + $0x58] sm:$0xff]
    %v1760 = vld [vmem:[%s6 + $0x60] sm:$0xff]
    %v1761 = vld [vmem:[%s6 + $0x68] sm:$0xff]
    %v1762 = vld [vmem:[%s6 + $0x70] sm:$0xff]
    %v1763 = vld [vmem:[%s6 + $0x78] sm:$0xff]
    %v1764 = vld [vmem:[%s6 + $0x80] sm:$0xff]
    %v1765 = vld [vmem:[%s6 + $0x88] sm:$0xff]
    %v1766 = vld [vmem:[%s6 + $0x90] sm:$0xff]
    %v1767 = vld [vmem:[%s6 + $0x98] sm:$0xff]
    %v1768 = vld [vmem:[%s6 + $0xa0] sm:$0xff]
    %v1769 = vld [vmem:[%s6 + $0xa8] sm:$0xff]
    %v1770 = vld [vmem:[%s6 + $0xb0] sm:$0xff]
    %v1771 = vld [vmem:[%s6 + $0xb8] sm:$0xff]
    %v1772 = vld [vmem:[%s6 + $0xc0] sm:$0xff]
    %v1773 = vld [vmem:[%s6 + $0xc8] sm:$0xff]
    %v1774 = vld [vmem:[%s6 + $0xd0] sm:$0xff]
    %v1775 = vld [vmem:[%s6 + $0xd8] sm:$0xff]
    %v1776 = vld [vmem:[%s6 + $0xe0] sm:$0xff]
    %v1777 = vld [vmem:[%s6 + $0xe8] sm:$0xff]
    %v1778 = vld [vmem:[%s6 + $0xf0] sm:$0xff]
    %v1779 = vld [vmem:[%s6 + $0xf8] sm:$0xff]
    %v1780 = vld [vmem:[%s6 + $0x100] sm:$0xff]
    %v1781 = vld [vmem:[%s6 + $0x108] sm:$0xff]
    %v1782 = vld [vmem:[%s6 + $0x110] sm:$0xff]
    %v1783 = vld [vmem:[%s6 + $0x118] sm:$0xff]
    %v1784 = vld [vmem:[%s6 + $0x120] sm:$0xff]
    %v1785 = vld [vmem:[%s6 + $0x128] sm:$0xff]
    %v1786 = vld [vmem:[%s6 + $0x130] sm:$0xff]
    %v1787 = vld [vmem:[%s6 + $0x138] sm:$0xff]
    %v1788 = vld [vmem:[%s6 + $0x140] sm:$0xff]
    %v1789 = vld [vmem:[%s6 + $0x148] sm:$0xff]
    %v1790 = vld [vmem:[%s6 + $0x150] sm:$0xff]
    %v1791 = vld [vmem:[%s6 + $0x158] sm:$0xff]
    %v1792 = vld [vmem:[%s6 + $0x160] sm:$0xff]
    %v1793 = vld [vmem:[%s6 + $0x168] sm:$0xff]
    %v1794 = vld [vmem:[%s6 + $0x170] sm:$0xff]
    %v1795 = vld [vmem:[%s6 + $0x178] sm:$0xff]
    %v1796 = vld [vmem:[%s6 + $0x180] sm:$0xff]
    %v1797 = vld [vmem:[%s6 + $0x188] sm:$0xff]
    %v1798 = vld [vmem:[%s7] sm:$0x3]
    %v1800 = vlaneseq
    %v1801 = vshrl.u32 %v1800, 7
    %v1802 = vsub.s32 0, %v1801
    %v1803 = vrot.slane %v1798, %v1802
    %v1804 = vlaneseq
    %v1805 = vshrl.u32 %v1804, 7
    %v1806 = vsub.s32 1, %v1805
    %v1807 = vrot.slane %v1798, %v1806
    %v1860 = vunpack.c.l.b16 %v1748
    %v1861 = vunpack.c.h.b16 %v1748
    %v1862 = vunpack.c.l.b16 %v1749
    %v1863 = vunpack.c.h.b16 %v1749
    %v1864 = vunpack.c.l.b16 %v1750
    %v1865 = vunpack.c.h.b16 %v1750
    %v1866 = vunpack.c.l.b16 %v1751
    %v1867 = vunpack.c.h.b16 %v1751
    %v1868 = vunpack.c.l.b16 %v1752
    %v1869 = vunpack.c.h.b16 %v1752
    %v1870 = vunpack.c.l.b16 %v1753
    %v1871 = vunpack.c.h.b16 %v1753
    %v1872 = vunpack.c.l.b16 %v1754
    %v1873 = vunpack.c.h.b16 %v1754
    %v1874 = vunpack.c.l.b16 %v1755
    %v1875 = vunpack.c.h.b16 %v1755
    %v1876 = vunpack.c.l.b16 %v1756
    %v1877 = vunpack.c.h.b16 %v1756
    %v1878 = vunpack.c.l.b16 %v1757
    %v1879 = vunpack.c.h.b16 %v1757
    %v1880 = vunpack.c.l.b16 %v1758
    %v1881 = vunpack.c.h.b16 %v1758
    %v1882 = vunpack.c.l.b16 %v1759
    %v1883 = vunpack.c.h.b16 %v1759
    %v1884 = vunpack.c.l.b16 %v1760
    %v1885 = vunpack.c.h.b16 %v1760
    %v1886 = vunpack.c.l.b16 %v1761
    %v1887 = vunpack.c.h.b16 %v1761
    %v1888 = vunpack.c.l.b16 %v1762
    %v1889 = vunpack.c.h.b16 %v1762
    %v1890 = vunpack.c.l.b16 %v1763
    %v1891 = vunpack.c.h.b16 %v1763
    %v1892 = vunpack.c.l.b16 %v1764
    %v1893 = vunpack.c.h.b16 %v1764
    %v1894 = vunpack.c.l.b16 %v1765
    %v1895 = vunpack.c.h.b16 %v1765
    %v1896 = vunpack.c.l.b16 %v1766
    %v1897 = vunpack.c.h.b16 %v1766
    %v1898 = vunpack.c.l.b16 %v1767
    %v1899 = vunpack.c.h.b16 %v1767
    %v1900 = vunpack.c.l.b16 %v1768
    %v1901 = vunpack.c.h.b16 %v1768
    %v1902 = vunpack.c.l.b16 %v1769
    %v1903 = vunpack.c.h.b16 %v1769
    %v1904 = vunpack.c.l.b16 %v1770
    %v1905 = vunpack.c.h.b16 %v1770
    %v1906 = vunpack.c.l.b16 %v1771
    %v1907 = vunpack.c.h.b16 %v1771
    %v1908 = vunpack.c.l.b16 %v1772
    %v1909 = vunpack.c.h.b16 %v1772
    %v1910 = vunpack.c.l.b16 %v1773
    %v1911 = vunpack.c.h.b16 %v1773
    %v1912 = vunpack.c.l.b16 %v1774
    %v1913 = vunpack.c.h.b16 %v1774
    %v1914 = vunpack.c.l.b16 %v1775
    %v1915 = vunpack.c.h.b16 %v1775
    %v1916 = vunpack.c.l.b16 %v1776
    %v1917 = vunpack.c.h.b16 %v1776
    %v1918 = vunpack.c.l.b16 %v1777
    %v1919 = vunpack.c.h.b16 %v1777
    %v1920 = vunpack.c.l.b16 %v1778
    %v1921 = vunpack.c.h.b16 %v1778
    %v1922 = vunpack.c.l.b16 %v1779
    %v1923 = vunpack.c.h.b16 %v1779
    %v1924 = vunpack.c.l.b16 %v1780
    %v1925 = vunpack.c.h.b16 %v1780
    %v1926 = vunpack.c.l.b16 %v1781
    %v1927 = vunpack.c.h.b16 %v1781
    %v1928 = vunpack.c.l.b16 %v1782
    %v1929 = vunpack.c.h.b16 %v1782
    %v1930 = vunpack.c.l.b16 %v1783
    %v1931 = vunpack.c.h.b16 %v1783
    %v1932 = vunpack.c.l.b16 %v1784
    %v1933 = vunpack.c.h.b16 %v1784
    %v1934 = vunpack.c.l.b16 %v1785
    %v1935 = vunpack.c.h.b16 %v1785
    %v1936 = vunpack.c.l.b16 %v1786
    %v1937 = vunpack.c.h.b16 %v1786
    %v1938 = vunpack.c.l.b16 %v1787
    %v1939 = vunpack.c.h.b16 %v1787
    %v1940 = vunpack.c.l.b16 %v1788
    %v1941 = vunpack.c.h.b16 %v1788
    %v1942 = vunpack.c.l.b16 %v1789
    %v1943 = vunpack.c.h.b16 %v1789
    %v1944 = vunpack.c.l.b16 %v1790
    %v1945 = vunpack.c.h.b16 %v1790
    %v1946 = vunpack.c.l.b16 %v1791
    %v1947 = vunpack.c.h.b16 %v1791
    %v1948 = vunpack.c.l.b16 %v1792
    %v1949 = vunpack.c.h.b16 %v1792
    %v1950 = vunpack.c.l.b16 %v1793
    %v1951 = vunpack.c.h.b16 %v1793
    %v1952 = vunpack.c.l.b16 %v1794
    %v1953 = vunpack.c.h.b16 %v1794
    %v1954 = vunpack.c.l.b16 %v1795
    %v1955 = vunpack.c.h.b16 %v1795
    %v1956 = vunpack.c.l.b16 %v1796
    %v1957 = vunpack.c.h.b16 %v1796
    %v1958 = vunpack.c.l.b16 %v1797
    %v1959 = vunpack.c.h.b16 %v1797
    %v1960 = vpack.c.b16 %v1862, %v1860
    %v1961 = vpack.c.b16 %v1863, %v1861
    %v1962 = vpack.c.b16 %v1866, %v1864
    %v1963 = vpack.c.b16 %v1867, %v1865
    %v1964 = vpack.c.b16 %v1870, %v1868
    %v1965 = vpack.c.b16 %v1871, %v1869
    %v1966 = vpack.c.b16 %v1874, %v1872
    %v1967 = vpack.c.b16 %v1875, %v1873
    %v1968 = vpack.c.b16 %v1878, %v1876
    %v1969 = vpack.c.b16 %v1879, %v1877
    %v1970 = vpack.c.b16 %v1882, %v1880
    %v1971 = vpack.c.b16 %v1883, %v1881
    %v1972 = vpack.c.b16 %v1886, %v1884
    %v1973 = vpack.c.b16 %v1887, %v1885
    %v1974 = vpack.c.b16 %v1890, %v1888
    %v1975 = vpack.c.b16 %v1891, %v1889
    %v1976 = vpack.c.b16 %v1894, %v1892
    %v1977 = vpack.c.b16 %v1895, %v1893
    %v1978 = vpack.c.b16 %v1898, %v1896
    %v1979 = vpack.c.b16 %v1899, %v1897
    %v1980 = vpack.c.b16 %v1902, %v1900
    %v1981 = vpack.c.b16 %v1903, %v1901
    %v1982 = vpack.c.b16 %v1906, %v1904
    %v1983 = vpack.c.b16 %v1907, %v1905
    %v1984 = vpack.c.b16 %v1910, %v1908
    %v1985 = vpack.c.b16 %v1911, %v1909
    %v1986 = vpack.c.b16 %v1914, %v1912
    %v1987 = vpack.c.b16 %v1915, %v1913
    %v1988 = vpack.c.b16 %v1918, %v1916
    %v1989 = vpack.c.b16 %v1919, %v1917
    %v1990 = vpack.c.b16 %v1922, %v1920
    %v1991 = vpack.c.b16 %v1923, %v1921
    %v1992 = vpack.c.b16 %v1926, %v1924
    %v1993 = vpack.c.b16 %v1927, %v1925
    %v1994 = vpack.c.b16 %v1930, %v1928
    %v1995 = vpack.c.b16 %v1931, %v1929
    %v1996 = vpack.c.b16 %v1934, %v1932
    %v1997 = vpack.c.b16 %v1935, %v1933
    %v1998 = vpack.c.b16 %v1938, %v1936
    %v1999 = vpack.c.b16 %v1939, %v1937
    %v2000 = vpack.c.b16 %v1942, %v1940
    %v2001 = vpack.c.b16 %v1943, %v1941
    %v2002 = vpack.c.b16 %v1946, %v1944
    %v2003 = vpack.c.b16 %v1947, %v1945
    %v2004 = vpack.c.b16 %v1950, %v1948
    %v2005 = vpack.c.b16 %v1951, %v1949
    %v2006 = vpack.c.b16 %v1954, %v1952
    %v2007 = vpack.c.b16 %v1955, %v1953
    %v2008 = vpack.c.b16 %v1958, %v1956
    %v2009 = vpack.c.b16 %v1959, %v1957
    %v2061 = vsel %vm1382, %v1747, 0
    %2063 = vmatprep.subr.bf16.mxu0 %v1961
    %2064 = vmatpush1.bf16.msra.mxu0 %v1960
    %2065 = vmatprep.subr.bf16.mxu0 %v1963
    %2066 = vmatpush1.bf16.msra.mxu0 %v1962
    %2067 = vmatprep.subr.bf16.mxu0 %v1965
    %2068 = vmatpush1.bf16.msra.mxu0 %v1964
    %2069 = vmatprep.subr.bf16.mxu0 %v1967
    %2070 = vmatpush1.bf16.msra.mxu0 %v1966
    %2071 = vmatprep.subr.bf16.mxu0 %v1969
    %2072 = vmatpush1.bf16.msra.mxu0 %v1968
    %2073 = vmatprep.subr.bf16.mxu0 %v1971
    %2074 = vmatpush1.bf16.msra.mxu0 %v1970
    %2075 = vmatprep.subr.bf16.mxu0 %v1973
    %2076 = vmatpush1.bf16.msra.mxu0 %v1972
    %2077 = vmatprep.subr.bf16.mxu0 %v1975
    %2078 = vmatpush1.bf16.msra.mxu0 %v1974
    %2079 = vmatprep.subr.bf16.mxu0 %v1977
    %2080 = vmatpush1.bf16.msra.mxu0 %v1976
    %2081 = vmatprep.subr.bf16.mxu0 %v1979
    %2082 = vmatpush1.bf16.msra.mxu0 %v1978
    %2083 = vmatprep.subr.bf16.mxu0 %v1981
    %2084 = vmatpush1.bf16.msra.mxu0 %v1980
    %2085 = vmatprep.subr.bf16.mxu0 %v1983
    %2086 = vmatpush1.bf16.msra.mxu0 %v1982
    %2087 = vmatprep.subr.bf16.mxu0 %v1985
    %2088 = vmatpush1.bf16.msra.mxu0 %v1984
    %2089 = vmatprep.subr.bf16.mxu0 %v1987
    %2090 = vmatpush1.bf16.msra.mxu0 %v1986
    %2091 = vmatprep.subr.bf16.mxu0 %v1989
    %2092 = vmatpush1.bf16.msra.mxu0 %v1988
    %2093 = vmatprep.subr.bf16.mxu0 %v1991
    %2094 = vmatpush1.bf16.msra.mxu0 %v1990
    %2095 = vmatprep.mubr.bf16.mxu0 %v1745
    %2096 = vmatmul.mubr.bf16.gmra.mrb[0].mxu0 %v1744
    %v2097 = vpop.f32.mrb[0].mxu0
    %v2098 = vadd.f32 %v1803, %v2097
    %v2099 = vpop.f32.mrb[0].mxu0
    %v2100 = vadd.f32 %v1807, %v2099
    %v2101 = vpop.f32.mrb[0].mxu0
    %v2102 = vpop.f32.mrb[0].mxu0
    %2103 = vdwg.mxu0
    %2104 = vmatprep.subr.bf16.mxu0 %v1993
    %2105 = vmatpush1.bf16.msra.mxu0 %v1992
    %2106 = vmatprep.subr.bf16.mxu0 %v1995
    %2107 = vmatpush1.bf16.msra.mxu0 %v1994
    %2108 = vmatprep.subr.bf16.mxu0 %v1997
    %2109 = vmatpush1.bf16.msra.mxu0 %v1996
    %2110 = vmatprep.subr.bf16.mxu0 %v1999
    %2111 = vmatpush1.bf16.msra.mxu0 %v1998
    %2112 = vmatprep.subr.bf16.mxu0 %v2001
    %2113 = vmatpush1.bf16.msra.mxu0 %v2000
    %2114 = vmatprep.subr.bf16.mxu0 %v2003
    %2115 = vmatpush1.bf16.msra.mxu0 %v2002
    %2116 = vmatprep.subr.bf16.mxu0 %v2005
    %2117 = vmatpush1.bf16.msra.mxu0 %v2004
    %2118 = vmatprep.subr.bf16.mxu0 %v2007
    %2119 = vmatpush1.bf16.msra.mxu0 %v2006
    %2120 = vmatprep.subr.bf16.mxu0 %v2009
    %2121 = vmatpush1.bf16.msra.mxu0 %v2008
    %2122 = vmatprep.subr.bf16.mxu0 0
    %2123 = vmatpush1.bf16.msra.mxu0 0
    %2124 = vmatprep.subr.bf16.mxu0 0
    %2125 = vmatpush1.bf16.msra.mxu0 0
    %2126 = vmatprep.subr.bf16.mxu0 0
    %2127 = vmatpush1.bf16.msra.mxu0 0
    %2128 = vmatprep.subr.bf16.mxu0 0
    %2129 = vmatpush1.bf16.msra.mxu0 0
    %2130 = vmatprep.subr.bf16.mxu0 0
    %2131 = vmatpush1.bf16.msra.mxu0 0
    %2132 = vmatprep.subr.bf16.mxu0 0
    %2133 = vmatpush1.bf16.msra.mxu0 0
    %2134 = vmatprep.subr.bf16.mxu0 0
    %2135 = vmatpush1.bf16.msra.mxu0 0
    %2136 = vmatprep.mubr.bf16.mxu0 %v2061
    %2137 = vmatmul.mubr.bf16.gmra.mrb[0].mxu0 %v1746
    %v2138 = vpop.f32.mrb[0].mxu0
    %v2139 = vadd.f32 %v2098, %v2138
    %v2140 = vpop.f32.mrb[0].mxu0
    %v2141 = vadd.f32 %v2100, %v2140
    %v2142 = vpop.f32.mrb[0].mxu0
    %v2143 = vpop.f32.mrb[0].mxu0
    %2144 = vdwg.mxu0
    %v2145 = vmax.f32 %v2139, 0.0
    %v2146 = vmax.f32 %v2141, 0.0
    %v2147 = vpack.c.bf16 %v2145, %v2145
    %v2148 = vpack.c.bf16 %v2146, %v2146
    %v2149 = vld [vmem:[%s8] sm:$0xff]
    %v2150 = vld [vmem:[%s8 + $0x8] sm:$0xff]
    %v2151 = vld [vmem:[%s8 + $0x10] sm:$0xff]
    %v2152 = vld [vmem:[%s8 + $0x18] sm:$0xff]
    %v2153 = vld [vmem:[%s8 + $0x20] sm:$0xff]
    %v2154 = vld [vmem:[%s8 + $0x28] sm:$0xff]
    %v2155 = vld [vmem:[%s8 + $0x30] sm:$0xff]
    %v2156 = vld [vmem:[%s8 + $0x38] sm:$0xff]
    %v2157 = vld [vmem:[%s8 + $0x40] sm:$0xff]
    %v2158 = vld [vmem:[%s8 + $0x48] sm:$0xff]
    %v2159 = vld [vmem:[%s8 + $0x50] sm:$0xff]
    %v2160 = vld [vmem:[%s8 + $0x58] sm:$0xff]
    %v2161 = vld [vmem:[%s8 + $0x60] sm:$0xff]
    %v2162 = vld [vmem:[%s8 + $0x68] sm:$0xff]
    %v2163 = vld [vmem:[%s8 + $0x70] sm:$0xff]
    %v2164 = vld [vmem:[%s8 + $0x78] sm:$0xff]
    %v2165 = vld [vmem:[%s8 + $0x80] sm:$0xff]
    %v2166 = vld [vmem:[%s8 + $0x88] sm:$0xff]
    %v2167 = vld [vmem:[%s8 + $0x90] sm:$0xff]
    %v2168 = vld [vmem:[%s8 + $0x98] sm:$0xff]
    %v2169 = vld [vmem:[%s8 + $0xa0] sm:$0xff]
    %v2170 = vld [vmem:[%s8 + $0xa8] sm:$0xff]
    %v2171 = vld [vmem:[%s8 + $0xb0] sm:$0xff]
    %v2172 = vld [vmem:[%s8 + $0xb8] sm:$0xff]
    %v2173 = vld [vmem:[%s8 + $0xc0] sm:$0xff]
    %v2174 = vld [vmem:[%s9] sm:$0x3]
    %v2176 = vlaneseq
    %v2177 = vshrl.u32 %v2176, 7
    %v2178 = vsub.s32 0, %v2177
    %v2179 = vrot.slane %v2174, %v2178
    %v2180 = vlaneseq
    %v2181 = vshrl.u32 %v2180, 7
    %v2182 = vsub.s32 1, %v2181
    %v2183 = vrot.slane %v2174, %v2182
    %v2211 = vunpack.c.l.b16 %v2149
    %v2212 = vunpack.c.h.b16 %v2149
    %v2213 = vunpack.c.l.b16 %v2150
    %v2214 = vunpack.c.h.b16 %v2150
    %v2215 = vunpack.c.l.b16 %v2151
    %v2216 = vunpack.c.h.b16 %v2151
    %v2217 = vunpack.c.l.b16 %v2152
    %v2218 = vunpack.c.h.b16 %v2152
    %v2219 = vunpack.c.l.b16 %v2153
    %v2220 = vunpack.c.h.b16 %v2153
    %v2221 = vunpack.c.l.b16 %v2154
    %v2222 = vunpack.c.h.b16 %v2154
    %v2223 = vunpack.c.l.b16 %v2155
    %v2224 = vunpack.c.h.b16 %v2155
    %v2225 = vunpack.c.l.b16 %v2156
    %v2226 = vunpack.c.h.b16 %v2156
    %v2227 = vunpack.c.l.b16 %v2157
    %v2228 = vunpack.c.h.b16 %v2157
    %v2229 = vunpack.c.l.b16 %v2158
    %v2230 = vunpack.c.h.b16 %v2158
    %v2231 = vunpack.c.l.b16 %v2159
    %v2232 = vunpack.c.h.b16 %v2159
    %v2233 = vunpack.c.l.b16 %v2160
    %v2234 = vunpack.c.h.b16 %v2160
    %v2235 = vunpack.c.l.b16 %v2161
    %v2236 = vunpack.c.h.b16 %v2161
    %v2237 = vunpack.c.l.b16 %v2162
    %v2238 = vunpack.c.h.b16 %v2162
    %v2239 = vunpack.c.l.b16 %v2163
    %v2240 = vunpack.c.h.b16 %v2163
    %v2241 = vunpack.c.l.b16 %v2164
    %v2242 = vunpack.c.h.b16 %v2164
    %v2243 = vunpack.c.l.b16 %v2165
    %v2244 = vunpack.c.h.b16 %v2165
    %v2245 = vunpack.c.l.b16 %v2166
    %v2246 = vunpack.c.h.b16 %v2166
    %v2247 = vunpack.c.l.b16 %v2167
    %v2248 = vunpack.c.h.b16 %v2167
    %v2249 = vunpack.c.l.b16 %v2168
    %v2250 = vunpack.c.h.b16 %v2168
    %v2251 = vunpack.c.l.b16 %v2169
    %v2252 = vunpack.c.h.b16 %v2169
    %v2253 = vunpack.c.l.b16 %v2170
    %v2254 = vunpack.c.h.b16 %v2170
    %v2255 = vunpack.c.l.b16 %v2171
    %v2256 = vunpack.c.h.b16 %v2171
    %v2257 = vunpack.c.l.b16 %v2172
    %v2258 = vunpack.c.h.b16 %v2172
    %v2259 = vunpack.c.l.b16 %v2173
    %v2260 = vunpack.c.h.b16 %v2173
    %v2261 = vpack.c.b16 %v2213, %v2211
    %v2262 = vpack.c.b16 %v2214, %v2212
    %v2263 = vpack.c.b16 %v2217, %v2215
    %v2264 = vpack.c.b16 %v2218, %v2216
    %v2265 = vpack.c.b16 %v2221, %v2219
    %v2266 = vpack.c.b16 %v2222, %v2220
    %v2267 = vpack.c.b16 %v2225, %v2223
    %v2268 = vpack.c.b16 %v2226, %v2224
    %v2269 = vpack.c.b16 %v2229, %v2227
    %v2270 = vpack.c.b16 %v2230, %v2228
    %v2271 = vpack.c.b16 %v2233, %v2231
    %v2272 = vpack.c.b16 %v2234, %v2232
    %v2273 = vpack.c.b16 %v2237, %v2235
    %v2274 = vpack.c.b16 %v2238, %v2236
    %v2275 = vpack.c.b16 %v2241, %v2239
    %v2276 = vpack.c.b16 %v2242, %v2240
    %v2277 = vpack.c.b16 %v2245, %v2243
    %v2278 = vpack.c.b16 %v2246, %v2244
    %v2279 = vpack.c.b16 %v2249, %v2247
    %v2280 = vpack.c.b16 %v2250, %v2248
    %v2281 = vpack.c.b16 %v2253, %v2251
    %v2282 = vpack.c.b16 %v2254, %v2252
    %v2283 = vpack.c.b16 %v2257, %v2255
    %v2284 = vpack.c.b16 %v2258, %v2256
    %v2285 = vpack.c.b16 %v2259, %v2259
    %v2286 = vpack.c.b16 %v2260, %v2260
    %vm2311 = vcmask 588800
    %v2313 = vsel %vm2311, %v2148, 0
    %vm2315 = vcmask 1043456
    %v2317 = vsel %vm2315, %v2285, 0
    %v2320 = vsel %vm2315, %v2286, 0
    %2322 = vmatprep.subr.bf16.mxu0 %v2262
    %2323 = vmatpush1.bf16.msra.mxu0 %v2261
    %2324 = vmatprep.subr.bf16.mxu0 %v2264
    %2325 = vmatpush1.bf16.msra.mxu0 %v2263
    %2326 = vmatprep.subr.bf16.mxu0 %v2266
    %2327 = vmatpush1.bf16.msra.mxu0 %v2265
    %2328 = vmatprep.subr.bf16.mxu0 %v2268
    %2329 = vmatpush1.bf16.msra.mxu0 %v2267
    %2330 = vmatprep.subr.bf16.mxu0 %v2270
    %2331 = vmatpush1.bf16.msra.mxu0 %v2269
    %2332 = vmatprep.subr.bf16.mxu0 %v2272
    %2333 = vmatpush1.bf16.msra.mxu0 %v2271
    %2334 = vmatprep.subr.bf16.mxu0 %v2274
    %2335 = vmatpush1.bf16.msra.mxu0 %v2273
    %2336 = vmatprep.subr.bf16.mxu0 %v2276
    %2337 = vmatpush1.bf16.msra.mxu0 %v2275
    %2338 = vmatprep.subr.bf16.mxu0 %v2278
    %2339 = vmatpush1.bf16.msra.mxu0 %v2277
    %2340 = vmatprep.subr.bf16.mxu0 %v2280
    %2341 = vmatpush1.bf16.msra.mxu0 %v2279
    %2342 = vmatprep.subr.bf16.mxu0 %v2282
    %2343 = vmatpush1.bf16.msra.mxu0 %v2281
    %2344 = vmatprep.subr.bf16.mxu0 %v2284
    %2345 = vmatpush1.bf16.msra.mxu0 %v2283
    %2346 = vmatprep.subr.bf16.mxu0 %v2320
    %2347 = vmatpush1.bf16.msra.mxu0 %v2317
    %2348 = vmatprep.subr.bf16.mxu0 0
    %2349 = vmatpush1.bf16.msra.mxu0 0
    %2350 = vmatprep.subr.bf16.mxu0 0
    %2351 = vmatpush1.bf16.msra.mxu0 0
    %2352 = vmatprep.subr.bf16.mxu0 0
    %2353 = vmatpush1.bf16.msra.mxu0 0
    %2354 = vmatprep.mubr.bf16.mxu0 %v2313
    %2355 = vmatmul.mubr.bf16.gmra.mrb[0].mxu0 %v2147
    %v2356 = vpop.f32.mrb[0].mxu0
    %v2357 = vadd.f32 %v2179, %v2356
    %v2358 = vpop.f32.mrb[0].mxu0
    %v2359 = vadd.f32 %v2183, %v2358
    %v2360 = vpop.f32.mrb[0].mxu0
    %v2361 = vpop.f32.mrb[0].mxu0
    %2362 = vdwg.mxu0
    %v2363 = vmul.f32 %v2359, 0.5
    %v2364 = vmul.f32 %v2363, 1.442695
    %v2365 = vpow.pop %v2364
    %v2366 = vmul.f32 %v76, %v2365
    %v2367 = vadd.f32 %v2357, %v2366
    %v2368 = vpack.c.bf16 %v2367, %v2367
    %v2369 = vld [vmem:[%s10] sm:$0xff]
    %v2370 = vld [vmem:[%s10 + $0x8] sm:$0xff]
    %v2371 = vld [vmem:[%s10 + $0x10] sm:$0x33]
    %v2372 = vld [vmem:[%s11] sm:$0xff]
    %v2373 = vld [vmem:[%s11 + $0x8] sm:$0x11]
    %v2376 = vunpack.c.l.b16 %v2372
    %v2377 = vunpack.c.h.b16 %v2372
    %v2378 = vunpack.c.l.b16 %v2373
    %v2379 = vunpack.c.h.b16 %v2373
    %v2380 = vpack.c.b16 %v2378, %v2376
    %v2381 = vpack.c.b16 %v2379, %v2377
    %v2383 = vsel %vm307, %v2380, 0
    %v2386 = vsel %vm307, %v2381, 0
    %2388 = vmatprep.subr.bf16.mxu0 %v2386
    %2389 = vmatpush1.bf16.msra.mxu0 %v2383
    %2390 = vmatprep.subr.bf16.mxu0 0
    %2391 = vmatpush1.bf16.msra.mxu0 0
    %2392 = vmatprep.subr.bf16.mxu0 0
    %2393 = vmatpush1.bf16.msra.mxu0 0
    %2394 = vmatprep.subr.bf16.mxu0 0
    %2395 = vmatpush1.bf16.msra.mxu0 0
    %2396 = vmatprep.subr.bf16.mxu0 0
    %2397 = vmatpush1.bf16.msra.mxu0 0
    %2398 = vmatprep.subr.bf16.mxu0 0
    %2399 = vmatpush1.bf16.msra.mxu0 0
    %2400 = vmatprep.subr.bf16.mxu0 0
    %2401 = vmatpush1.bf16.msra.mxu0 0
    %2402 = vmatprep.subr.bf16.mxu0 0
    %2403 = vmatpush1.bf16.msra.mxu0 0
    %2404 = vmatprep.subr.bf16.mxu0 0
    %2405 = vmatpush1.bf16.msra.mxu0 0
    %2406 = vmatprep.subr.bf16.mxu0 0
    %2407 = vmatpush1.bf16.msra.mxu0 0
    %2408 = vmatprep.subr.bf16.mxu0 0
    %2409 = vmatpush1.bf16.msra.mxu0 0
    %2410 = vmatprep.subr.bf16.mxu0 0
    %2411 = vmatpush1.bf16.msra.mxu0 0
    %2412 = vmatprep.subr.bf16.mxu0 0
    %2413 = vmatpush1.bf16.msra.mxu0 0
    %2414 = vmatprep.subr.bf16.mxu0 0
    %2415 = vmatpush1.bf16.msra.mxu0 0
    %2416 = vmatprep.subr.bf16.mxu0 0
    %2417 = vmatpush1.bf16.msra.mxu0 0
    %2418 = vmatprep.subr.bf16.mxu0 0
    %2419 = vmatpush1.bf16.msra.mxu0 0
    %2420 = vmatprep.mubr.bf16.mxu0 0
    %2421 = vmatmul.mubr.bf16.gmra.mrb[0].mxu0 %v305
    %v2422 = vpop.f32.mrb[0].mxu0
    %v2423 = vadd.f32 0.0, %v2422
    %v2424 = vpop.f32.mrb[0].mxu0
    %v2425 = vadd.f32 0.0, %v2424
    %v2426 = vpop.f32.mrb[0].mxu0
    %v2427 = vpop.f32.mrb[0].mxu0
    %2428 = vdwg.mxu0
    %v2432 = vunpack.c.l.b16 %v2369
    %v2433 = vunpack.c.h.b16 %v2369
    %v2434 = vunpack.c.l.b16 %v2370
    %v2435 = vunpack.c.h.b16 %v2370
    %v2436 = vunpack.c.l.b16 %v2371
    %v2437 = vunpack.c.h.b16 %v2371
    %v2438 = vpack.c.b16 %v2434, %v2432
    %v2439 = vpack.c.b16 %v2435, %v2433
    %v2440 = vpack.c.b16 %v2436, %v2436
    %v2441 = vpack.c.b16 %v2437, %v2437
    %vm2444 = vcmask 162816
    %v2446 = vsel %vm2444, %v2368, 0
    %vm2448 = vcmask 1041408
    %v2450 = vsel %vm2448, %v2440, 0
    %v2453 = vsel %vm2448, %v2441, 0
    %2455 = vmatprep.subr.bf16.mxu0 %v2439
    %2456 = vmatpush1.bf16.msra.mxu0 %v2438
    %2457 = vmatprep.subr.bf16.mxu0 %v2453
    %2458 = vmatpush1.bf16.msra.mxu0 %v2450
    %2459 = vmatprep.subr.bf16.mxu0 0
    %2460 = vmatpush1.bf16.msra.mxu0 0
    %2461 = vmatprep.subr.bf16.mxu0 0
    %2462 = vmatpush1.bf16.msra.mxu0 0
    %2463 = vmatprep.subr.bf16.mxu0 0
    %2464 = vmatpush1.bf16.msra.mxu0 0
    %2465 = vmatprep.subr.bf16.mxu0 0
    %2466 = vmatpush1.bf16.msra.mxu0 0
    %2467 = vmatprep.subr.bf16.mxu0 0
    %2468 = vmatpush1.bf16.msra.mxu0 0
    %2469 = vmatprep.subr.bf16.mxu0 0
    %2470 = vmatpush1.bf16.msra.mxu0 0
    %2471 = vmatprep.subr.bf16.mxu0 0
    %2472 = vmatpush1.bf16.msra.mxu0 0
    %2473 = vmatprep.subr.bf16.mxu0 0
    %2474 = vmatpush1.bf16.msra.mxu0 0
    %2475 = vmatprep.subr.bf16.mxu0 0
    %2476 = vmatpush1.bf16.msra.mxu0 0
    %2477 = vmatprep.subr.bf16.mxu0 0
    %2478 = vmatpush1.bf16.msra.mxu0 0
    %2479 = vmatprep.subr.bf16.mxu0 0
    %2480 = vmatpush1.bf16.msra.mxu0 0
    %2481 = vmatprep.subr.bf16.mxu0 0
    %2482 = vmatpush1.bf16.msra.mxu0 0
    %2483 = vmatprep.subr.bf16.mxu0 0
    %2484 = vmatpush1.bf16.msra.mxu0 0
    %2485 = vmatprep.subr.bf16.mxu0 0
    %2486 = vmatpush1.bf16.msra.mxu0 0
    %2487 = vmatprep.mubr.bf16.mxu0 0
    %2488 = vmatmul.mubr.bf16.gmra.mrb[0].mxu0 %v2446
    %v2489 = vpop.f32.mrb[0].mxu0
    %v2490 = vadd.f32 %v2423, %v2489
    %v2491 = vpop.f32.mrb[0].mxu0
    %v2492 = vadd.f32 %v2425, %v2491
    %v2493 = vpop.f32.mrb[0].mxu0
    %v2494 = vpop.f32.mrb[0].mxu0
    %2495 = vdwg.mxu0
    %v2496 = vld [vmem:[%s12] sm:$0x3]
    %v2498 = vlaneseq
    %v2499 = vshrl.u32 %v2498, 7
    %v2500 = vsub.s32 0, %v2499
    %v2501 = vrot.slane %v2496, %v2500
    %v2502 = vlaneseq
    %v2503 = vshrl.u32 %v2502, 7
    %v2504 = vsub.s32 1, %v2503
    %v2505 = vrot.slane %v2496, %v2504
    %v2508 = vadd.f32 %v2490, %v2501
    %v2509 = vadd.f32 %v2492, %v2505
    %v2510 = vmax.f32 %v2508, 0.0
    %v2511 = vmax.f32 %v2509, 0.0
    %v2512 = vpack.c.bf16 %v2510, %v2510
    %v2513 = vpack.c.bf16 %v2511, %v2511
    %v2514 = vld [vmem:[%s13] sm:$0xff]
    %v2515 = vld [vmem:[%s13 + $0x8] sm:$0xff]
    %v2516 = vld [vmem:[%s13 + $0x10] sm:$0xff]
    %v2517 = vld [vmem:[%s13 + $0x18] sm:$0xff]
    %v2518 = vld [vmem:[%s13 + $0x20] sm:$0xff]
    %v2519 = vld [vmem:[%s13 + $0x28] sm:$0xff]
    %v2520 = vld [vmem:[%s13 + $0x30] sm:$0xff]
    %v2521 = vld [vmem:[%s13 + $0x38] sm:$0xff]
    %v2522 = vld [vmem:[%s13 + $0x40] sm:$0xff]
    %v2523 = vld [vmem:[%s13 + $0x48] sm:$0xff]
    %v2524 = vld [vmem:[%s13 + $0x50] sm:$0xff]
    %v2525 = vld [vmem:[%s13 + $0x58] sm:$0xff]
    %v2526 = vld [vmem:[%s13 + $0x60] sm:$0xff]
    %v2527 = vld [vmem:[%s13 + $0x68] sm:$0xff]
    %v2528 = vld [vmem:[%s13 + $0x70] sm:$0xff]
    %v2529 = vld [vmem:[%s13 + $0x78] sm:$0xff]
    %v2530 = vld [vmem:[%s13 + $0x80] sm:$0xff]
    %v2531 = vld [vmem:[%s13 + $0x88] sm:$0xff]
    %v2532 = vld [vmem:[%s13 + $0x90] sm:$0xff]
    %v2533 = vld [vmem:[%s13 + $0x98] sm:$0xff]
    %v2534 = vld [vmem:[%s13 + $0xa0] sm:$0xff]
    %v2535 = vld [vmem:[%s13 + $0xa8] sm:$0xff]
    %v2536 = vld [vmem:[%s13 + $0xb0] sm:$0xff]
    %v2537 = vld [vmem:[%s13 + $0xb8] sm:$0xff]
    %v2538 = vld [vmem:[%s13 + $0xc0] sm:$0xff]
    %v2539 = vld [vmem:[%s13 + $0xc8] sm:$0xff]
    %v2540 = vld [vmem:[%s13 + $0xd0] sm:$0xff]
    %v2541 = vld [vmem:[%s13 + $0xd8] sm:$0xff]
    %v2542 = vld [vmem:[%s13 + $0xe0] sm:$0xff]
    %v2543 = vld [vmem:[%s13 + $0xe8] sm:$0xff]
    %v2544 = vld [vmem:[%s13 + $0xf0] sm:$0xff]
    %v2545 = vld [vmem:[%s13 + $0xf8] sm:$0xff]
    %v2546 = vld [vmem:[%s13 + $0x100] sm:$0xff]
    %v2547 = vld [vmem:[%s13 + $0x108] sm:$0xff]
    %v2548 = vld [vmem:[%s13 + $0x110] sm:$0xff]
    %v2549 = vld [vmem:[%s13 + $0x118] sm:$0xff]
    %v2550 = vld [vmem:[%s13 + $0x120] sm:$0xff]
    %v2551 = vld [vmem:[%s13 + $0x128] sm:$0xff]
    %v2552 = vld [vmem:[%s13 + $0x130] sm:$0xff]
    %v2553 = vld [vmem:[%s13 + $0x138] sm:$0xff]
    %v2554 = vld [vmem:[%s13 + $0x140] sm:$0xff]
    %v2555 = vld [vmem:[%s13 + $0x148] sm:$0xff]
    %v2556 = vld [vmem:[%s13 + $0x150] sm:$0xff]
    %v2557 = vld [vmem:[%s13 + $0x158] sm:$0xff]
    %v2558 = vld [vmem:[%s13 + $0x160] sm:$0xff]
    %v2559 = vld [vmem:[%s13 + $0x168] sm:$0xff]
    %v2560 = vld [vmem:[%s13 + $0x170] sm:$0xff]
    %v2561 = vld [vmem:[%s13 + $0x178] sm:$0xff]
    %v2562 = vld [vmem:[%s13 + $0x180] sm:$0xff]
    %v2563 = vld [vmem:[%s13 + $0x188] sm:$0xff]
    %v2564 = vld [vmem:[%s14] sm:$0xf]
    %v2566 = vlaneseq
    %v2567 = vshrl.u32 %v2566, 7
    %v2568 = vsub.s32 0, %v2567
    %v2569 = vrot.slane %v2564, %v2568
    %v2570 = vlaneseq
    %v2571 = vshrl.u32 %v2570, 7
    %v2572 = vsub.s32 1, %v2571
    %v2573 = vrot.slane %v2564, %v2572
    %v2574 = vlaneseq
    %v2575 = vshrl.u32 %v2574, 7
    %v2576 = vsub.s32 2, %v2575
    %v2577 = vrot.slane %v2564, %v2576
    %v2578 = vlaneseq
    %v2579 = vshrl.u32 %v2578, 7
    %v2580 = vsub.s32 3, %v2579
    %v2581 = vrot.slane %v2564, %v2580
    %v2636 = vunpack.c.l.b16 %v2514
    %v2637 = vunpack.c.h.b16 %v2514
    %v2638 = vunpack.c.l.b16 %v2515
    %v2639 = vunpack.c.h.b16 %v2515
    %v2640 = vunpack.c.l.b16 %v2516
    %v2641 = vunpack.c.h.b16 %v2516
    %v2642 = vunpack.c.l.b16 %v2517
    %v2643 = vunpack.c.h.b16 %v2517
    %v2644 = vunpack.c.l.b16 %v2518
    %v2645 = vunpack.c.h.b16 %v2518
    %v2646 = vunpack.c.l.b16 %v2519
    %v2647 = vunpack.c.h.b16 %v2519
    %v2648 = vunpack.c.l.b16 %v2520
    %v2649 = vunpack.c.h.b16 %v2520
    %v2650 = vunpack.c.l.b16 %v2521
    %v2651 = vunpack.c.h.b16 %v2521
    %v2652 = vunpack.c.l.b16 %v2522
    %v2653 = vunpack.c.h.b16 %v2522
    %v2654 = vunpack.c.l.b16 %v2523
    %v2655 = vunpack.c.h.b16 %v2523
    %v2656 = vunpack.c.l.b16 %v2524
    %v2657 = vunpack.c.h.b16 %v2524
    %v2658 = vunpack.c.l.b16 %v2525
    %v2659 = vunpack.c.h.b16 %v2525
    %v2660 = vunpack.c.l.b16 %v2526
    %v2661 = vunpack.c.h.b16 %v2526
    %v2662 = vunpack.c.l.b16 %v2527
    %v2663 = vunpack.c.h.b16 %v2527
    %v2664 = vunpack.c.l.b16 %v2528
    %v2665 = vunpack.c.h.b16 %v2528
    %v2666 = vunpack.c.l.b16 %v2529
    %v2667 = vunpack.c.h.b16 %v2529
    %v2668 = vunpack.c.l.b16 %v2530
    %v2669 = vunpack.c.h.b16 %v2530
    %v2670 = vunpack.c.l.b16 %v2531
    %v2671 = vunpack.c.h.b16 %v2531
    %v2672 = vunpack.c.l.b16 %v2532
    %v2673 = vunpack.c.h.b16 %v2532
    %v2674 = vunpack.c.l.b16 %v2533
    %v2675 = vunpack.c.h.b16 %v2533
    %v2676 = vunpack.c.l.b16 %v2534
    %v2677 = vunpack.c.h.b16 %v2534
    %v2678 = vunpack.c.l.b16 %v2535
    %v2679 = vunpack.c.h.b16 %v2535
    %v2680 = vunpack.c.l.b16 %v2536
    %v2681 = vunpack.c.h.b16 %v2536
    %v2682 = vunpack.c.l.b16 %v2537
    %v2683 = vunpack.c.h.b16 %v2537
    %v2684 = vunpack.c.l.b16 %v2538
    %v2685 = vunpack.c.h.b16 %v2538
    %v2686 = vunpack.c.l.b16 %v2539
    %v2687 = vunpack.c.h.b16 %v2539
    %v2688 = vunpack.c.l.b16 %v2540
    %v2689 = vunpack.c.h.b16 %v2540
    %v2690 = vunpack.c.l.b16 %v2541
    %v2691 = vunpack.c.h.b16 %v2541
    %v2692 = vunpack.c.l.b16 %v2542
    %v2693 = vunpack.c.h.b16 %v2542
    %v2694 = vunpack.c.l.b16 %v2543
    %v2695 = vunpack.c.h.b16 %v2543
    %v2696 = vunpack.c.l.b16 %v2544
    %v2697 = vunpack.c.h.b16 %v2544
    %v2698 = vunpack.c.l.b16 %v2545
    %v2699 = vunpack.c.h.b16 %v2545
    %v2700 = vunpack.c.l.b16 %v2546
    %v2701 = vunpack.c.h.b16 %v2546
    %v2702 = vunpack.c.l.b16 %v2547
    %v2703 = vunpack.c.h.b16 %v2547
    %v2704 = vunpack.c.l.b16 %v2548
    %v2705 = vunpack.c.h.b16 %v2548
    %v2706 = vunpack.c.l.b16 %v2549
    %v2707 = vunpack.c.h.b16 %v2549
    %v2708 = vunpack.c.l.b16 %v2550
    %v2709 = vunpack.c.h.b16 %v2550
    %v2710 = vunpack.c.l.b16 %v2551
    %v2711 = vunpack.c.h.b16 %v2551
    %v2712 = vunpack.c.l.b16 %v2552
    %v2713 = vunpack.c.h.b16 %v2552
    %v2714 = vunpack.c.l.b16 %v2553
    %v2715 = vunpack.c.h.b16 %v2553
    %v2716 = vunpack.c.l.b16 %v2554
    %v2717 = vunpack.c.h.b16 %v2554
    %v2718 = vunpack.c.l.b16 %v2555
    %v2719 = vunpack.c.h.b16 %v2555
    %v2720 = vunpack.c.l.b16 %v2556
    %v2721 = vunpack.c.h.b16 %v2556
    %v2722 = vunpack.c.l.b16 %v2557
    %v2723 = vunpack.c.h.b16 %v2557
    %v2724 = vunpack.c.l.b16 %v2558
    %v2725 = vunpack.c.h.b16 %v2558
    %v2726 = vunpack.c.l.b16 %v2559
    %v2727 = vunpack.c.h.b16 %v2559
    %v2728 = vunpack.c.l.b16 %v2560
    %v2729 = vunpack.c.h.b16 %v2560
    %v2730 = vunpack.c.l.b16 %v2561
    %v2731 = vunpack.c.h.b16 %v2561
    %v2732 = vunpack.c.l.b16 %v2562
    %v2733 = vunpack.c.h.b16 %v2562
    %v2734 = vunpack.c.l.b16 %v2563
    %v2735 = vunpack.c.h.b16 %v2563
    %v2736 = vpack.c.b16 %v2640, %v2636
    %v2737 = vpack.c.b16 %v2641, %v2637
    %v2738 = vpack.c.b16 %v2642, %v2638
    %v2739 = vpack.c.b16 %v2643, %v2639
    %v2740 = vpack.c.b16 %v2648, %v2644
    %v2741 = vpack.c.b16 %v2649, %v2645
    %v2742 = vpack.c.b16 %v2650, %v2646
    %v2743 = vpack.c.b16 %v2651, %v2647
    %v2744 = vpack.c.b16 %v2656, %v2652
    %v2745 = vpack.c.b16 %v2657, %v2653
    %v2746 = vpack.c.b16 %v2658, %v2654
    %v2747 = vpack.c.b16 %v2659, %v2655
    %v2748 = vpack.c.b16 %v2664, %v2660
    %v2749 = vpack.c.b16 %v2665, %v2661
    %v2750 = vpack.c.b16 %v2666, %v2662
    %v2751 = vpack.c.b16 %v2667, %v2663
    %v2752 = vpack.c.b16 %v2672, %v2668
    %v2753 = vpack.c.b16 %v2673, %v2669
    %v2754 = vpack.c.b16 %v2674, %v2670
    %v2755 = vpack.c.b16 %v2675, %v2671
    %v2756 = vpack.c.b16 %v2680, %v2676
    %v2757 = vpack.c.b16 %v2681, %v2677
    %v2758 = vpack.c.b16 %v2682, %v2678
    %v2759 = vpack.c.b16 %v2683, %v2679
    %v2760 = vpack.c.b16 %v2688, %v2684
    %v2761 = vpack.c.b16 %v2689, %v2685
    %v2762 = vpack.c.b16 %v2690, %v2686
    %v2763 = vpack.c.b16 %v2691, %v2687
    %v2764 = vpack.c.b16 %v2696, %v2692
    %v2765 = vpack.c.b16 %v2697, %v2693
    %v2766 = vpack.c.b16 %v2698, %v2694
    %v2767 = vpack.c.b16 %v2699, %v2695
    %v2768 = vpack.c.b16 %v2704, %v2700
    %v2769 = vpack.c.b16 %v2705, %v2701
    %v2770 = vpack.c.b16 %v2706, %v2702
    %v2771 = vpack.c.b16 %v2707, %v2703
    %v2772 = vpack.c.b16 %v2712, %v2708
    %v2773 = vpack.c.b16 %v2713, %v2709
    %v2774 = vpack.c.b16 %v2714, %v2710
    %v2775 = vpack.c.b16 %v2715, %v2711
    %v2776 = vpack.c.b16 %v2720, %v2716
    %v2777 = vpack.c.b16 %v2721, %v2717
    %v2778 = vpack.c.b16 %v2722, %v2718
    %v2779 = vpack.c.b16 %v2723, %v2719
    %v2780 = vpack.c.b16 %v2728, %v2724
    %v2781 = vpack.c.b16 %v2729, %v2725
    %v2782 = vpack.c.b16 %v2730, %v2726
    %v2783 = vpack.c.b16 %v2731, %v2727
    %v2784 = vpack.c.b16 %v2732, %v2732
    %v2785 = vpack.c.b16 %v2733, %v2733
    %v2786 = vpack.c.b16 %v2734, %v2734
    %v2787 = vpack.c.b16 %v2735, %v2735
    %v2837 = vsel %vm2311, %v2513, 0
    %v2840 = vsel %vm2315, %v2784, 0
    %v2843 = vsel %vm2315, %v2785, 0
    %v2846 = vsel %vm2315, %v2786, 0
    %v2849 = vsel %vm2315, %v2787, 0
    %2851 = vmatprep.subr.bf16.mxu0 %v2737
    %2852 = vmatpush1.bf16.msra.mxu0 %v2736
    %2853 = vmatprep.subr.bf16.mxu0 %v2741
    %2854 = vmatpush1.bf16.msra.mxu0 %v2740
    %2855 = vmatprep.subr.bf16.mxu0 %v2745
    %2856 = vmatpush1.bf16.msra.mxu0 %v2744
    %2857 = vmatprep.subr.bf16.mxu0 %v2749
    %2858 = vmatpush1.bf16.msra.mxu0 %v2748
    %2859 = vmatprep.subr.bf16.mxu0 %v2753
    %2860 = vmatpush1.bf16.msra.mxu0 %v2752
    %2861 = vmatprep.subr.bf16.mxu0 %v2757
    %2862 = vmatpush1.bf16.msra.mxu0 %v2756
    %2863 = vmatprep.subr.bf16.mxu0 %v2761
    %2864 = vmatpush1.bf16.msra.mxu0 %v2760
    %2865 = vmatprep.subr.bf16.mxu0 %v2765
    %2866 = vmatpush1.bf16.msra.mxu0 %v2764
    %2867 = vmatprep.subr.bf16.mxu0 %v2769
    %2868 = vmatpush1.bf16.msra.mxu0 %v2768
    %2869 = vmatprep.subr.bf16.mxu0 %v2773
    %2870 = vmatpush1.bf16.msra.mxu0 %v2772
    %2871 = vmatprep.subr.bf16.mxu0 %v2777
    %2872 = vmatpush1.bf16.msra.mxu0 %v2776
    %2873 = vmatprep.subr.bf16.mxu0 %v2781
    %2874 = vmatpush1.bf16.msra.mxu0 %v2780
    %2875 = vmatprep.subr.bf16.mxu0 %v2843
    %2876 = vmatpush1.bf16.msra.mxu0 %v2840
    %2877 = vmatprep.subr.bf16.mxu0 0
    %2878 = vmatpush1.bf16.msra.mxu0 0
    %2879 = vmatprep.subr.bf16.mxu0 0
    %2880 = vmatpush1.bf16.msra.mxu0 0
    %2881 = vmatprep.subr.bf16.mxu0 0
    %2882 = vmatpush1.bf16.msra.mxu0 0
    %2883 = vmatprep.mubr.bf16.mxu0 %v2837
    %2884 = vmatmul.mubr.bf16.gmra.mrb[0].mxu0 %v2512
    %v2885 = vpop.f32.mrb[0].mxu0
    %v2886 = vadd.f32 %v2569, %v2885
    %v2887 = vpop.f32.mrb[0].mxu0
    %v2888 = vadd.f32 %v2573, %v2887
    %v2889 = vpop.f32.mrb[0].mxu0
    %v2890 = vpop.f32.mrb[0].mxu0
    %2891 = vdwg.mxu0
    %2892 = vmatprep.subr.bf16.mxu0 %v2739
    %2893 = vmatpush1.bf16.msra.mxu0 %v2738
    %2894 = vmatprep.subr.bf16.mxu0 %v2743
    %2895 = vmatpush1.bf16.msra.mxu0 %v2742
    %2896 = vmatprep.subr.bf16.mxu0 %v2747
    %2897 = vmatpush1.bf16.msra.mxu0 %v2746
    %2898 = vmatprep.subr.bf16.mxu0 %v2751
    %2899 = vmatpush1.bf16.msra.mxu0 %v2750
    %2900 = vmatprep.subr.bf16.mxu0 %v2755
    %2901 = vmatpush1.bf16.msra.mxu0 %v2754
    %2902 = vmatprep.subr.bf16.mxu0 %v2759
    %2903 = vmatpush1.bf16.msra.mxu0 %v2758
    %2904 = vmatprep.subr.bf16.mxu0 %v2763
    %2905 = vmatpush1.bf16.msra.mxu0 %v2762
    %2906 = vmatprep.subr.bf16.mxu0 %v2767
    %2907 = vmatpush1.bf16.msra.mxu0 %v2766
    %2908 = vmatprep.subr.bf16.mxu0 %v2771
    %2909 = vmatpush1.bf16.msra.mxu0 %v2770
    %2910 = vmatprep.subr.bf16.mxu0 %v2775
    %2911 = vmatpush1.bf16.msra.mxu0 %v2774
    %2912 = vmatprep.subr.bf16.mxu0 %v2779
    %2913 = vmatpush1.bf16.msra.mxu0 %v2778
    %2914 = vmatprep.subr.bf16.mxu0 %v2783
    %2915 = vmatpush1.bf16.msra.mxu0 %v2782
    %2916 = vmatprep.subr.bf16.mxu0 %v2849
    %2917 = vmatpush1.bf16.msra.mxu0 %v2846
    %2918 = vmatprep.subr.bf16.mxu0 0
    %2919 = vmatpush1.bf16.msra.mxu0 0
    %2920 = vmatprep.subr.bf16.mxu0 0
    %2921 = vmatpush1.bf16.msra.mxu0 0
    %2922 = vmatprep.subr.bf16.mxu0 0
    %2923 = vmatpush1.bf16.msra.mxu0 0
    %2924 = vmatprep.mubr.bf16.mxu0 %v2837
    %2925 = vmatmul.mubr.bf16.gmra.mrb[0].mxu0 %v2512
    %v2926 = vpop.f32.mrb[0].mxu0
    %v2927 = vadd.f32 %v2577, %v2926
    %v2928 = vpop.f32.mrb[0].mxu0
    %v2929 = vadd.f32 %v2581, %v2928
    %v2930 = vpop.f32.mrb[0].mxu0
    %v2931 = vpop.f32.mrb[0].mxu0
    %2932 = vdwg.mxu0
    %v2933 = vmax.f32 %v2886, 0.0
    %v2934 = vmax.f32 %v2888, 0.0
    %v2935 = vmax.f32 %v2927, 0.0
    %v2936 = vmax.f32 %v2929, 0.0
    %v2937 = vpack.c.bf16 %v2933, %v2933
    %v2938 = vpack.c.bf16 %v2934, %v2934
    %v2939 = vpack.c.bf16 %v2935, %v2935
    %v2940 = vpack.c.bf16 %v2936, %v2936
    %v2941 = vld [vmem:[%s15] sm:$0xff]
    %v2942 = vld [vmem:[%s15 + $0x8] sm:$0xff]
    %v2943 = vld [vmem:[%s15 + $0x10] sm:$0xff]
    %v2944 = vld [vmem:[%s15 + $0x18] sm:$0xf]
    %v2945 = vld [vmem:[%s15 + $0x1c] sm:$0xff]
    %v2946 = vld [vmem:[%s15 + $0x24] sm:$0xff]
    %v2947 = vld [vmem:[%s15 + $0x2c] sm:$0xff]
    %v2948 = vld [vmem:[%s15 + $0x34] sm:$0xf]
    %v2949 = vld [vmem:[%s15 + $0x38] sm:$0xff]
    %v2950 = vld [vmem:[%s15 + $0x40] sm:$0xff]
    %v2951 = vld [vmem:[%s15 + $0x48] sm:$0xff]
    %v2952 = vld [vmem:[%s15 + $0x50] sm:$0xf]
    %v2953 = vld [vmem:[%s15 + $0x54] sm:$0xff]
    %v2954 = vld [vmem:[%s15 + $0x5c] sm:$0xff]
    %v2955 = vld [vmem:[%s15 + $0x64] sm:$0xff]
    %v2956 = vld [vmem:[%s15 + $0x6c] sm:$0xf]
    %v2957 = vld [vmem:[%s15 + $0x70] sm:$0xff]
    %v2958 = vld [vmem:[%s15 + $0x78] sm:$0xff]
    %v2959 = vld [vmem:[%s15 + $0x80] sm:$0xff]
    %v2960 = vld [vmem:[%s15 + $0x88] sm:$0xf]
    %v2961 = vld [vmem:[%s15 + $0x8c] sm:$0xff]
    %v2962 = vld [vmem:[%s15 + $0x94] sm:$0xff]
    %v2963 = vld [vmem:[%s15 + $0x9c] sm:$0xff]
    %v2964 = vld [vmem:[%s15 + $0xa4] sm:$0xf]
    %v2965 = vld [vmem:[%s15 + $0xa8] sm:$0xff]
    %v2966 = vld [vmem:[%s15 + $0xb0] sm:$0xff]
    %v2967 = vld [vmem:[%s15 + $0xb8] sm:$0xff]
    %v2968 = vld [vmem:[%s15 + $0xc0] sm:$0xf]
    %v2969 = vld [vmem:[%s15 + $0xc4] sm:$0xff]
    %v2970 = vld [vmem:[%s15 + $0xcc] sm:$0xff]
    %v2971 = vld [vmem:[%s15 + $0xd4] sm:$0xff]
    %v2972 = vld [vmem:[%s15 + $0xdc] sm:$0xf]
    %v2973 = vld [vmem:[%s15 + $0xe0] sm:$0xff]
    %v2974 = vld [vmem:[%s15 + $0xe8] sm:$0xff]
    %v2975 = vld [vmem:[%s15 + $0xf0] sm:$0xff]
    %v2976 = vld [vmem:[%s15 + $0xf8] sm:$0xf]
    %v2977 = vld [vmem:[%s15 + $0xfc] sm:$0xff]
    %v2978 = vld [vmem:[%s15 + $0x104] sm:$0xff]
    %v2979 = vld [vmem:[%s15 + $0x10c] sm:$0xff]
    %v2980 = vld [vmem:[%s15 + $0x114] sm:$0xf]
    %v2981 = vld [vmem:[%s15 + $0x118] sm:$0xff]
    %v2982 = vld [vmem:[%s15 + $0x120] sm:$0xff]
    %v2983 = vld [vmem:[%s15 + $0x128] sm:$0xff]
    %v2984 = vld [vmem:[%s15 + $0x130] sm:$0xf]
    %v2985 = vld [vmem:[%s15 + $0x134] sm:$0xff]
    %v2986 = vld [vmem:[%s15 + $0x13c] sm:$0xff]
    %v2987 = vld [vmem:[%s15 + $0x144] sm:$0xff]
    %v2988 = vld [vmem:[%s15 + $0x14c] sm:$0xf]
    %v2989 = vld [vmem:[%s15 + $0x150] sm:$0xff]
    %v2990 = vld [vmem:[%s15 + $0x158] sm:$0xff]
    %v2991 = vld [vmem:[%s15 + $0x160] sm:$0xff]
    %v2992 = vld [vmem:[%s15 + $0x168] sm:$0xf]
    %v2993 = vld [vmem:[%s15 + $0x16c] sm:$0xff]
    %v2994 = vld [vmem:[%s15 + $0x174] sm:$0xff]
    %v2995 = vld [vmem:[%s15 + $0x17c] sm:$0xff]
    %v2996 = vld [vmem:[%s15 + $0x184] sm:$0xf]
    %v2997 = vld [vmem:[%s15 + $0x188] sm:$0xff]
    %v2998 = vld [vmem:[%s15 + $0x190] sm:$0xff]
    %v2999 = vld [vmem:[%s15 + $0x198] sm:$0xff]
    %v3000 = vld [vmem:[%s15 + $0x1a0] sm:$0xf]
    %v3001 = vld [vmem:[%s15 + $0x1a4] sm:$0xff]
    %v3002 = vld [vmem:[%s15 + $0x1ac] sm:$0xff]
    %v3003 = vld [vmem:[%s15 + $0x1b4] sm:$0xff]
    %v3004 = vld [vmem:[%s15 + $0x1bc] sm:$0xf]
    %v3005 = vld [vmem:[%s15 + $0x1c0] sm:$0xff]
    %v3006 = vld [vmem:[%s15 + $0x1c8] sm:$0xff]
    %v3007 = vld [vmem:[%s15 + $0x1d0] sm:$0xff]
    %v3008 = vld [vmem:[%s15 + $0x1d8] sm:$0xf]
    %v3009 = vld [vmem:[%s15 + $0x1dc] sm:$0xff]
    %v3010 = vld [vmem:[%s15 + $0x1e4] sm:$0xff]
    %v3011 = vld [vmem:[%s15 + $0x1ec] sm:$0xff]
    %v3012 = vld [vmem:[%s15 + $0x1f4] sm:$0xf]
    %v3013 = vld [vmem:[%s15 + $0x1f8] sm:$0xff]
    %v3014 = vld [vmem:[%s15 + $0x200] sm:$0xff]
    %v3015 = vld [vmem:[%s15 + $0x208] sm:$0xff]
    %v3016 = vld [vmem:[%s15 + $0x210] sm:$0xf]
    %v3017 = vld [vmem:[%s15 + $0x214] sm:$0xff]
    %v3018 = vld [vmem:[%s15 + $0x21c] sm:$0xff]
    %v3019 = vld [vmem:[%s15 + $0x224] sm:$0xff]
    %v3020 = vld [vmem:[%s15 + $0x22c] sm:$0xf]
    %v3021 = vld [vmem:[%s15 + $0x230] sm:$0xff]
    %v3022 = vld [vmem:[%s15 + $0x238] sm:$0xff]
    %v3023 = vld [vmem:[%s15 + $0x240] sm:$0xff]
    %v3024 = vld [vmem:[%s15 + $0x248] sm:$0xf]
    %v3025 = vld [vmem:[%s15 + $0x24c] sm:$0xff]
    %v3026 = vld [vmem:[%s15 + $0x254] sm:$0xff]
    %v3027 = vld [vmem:[%s15 + $0x25c] sm:$0xff]
    %v3028 = vld [vmem:[%s15 + $0x264] sm:$0xf]
    %v3029 = vld [vmem:[%s15 + $0x268] sm:$0xff]
    %v3030 = vld [vmem:[%s15 + $0x270] sm:$0xff]
    %v3031 = vld [vmem:[%s15 + $0x278] sm:$0xff]
    %v3032 = vld [vmem:[%s15 + $0x280] sm:$0xf]
    %v3033 = vld [vmem:[%s15 + $0x284] sm:$0xff]
    %v3034 = vld [vmem:[%s15 + $0x28c] sm:$0xff]
    %v3035 = vld [vmem:[%s15 + $0x294] sm:$0xff]
    %v3036 = vld [vmem:[%s15 + $0x29c] sm:$0xf]
    %v3037 = vld [vmem:[%s15 + $0x2a0] sm:$0xff]
    %v3038 = vld [vmem:[%s15 + $0x2a8] sm:$0xff]
    %v3039 = vld [vmem:[%s15 + $0x2b0] sm:$0xff]
    %v3040 = vld [vmem:[%s15 + $0x2b8] sm:$0xf]
    %v3041 = vld [vmem:[%s15 + $0x2bc] sm:$0xff]
    %v3042 = vld [vmem:[%s15 + $0x2c4] sm:$0xff]
    %v3043 = vld [vmem:[%s15 + $0x2cc] sm:$0xff]
    %v3044 = vld [vmem:[%s15 + $0x2d4] sm:$0xf]
    %v3045 = vld [vmem:[%s15 + $0x2d8] sm:$0xff]
    %v3046 = vld [vmem:[%s15 + $0x2e0] sm:$0xff]
    %v3047 = vld [vmem:[%s15 + $0x2e8] sm:$0xff]
    %v3048 = vld [vmem:[%s15 + $0x2f0] sm:$0xf]
    %v3049 = vld [vmem:[%s15 + $0x2f4] sm:$0xff]
    %v3050 = vld [vmem:[%s15 + $0x2fc] sm:$0xff]
    %v3051 = vld [vmem:[%s15 + $0x304] sm:$0xff]
    %v3052 = vld [vmem:[%s15 + $0x30c] sm:$0xf]
    %v3053 = vld [vmem:[%s15 + $0x310] sm:$0xff]
    %v3054 = vld [vmem:[%s15 + $0x318] sm:$0xff]
    %v3055 = vld [vmem:[%s15 + $0x320] sm:$0xff]
    %v3056 = vld [vmem:[%s15 + $0x328] sm:$0xf]
    %v3057 = vld [vmem:[%s15 + $0x32c] sm:$0xff]
    %v3058 = vld [vmem:[%s15 + $0x334] sm:$0xff]
    %v3059 = vld [vmem:[%s15 + $0x33c] sm:$0xff]
    %v3060 = vld [vmem:[%s15 + $0x344] sm:$0xf]
    %v3061 = vld [vmem:[%s15 + $0x348] sm:$0xff]
    %v3062 = vld [vmem:[%s15 + $0x350] sm:$0xff]
    %v3063 = vld [vmem:[%s15 + $0x358] sm:$0xff]
    %v3064 = vld [vmem:[%s15 + $0x360] sm:$0xf]
    %v3065 = vld [vmem:[%s15 + $0x364] sm:$0xff]
    %v3066 = vld [vmem:[%s15 + $0x36c] sm:$0xff]
    %v3067 = vld [vmem:[%s15 + $0x374] sm:$0xff]
    %v3068 = vld [vmem:[%s15 + $0x37c] sm:$0xf]
    %v3069 = vld [vmem:[%s15 + $0x380] sm:$0xff]
    %v3070 = vld [vmem:[%s15 + $0x388] sm:$0xff]
    %v3071 = vld [vmem:[%s15 + $0x390] sm:$0xff]
    %v3072 = vld [vmem:[%s15 + $0x398] sm:$0xf]
    %v3073 = vld [vmem:[%s15 + $0x39c] sm:$0xff]
    %v3074 = vld [vmem:[%s15 + $0x3a4] sm:$0xff]
    %v3075 = vld [vmem:[%s15 + $0x3ac] sm:$0xff]
    %v3076 = vld [vmem:[%s15 + $0x3b4] sm:$0xf]
    %v3077 = vld [vmem:[%s15 + $0x3b8] sm:$0xff]
    %v3078 = vld [vmem:[%s15 + $0x3c0] sm:$0xff]
    %v3079 = vld [vmem:[%s15 + $0x3c8] sm:$0xff]
    %v3080 = vld [vmem:[%s15 + $0x3d0] sm:$0xf]
    %v3081 = vld [vmem:[%s15 + $0x3d4] sm:$0xff]
    %v3082 = vld [vmem:[%s15 + $0x3dc] sm:$0xff]
    %v3083 = vld [vmem:[%s15 + $0x3e4] sm:$0xff]
    %v3084 = vld [vmem:[%s15 + $0x3ec] sm:$0xf]
    %v3085 = vld [vmem:[%s15 + $0x3f0] sm:$0xff]
    %v3086 = vld [vmem:[%s15 + $0x3f8] sm:$0xff]
    %v3087 = vld [vmem:[%s15 + $0x400] sm:$0xff]
    %v3088 = vld [vmem:[%s15 + $0x408] sm:$0xf]
    %v3089 = vld [vmem:[%s15 + $0x40c] sm:$0xff]
    %v3090 = vld [vmem:[%s15 + $0x414] sm:$0xff]
    %v3091 = vld [vmem:[%s15 + $0x41c] sm:$0xff]
    %v3092 = vld [vmem:[%s15 + $0x424] sm:$0xf]
    %v3093 = vld [vmem:[%s15 + $0x428] sm:$0xff]
    %v3094 = vld [vmem:[%s15 + $0x430] sm:$0xff]
    %v3095 = vld [vmem:[%s15 + $0x438] sm:$0xff]
    %v3096 = vld [vmem:[%s15 + $0x440] sm:$0xf]
    %v3097 = vld [vmem:[%s15 + $0x444] sm:$0xff]
    %v3098 = vld [vmem:[%s15 + $0x44c] sm:$0xff]
    %v3099 = vld [vmem:[%s15 + $0x454] sm:$0xff]
    %v3100 = vld [vmem:[%s15 + $0x45c] sm:$0xf]
    %v3101 = vld [vmem:[%s15 + $0x460] sm:$0xff]
    %v3102 = vld [vmem:[%s15 + $0x468] sm:$0xff]
    %v3103 = vld [vmem:[%s15 + $0x470] sm:$0xff]
    %v3104 = vld [vmem:[%s15 + $0x478] sm:$0xf]
    %v3105 = vld [vmem:[%s15 + $0x47c] sm:$0xff]
    %v3106 = vld [vmem:[%s15 + $0x484] sm:$0xff]
    %v3107 = vld [vmem:[%s15 + $0x48c] sm:$0xff]
    %v3108 = vld [vmem:[%s15 + $0x494] sm:$0xf]
    %v3109 = vld [vmem:[%s15 + $0x498] sm:$0xff]
    %v3110 = vld [vmem:[%s15 + $0x4a0] sm:$0xff]
    %v3111 = vld [vmem:[%s15 + $0x4a8] sm:$0xff]
    %v3112 = vld [vmem:[%s15 + $0x4b0] sm:$0xf]
    %v3113 = vld [vmem:[%s15 + $0x4b4] sm:$0xff]
    %v3114 = vld [vmem:[%s15 + $0x4bc] sm:$0xff]
    %v3115 = vld [vmem:[%s15 + $0x4c4] sm:$0xff]
    %v3116 = vld [vmem:[%s15 + $0x4cc] sm:$0xf]
    %v3117 = vld [vmem:[%s15 + $0x4d0] sm:$0xff]
    %v3118 = vld [vmem:[%s15 + $0x4d8] sm:$0xff]
    %v3119 = vld [vmem:[%s15 + $0x4e0] sm:$0xff]
    %v3120 = vld [vmem:[%s15 + $0x4e8] sm:$0xf]
    %v3121 = vld [vmem:[%s15 + $0x4ec] sm:$0xff]
    %v3122 = vld [vmem:[%s15 + $0x4f4] sm:$0xff]
    %v3123 = vld [vmem:[%s15 + $0x4fc] sm:$0xff]
    %v3124 = vld [vmem:[%s15 + $0x504] sm:$0xf]
    %v3125 = vld [vmem:[%s15 + $0x508] sm:$0xff]
    %v3126 = vld [vmem:[%s15 + $0x510] sm:$0xff]
    %v3127 = vld [vmem:[%s15 + $0x518] sm:$0xff]
    %v3128 = vld [vmem:[%s15 + $0x520] sm:$0xf]
    %v3129 = vld [vmem:[%s15 + $0x524] sm:$0xff]
    %v3130 = vld [vmem:[%s15 + $0x52c] sm:$0xff]
    %v3131 = vld [vmem:[%s15 + $0x534] sm:$0xff]
    %v3132 = vld [vmem:[%s15 + $0x53c] sm:$0xf]
    %v3133 = vld [vmem:[%s15 + $0x540] sm:$0xff]
    %v3134 = vld [vmem:[%s15 + $0x548] sm:$0xff]
    %v3135 = vld [vmem:[%s15 + $0x550] sm:$0xff]
    %v3136 = vld [vmem:[%s15 + $0x558] sm:$0xf]
    %v3137 = vld [vmem:[%s15 + $0x55c] sm:$0xff]
    %v3138 = vld [vmem:[%s15 + $0x564] sm:$0xff]
    %v3139 = vld [vmem:[%s15 + $0x56c] sm:$0xff]
    %v3140 = vld [vmem:[%s15 + $0x574] sm:$0xf]
    %v3141 = vld [vmem:[%s16] sm:$0x7f]
    %v3143 = vlaneseq
    %v3144 = vshrl.u32 %v3143, 7
    %v3145 = vsub.s32 0, %v3144
    %v3146 = vrot.slane %v3141, %v3145
    %v3147 = vlaneseq
    %v3148 = vshrl.u32 %v3147, 7
    %v3149 = vsub.s32 1, %v3148
    %v3150 = vrot.slane %v3141, %v3149
    %v3151 = vlaneseq
    %v3152 = vshrl.u32 %v3151, 7
    %v3153 = vsub.s32 2, %v3152
    %v3154 = vrot.slane %v3141, %v3153
    %v3155 = vlaneseq
    %v3156 = vshrl.u32 %v3155, 7
    %v3157 = vsub.s32 3, %v3156
    %v3158 = vrot.slane %v3141, %v3157
    %v3159 = vlaneseq
    %v3160 = vshrl.u32 %v3159, 7
    %v3161 = vsub.s32 4, %v3160
    %v3162 = vrot.slane %v3141, %v3161
    %v3163 = vlaneseq
    %v3164 = vshrl.u32 %v3163, 7
    %v3165 = vsub.s32 5, %v3164
    %v3166 = vrot.slane %v3141, %v3165
    %v3167 = vlaneseq
    %v3168 = vshrl.u32 %v3167, 7
    %v3169 = vsub.s32 6, %v3168
    %v3170 = vrot.slane %v3141, %v3169
    %v3378 = vunpack.c.l.b16 %v2941
    %v3379 = vunpack.c.h.b16 %v2941
    %v3380 = vunpack.c.l.b16 %v2942
    %v3381 = vunpack.c.h.b16 %v2942
    %v3382 = vunpack.c.l.b16 %v2943
    %v3383 = vunpack.c.h.b16 %v2943
    %v3384 = vunpack.c.l.b16 %v2944
    %v3385 = vunpack.c.l.b16 %v2945
    %v3386 = vunpack.c.h.b16 %v2945
    %v3387 = vunpack.c.l.b16 %v2946
    %v3388 = vunpack.c.h.b16 %v2946
    %v3389 = vunpack.c.l.b16 %v2947
    %v3390 = vunpack.c.h.b16 %v2947
    %v3391 = vunpack.c.l.b16 %v2948
    %v3392 = vunpack.c.l.b16 %v2949
    %v3393 = vunpack.c.h.b16 %v2949
    %v3394 = vunpack.c.l.b16 %v2950
    %v3395 = vunpack.c.h.b16 %v2950
    %v3396 = vunpack.c.l.b16 %v2951
    %v3397 = vunpack.c.h.b16 %v2951
    %v3398 = vunpack.c.l.b16 %v2952
    %v3399 = vunpack.c.l.b16 %v2953
    %v3400 = vunpack.c.h.b16 %v2953
    %v3401 = vunpack.c.l.b16 %v2954
    %v3402 = vunpack.c.h.b16 %v2954
    %v3403 = vunpack.c.l.b16 %v2955
    %v3404 = vunpack.c.h.b16 %v2955
    %v3405 = vunpack.c.l.b16 %v2956
    %v3406 = vunpack.c.l.b16 %v2957
    %v3407 = vunpack.c.h.b16 %v2957
    %v3408 = vunpack.c.l.b16 %v2958
    %v3409 = vunpack.c.h.b16 %v2958
    %v3410 = vunpack.c.l.b16 %v2959
    %v3411 = vunpack.c.h.b16 %v2959
    %v3412 = vunpack.c.l.b16 %v2960
    %v3413 = vunpack.c.l.b16 %v2961
    %v3414 = vunpack.c.h.b16 %v2961
    %v3415 = vunpack.c.l.b16 %v2962
    %v3416 = vunpack.c.h.b16 %v2962
    %v3417 = vunpack.c.l.b16 %v2963
    %v3418 = vunpack.c.h.b16 %v2963
    %v3419 = vunpack.c.l.b16 %v2964
    %v3420 = vunpack.c.l.b16 %v2965
    %v3421 = vunpack.c.h.b16 %v2965
    %v3422 = vunpack.c.l.b16 %v2966
    %v3423 = vunpack.c.h.b16 %v2966
    %v3424 = vunpack.c.l.b16 %v2967
    %v3425 = vunpack.c.h.b16 %v2967
    %v3426 = vunpack.c.l.b16 %v2968
    %v3427 = vunpack.c.l.b16 %v2969
    %v3428 = vunpack.c.h.b16 %v2969
    %v3429 = vunpack.c.l.b16 %v2970
    %v3430 = vunpack.c.h.b16 %v2970
    %v3431 = vunpack.c.l.b16 %v2971
    %v3432 = vunpack.c.h.b16 %v2971
    %v3433 = vunpack.c.l.b16 %v2972
    %v3434 = vunpack.c.l.b16 %v2973
    %v3435 = vunpack.c.h.b16 %v2973
    %v3436 = vunpack.c.l.b16 %v2974
    %v3437 = vunpack.c.h.b16 %v2974
    %v3438 = vunpack.c.l.b16 %v2975
    %v3439 = vunpack.c.h.b16 %v2975
    %v3440 = vunpack.c.l.b16 %v2976
    %v3441 = vunpack.c.l.b16 %v2977
    %v3442 = vunpack.c.h.b16 %v2977
    %v3443 = vunpack.c.l.b16 %v2978
    %v3444 = vunpack.c.h.b16 %v2978
    %v3445 = vunpack.c.l.b16 %v2979
    %v3446 = vunpack.c.h.b16 %v2979
    %v3447 = vunpack.c.l.b16 %v2980
    %v3448 = vunpack.c.l.b16 %v2981
    %v3449 = vunpack.c.h.b16 %v2981
    %v3450 = vunpack.c.l.b16 %v2982
    %v3451 = vunpack.c.h.b16 %v2982
    %v3452 = vunpack.c.l.b16 %v2983
    %v3453 = vunpack.c.h.b16 %v2983
    %v3454 = vunpack.c.l.b16 %v2984
    %v3455 = vunpack.c.l.b16 %v2985
    %v3456 = vunpack.c.h.b16 %v2985
    %v3457 = vunpack.c.l.b16 %v2986
    %v3458 = vunpack.c.h.b16 %v2986
    %v3459 = vunpack.c.l.b16 %v2987
    %v3460 = vunpack.c.h.b16 %v2987
    %v3461 = vunpack.c.l.b16 %v2988
    %v3462 = vunpack.c.l.b16 %v2989
    %v3463 = vunpack.c.h.b16 %v2989
    %v3464 = vunpack.c.l.b16 %v2990
    %v3465 = vunpack.c.h.b16 %v2990
    %v3466 = vunpack.c.l.b16 %v2991
    %v3467 = vunpack.c.h.b16 %v2991
    %v3468 = vunpack.c.l.b16 %v2992
    %v3469 = vunpack.c.l.b16 %v2993
    %v3470 = vunpack.c.h.b16 %v2993
    %v3471 = vunpack.c.l.b16 %v2994
    %v3472 = vunpack.c.h.b16 %v2994
    %v3473 = vunpack.c.l.b16 %v2995
    %v3474 = vunpack.c.h.b16 %v2995
    %v3475 = vunpack.c.l.b16 %v2996
    %v3476 = vunpack.c.l.b16 %v2997
    %v3477 = vunpack.c.h.b16 %v2997
    %v3478 = vunpack.c.l.b16 %v2998
    %v3479 = vunpack.c.h.b16 %v2998
    %v3480 = vunpack.c.l.b16 %v2999
    %v3481 = vunpack.c.h.b16 %v2999
    %v3482 = vunpack.c.l.b16 %v3000
    %v3483 = vunpack.c.l.b16 %v3001
    %v3484 = vunpack.c.h.b16 %v3001
    %v3485 = vunpack.c.l.b16 %v3002
    %v3486 = vunpack.c.h.b16 %v3002
    %v3487 = vunpack.c.l.b16 %v3003
    %v3488 = vunpack.c.h.b16 %v3003
    %v3489 = vunpack.c.l.b16 %v3004
    %v3490 = vunpack.c.l.b16 %v3005
    %v3491 = vunpack.c.h.b16 %v3005
    %v3492 = vunpack.c.l.b16 %v3006
    %v3493 = vunpack.c.h.b16 %v3006
    %v3494 = vunpack.c.l.b16 %v3007
    %v3495 = vunpack.c.h.b16 %v3007
    %v3496 = vunpack.c.l.b16 %v3008
    %v3497 = vunpack.c.l.b16 %v3009
    %v3498 = vunpack.c.h.b16 %v3009
    %v3499 = vunpack.c.l.b16 %v3010
    %v3500 = vunpack.c.h.b16 %v3010
    %v3501 = vunpack.c.l.b16 %v3011
    %v3502 = vunpack.c.h.b16 %v3011
    %v3503 = vunpack.c.l.b16 %v3012
    %v3504 = vunpack.c.l.b16 %v3013
    %v3505 = vunpack.c.h.b16 %v3013
    %v3506 = vunpack.c.l.b16 %v3014
    %v3507 = vunpack.c.h.b16 %v3014
    %v3508 = vunpack.c.l.b16 %v3015
    %v3509 = vunpack.c.h.b16 %v3015
    %v3510 = vunpack.c.l.b16 %v3016
    %v3511 = vunpack.c.l.b16 %v3017
    %v3512 = vunpack.c.h.b16 %v3017
    %v3513 = vunpack.c.l.b16 %v3018
    %v3514 = vunpack.c.h.b16 %v3018
    %v3515 = vunpack.c.l.b16 %v3019
    %v3516 = vunpack.c.h.b16 %v3019
    %v3517 = vunpack.c.l.b16 %v3020
    %v3518 = vunpack.c.l.b16 %v3021
    %v3519 = vunpack.c.h.b16 %v3021
    %v3520 = vunpack.c.l.b16 %v3022
    %v3521 = vunpack.c.h.b16 %v3022
    %v3522 = vunpack.c.l.b16 %v3023
    %v3523 = vunpack.c.h.b16 %v3023
    %v3524 = vunpack.c.l.b16 %v3024
    %v3525 = vunpack.c.l.b16 %v3025
    %v3526 = vunpack.c.h.b16 %v3025
    %v3527 = vunpack.c.l.b16 %v3026
    %v3528 = vunpack.c.h.b16 %v3026
    %v3529 = vunpack.c.l.b16 %v3027
    %v3530 = vunpack.c.h.b16 %v3027
    %v3531 = vunpack.c.l.b16 %v3028
    %v3532 = vunpack.c.l.b16 %v3029
    %v3533 = vunpack.c.h.b16 %v3029
    %v3534 = vunpack.c.l.b16 %v3030
    %v3535 = vunpack.c.h.b16 %v3030
    %v3536 = vunpack.c.l.b16 %v3031
    %v3537 = vunpack.c.h.b16 %v3031
    %v3538 = vunpack.c.l.b16 %v3032
    %v3539 = vunpack.c.l.b16 %v3033
    %v3540 = vunpack.c.h.b16 %v3033
    %v3541 = vunpack.c.l.b16 %v3034
    %v3542 = vunpack.c.h.b16 %v3034
    %v3543 = vunpack.c.l.b16 %v3035
    %v3544 = vunpack.c.h.b16 %v3035
    %v3545 = vunpack.c.l.b16 %v3036
    %v3546 = vunpack.c.l.b16 %v3037
    %v3547 = vunpack.c.h.b16 %v3037
    %v3548 = vunpack.c.l.b16 %v3038
    %v3549 = vunpack.c.h.b16 %v3038
    %v3550 = vunpack.c.l.b16 %v3039
    %v3551 = vunpack.c.h.b16 %v3039
    %v3552 = vunpack.c.l.b16 %v3040
    %v3553 = vunpack.c.l.b16 %v3041
    %v3554 = vunpack.c.h.b16 %v3041
    %v3555 = vunpack.c.l.b16 %v3042
    %v3556 = vunpack.c.h.b16 %v3042
    %v3557 = vunpack.c.l.b16 %v3043
    %v3558 = vunpack.c.h.b16 %v3043
    %v3559 = vunpack.c.l.b16 %v3044
    %v3560 = vunpack.c.l.b16 %v3045
    %v3561 = vunpack.c.h.b16 %v3045
    %v3562 = vunpack.c.l.b16 %v3046
    %v3563 = vunpack.c.h.b16 %v3046
    %v3564 = vunpack.c.l.b16 %v3047
    %v3565 = vunpack.c.h.b16 %v3047
    %v3566 = vunpack.c.l.b16 %v3048
    %v3567 = vunpack.c.l.b16 %v3049
    %v3568 = vunpack.c.h.b16 %v3049
    %v3569 = vunpack.c.l.b16 %v3050
    %v3570 = vunpack.c.h.b16 %v3050
    %v3571 = vunpack.c.l.b16 %v3051
    %v3572 = vunpack.c.h.b16 %v3051
    %v3573 = vunpack.c.l.b16 %v3052
    %v3574 = vunpack.c.l.b16 %v3053
    %v3575 = vunpack.c.h.b16 %v3053
    %v3576 = vunpack.c.l.b16 %v3054
    %v3577 = vunpack.c.h.b16 %v3054
    %v3578 = vunpack.c.l.b16 %v3055
    %v3579 = vunpack.c.h.b16 %v3055
    %v3580 = vunpack.c.l.b16 %v3056
    %v3581 = vunpack.c.l.b16 %v3057
    %v3582 = vunpack.c.h.b16 %v3057
    %v3583 = vunpack.c.l.b16 %v3058
    %v3584 = vunpack.c.h.b16 %v3058
    %v3585 = vunpack.c.l.b16 %v3059
    %v3586 = vunpack.c.h.b16 %v3059
    %v3587 = vunpack.c.l.b16 %v3060
    %v3588 = vunpack.c.l.b16 %v3061
    %v3589 = vunpack.c.h.b16 %v3061
    %v3590 = vunpack.c.l.b16 %v3062
    %v3591 = vunpack.c.h.b16 %v3062
    %v3592 = vunpack.c.l.b16 %v3063
    %v3593 = vunpack.c.h.b16 %v3063
    %v3594 = vunpack.c.l.b16 %v3064
    %v3595 = vunpack.c.l.b16 %v3065
    %v3596 = vunpack.c.h.b16 %v3065
    %v3597 = vunpack.c.l.b16 %v3066
    %v3598 = vunpack.c.h.b16 %v3066
    %v3599 = vunpack.c.l.b16 %v3067
    %v3600 = vunpack.c.h.b16 %v3067
    %v3601 = vunpack.c.l.b16 %v3068
    %v3602 = vunpack.c.l.b16 %v3069
    %v3603 = vunpack.c.h.b16 %v3069
    %v3604 = vunpack.c.l.b16 %v3070
    %v3605 = vunpack.c.h.b16 %v3070
    %v3606 = vunpack.c.l.b16 %v3071
    %v3607 = vunpack.c.h.b16 %v3071
    %v3608 = vunpack.c.l.b16 %v3072
    %v3609 = vunpack.c.l.b16 %v3073
    %v3610 = vunpack.c.h.b16 %v3073
    %v3611 = vunpack.c.l.b16 %v3074
    %v3612 = vunpack.c.h.b16 %v3074
    %v3613 = vunpack.c.l.b16 %v3075
    %v3614 = vunpack.c.h.b16 %v3075
    %v3615 = vunpack.c.l.b16 %v3076
    %v3616 = vunpack.c.l.b16 %v3077
    %v3617 = vunpack.c.h.b16 %v3077
    %v3618 = vunpack.c.l.b16 %v3078
    %v3619 = vunpack.c.h.b16 %v3078
    %v3620 = vunpack.c.l.b16 %v3079
    %v3621 = vunpack.c.h.b16 %v3079
    %v3622 = vunpack.c.l.b16 %v3080
    %v3623 = vunpack.c.l.b16 %v3081
    %v3624 = vunpack.c.h.b16 %v3081
    %v3625 = vunpack.c.l.b16 %v3082
    %v3626 = vunpack.c.h.b16 %v3082
    %v3627 = vunpack.c.l.b16 %v3083
    %v3628 = vunpack.c.h.b16 %v3083
    %v3629 = vunpack.c.l.b16 %v3084
    %v3630 = vunpack.c.l.b16 %v3085
    %v3631 = vunpack.c.h.b16 %v3085
    %v3632 = vunpack.c.l.b16 %v3086
    %v3633 = vunpack.c.h.b16 %v3086
    %v3634 = vunpack.c.l.b16 %v3087
    %v3635 = vunpack.c.h.b16 %v3087
    %v3636 = vunpack.c.l.b16 %v3088
    %v3637 = vunpack.c.l.b16 %v3089
    %v3638 = vunpack.c.h.b16 %v3089
    %v3639 = vunpack.c.l.b16 %v3090
    %v3640 = vunpack.c.h.b16 %v3090
    %v3641 = vunpack.c.l.b16 %v3091
    %v3642 = vunpack.c.h.b16 %v3091
    %v3643 = vunpack.c.l.b16 %v3092
    %v3644 = vunpack.c.l.b16 %v3093
    %v3645 = vunpack.c.h.b16 %v3093
    %v3646 = vunpack.c.l.b16 %v3094
    %v3647 = vunpack.c.h.b16 %v3094
    %v3648 = vunpack.c.l.b16 %v3095
    %v3649 = vunpack.c.h.b16 %v3095
    %v3650 = vunpack.c.l.b16 %v3096
    %v3651 = vunpack.c.l.b16 %v3097
    %v3652 = vunpack.c.h.b16 %v3097
    %v3653 = vunpack.c.l.b16 %v3098
    %v3654 = vunpack.c.h.b16 %v3098
    %v3655 = vunpack.c.l.b16 %v3099
    %v3656 = vunpack.c.h.b16 %v3099
    %v3657 = vunpack.c.l.b16 %v3100
    %v3658 = vunpack.c.l.b16 %v3101
    %v3659 = vunpack.c.h.b16 %v3101
    %v3660 = vunpack.c.l.b16 %v3102
    %v3661 = vunpack.c.h.b16 %v3102
    %v3662 = vunpack.c.l.b16 %v3103
    %v3663 = vunpack.c.h.b16 %v3103
    %v3664 = vunpack.c.l.b16 %v3104
    %v3665 = vunpack.c.l.b16 %v3105
    %v3666 = vunpack.c.h.b16 %v3105
    %v3667 = vunpack.c.l.b16 %v3106
    %v3668 = vunpack.c.h.b16 %v3106
    %v3669 = vunpack.c.l.b16 %v3107
    %v3670 = vunpack.c.h.b16 %v3107
    %v3671 = vunpack.c.l.b16 %v3108
    %v3672 = vunpack.c.l.b16 %v3109
    %v3673 = vunpack.c.h.b16 %v3109
    %v3674 = vunpack.c.l.b16 %v3110
    %v3675 = vunpack.c.h.b16 %v3110
    %v3676 = vunpack.c.l.b16 %v3111
    %v3677 = vunpack.c.h.b16 %v3111
    %v3678 = vunpack.c.l.b16 %v3112
    %v3679 = vunpack.c.l.b16 %v3113
    %v3680 = vunpack.c.h.b16 %v3113
    %v3681 = vunpack.c.l.b16 %v3114
    %v3682 = vunpack.c.h.b16 %v3114
    %v3683 = vunpack.c.l.b16 %v3115
    %v3684 = vunpack.c.h.b16 %v3115
    %v3685 = vunpack.c.l.b16 %v3116
    %v3686 = vunpack.c.l.b16 %v3117
    %v3687 = vunpack.c.h.b16 %v3117
    %v3688 = vunpack.c.l.b16 %v3118
    %v3689 = vunpack.c.h.b16 %v3118
    %v3690 = vunpack.c.l.b16 %v3119
    %v3691 = vunpack.c.h.b16 %v3119
    %v3692 = vunpack.c.l.b16 %v3120
    %v3693 = vunpack.c.l.b16 %v3121
    %v3694 = vunpack.c.h.b16 %v3121
    %v3695 = vunpack.c.l.b16 %v3122
    %v3696 = vunpack.c.h.b16 %v3122
    %v3697 = vunpack.c.l.b16 %v3123
    %v3698 = vunpack.c.h.b16 %v3123
    %v3699 = vunpack.c.l.b16 %v3124
    %v3700 = vunpack.c.l.b16 %v3125
    %v3701 = vunpack.c.h.b16 %v3125
    %v3702 = vunpack.c.l.b16 %v3126
    %v3703 = vunpack.c.h.b16 %v3126
    %v3704 = vunpack.c.l.b16 %v3127
    %v3705 = vunpack.c.h.b16 %v3127
    %v3706 = vunpack.c.l.b16 %v3128
    %v3707 = vunpack.c.l.b16 %v3129
    %v3708 = vunpack.c.h.b16 %v3129
    %v3709 = vunpack.c.l.b16 %v3130
    %v3710 = vunpack.c.h.b16 %v3130
    %v3711 = vunpack.c.l.b16 %v3131
    %v3712 = vunpack.c.h.b16 %v3131
    %v3713 = vunpack.c.l.b16 %v3132
    %v3714 = vunpack.c.l.b16 %v3133
    %v3715 = vunpack.c.h.b16 %v3133
    %v3716 = vunpack.c.l.b16 %v3134
    %v3717 = vunpack.c.h.b16 %v3134
    %v3718 = vunpack.c.l.b16 %v3135
    %v3719 = vunpack.c.h.b16 %v3135
    %v3720 = vunpack.c.l.b16 %v3136
    %v3721 = vunpack.c.l.b16 %v3137
    %v3722 = vunpack.c.h.b16 %v3137
    %v3723 = vunpack.c.l.b16 %v3138
    %v3724 = vunpack.c.h.b16 %v3138
    %v3725 = vunpack.c.l.b16 %v3139
    %v3726 = vunpack.c.h.b16 %v3139
    %v3727 = vunpack.c.l.b16 %v3140
    %v3728 = vpack.c.b16 %v3385, %v3378
    %v3729 = vpack.c.b16 %v3386, %v3379
    %v3730 = vpack.c.b16 %v3387, %v3380
    %v3731 = vpack.c.b16 %v3388, %v3381
    %v3732 = vpack.c.b16 %v3389, %v3382
    %v3733 = vpack.c.b16 %v3390, %v3383
    %v3734 = vpack.c.b16 %v3391, %v3384
    %v3735 = vpack.c.b16 %v3399, %v3392
    %v3736 = vpack.c.b16 %v3400, %v3393
    %v3737 = vpack.c.b16 %v3401, %v3394
    %v3738 = vpack.c.b16 %v3402, %v3395
    %v3739 = vpack.c.b16 %v3403, %v3396
    %v3740 = vpack.c.b16 %v3404, %v3397
    %v3741 = vpack.c.b16 %v3405, %v3398
    %v3742 = vpack.c.b16 %v3413, %v3406
    %v3743 = vpack.c.b16 %v3414, %v3407
    %v3744 = vpack.c.b16 %v3415, %v3408
    %v3745 = vpack.c.b16 %v3416, %v3409
    %v3746 = vpack.c.b16 %v3417, %v3410
    %v3747 = vpack.c.b16 %v3418, %v3411
    %v3748 = vpack.c.b16 %v3419, %v3412
    %v3749 = vpack.c.b16 %v3427, %v3420
    %v3750 = vpack.c.b16 %v3428, %v3421
    %v3751 = vpack.c.b16 %v3429, %v3422
    %v3752 = vpack.c.b16 %v3430, %v3423
    %v3753 = vpack.c.b16 %v3431, %v3424
    %v3754 = vpack.c.b16 %v3432, %v3425
    %v3755 = vpack.c.b16 %v3433, %v3426
    %v3756 = vpack.c.b16 %v3441, %v3434
    %v3757 = vpack.c.b16 %v3442, %v3435
    %v3758 = vpack.c.b16 %v3443, %v3436
    %v3759 = vpack.c.b16 %v3444, %v3437
    %v3760 = vpack.c.b16 %v3445, %v3438
    %v3761 = vpack.c.b16 %v3446, %v3439
    %v3762 = vpack.c.b16 %v3447, %v3440
    %v3763 = vpack.c.b16 %v3455, %v3448
    %v3764 = vpack.c.b16 %v3456, %v3449
    %v3765 = vpack.c.b16 %v3457, %v3450
    %v3766 = vpack.c.b16 %v3458, %v3451
    %v3767 = vpack.c.b16 %v3459, %v3452
    %v3768 = vpack.c.b16 %v3460, %v3453
    %v3769 = vpack.c.b16 %v3461, %v3454
    %v3770 = vpack.c.b16 %v3469, %v3462
    %v3771 = vpack.c.b16 %v3470, %v3463
    %v3772 = vpack.c.b16 %v3471, %v3464
    %v3773 = vpack.c.b16 %v3472, %v3465
    %v3774 = vpack.c.b16 %v3473, %v3466
    %v3775 = vpack.c.b16 %v3474, %v3467
    %v3776 = vpack.c.b16 %v3475, %v3468
    %v3777 = vpack.c.b16 %v3483, %v3476
    %v3778 = vpack.c.b16 %v3484, %v3477
    %v3779 = vpack.c.b16 %v3485, %v3478
    %v3780 = vpack.c.b16 %v3486, %v3479
    %v3781 = vpack.c.b16 %v3487, %v3480
    %v3782 = vpack.c.b16 %v3488, %v3481
    %v3783 = vpack.c.b16 %v3489, %v3482
    %v3784 = vpack.c.b16 %v3497, %v3490
    %v3785 = vpack.c.b16 %v3498, %v3491
    %v3786 = vpack.c.b16 %v3499, %v3492
    %v3787 = vpack.c.b16 %v3500, %v3493
    %v3788 = vpack.c.b16 %v3501, %v3494
    %v3789 = vpack.c.b16 %v3502, %v3495
    %v3790 = vpack.c.b16 %v3503, %v3496
    %v3791 = vpack.c.b16 %v3511, %v3504
    %v3792 = vpack.c.b16 %v3512, %v3505
    %v3793 = vpack.c.b16 %v3513, %v3506
    %v3794 = vpack.c.b16 %v3514, %v3507
    %v3795 = vpack.c.b16 %v3515, %v3508
    %v3796 = vpack.c.b16 %v3516, %v3509
    %v3797 = vpack.c.b16 %v3517, %v3510
    %v3798 = vpack.c.b16 %v3525, %v3518
    %v3799 = vpack.c.b16 %v3526, %v3519
    %v3800 = vpack.c.b16 %v3527, %v3520
    %v3801 = vpack.c.b16 %v3528, %v3521
    %v3802 = vpack.c.b16 %v3529, %v3522
    %v3803 = vpack.c.b16 %v3530, %v3523
    %v3804 = vpack.c.b16 %v3531, %v3524
    %v3805 = vpack.c.b16 %v3539, %v3532
    %v3806 = vpack.c.b16 %v3540, %v3533
    %v3807 = vpack.c.b16 %v3541, %v3534
    %v3808 = vpack.c.b16 %v3542, %v3535
    %v3809 = vpack.c.b16 %v3543, %v3536
    %v3810 = vpack.c.b16 %v3544, %v3537
    %v3811 = vpack.c.b16 %v3545, %v3538
    %v3812 = vpack.c.b16 %v3553, %v3546
    %v3813 = vpack.c.b16 %v3554, %v3547
    %v3814 = vpack.c.b16 %v3555, %v3548
    %v3815 = vpack.c.b16 %v3556, %v3549
    %v3816 = vpack.c.b16 %v3557, %v3550
    %v3817 = vpack.c.b16 %v3558, %v3551
    %v3818 = vpack.c.b16 %v3559, %v3552
    %v3819 = vpack.c.b16 %v3567, %v3560
    %v3820 = vpack.c.b16 %v3568, %v3561
    %v3821 = vpack.c.b16 %v3569, %v3562
    %v3822 = vpack.c.b16 %v3570, %v3563
    %v3823 = vpack.c.b16 %v3571, %v3564
    %v3824 = vpack.c.b16 %v3572, %v3565
    %v3825 = vpack.c.b16 %v3573, %v3566
    %v3826 = vpack.c.b16 %v3581, %v3574
    %v3827 = vpack.c.b16 %v3582, %v3575
    %v3828 = vpack.c.b16 %v3583, %v3576
    %v3829 = vpack.c.b16 %v3584, %v3577
    %v3830 = vpack.c.b16 %v3585, %v3578
    %v3831 = vpack.c.b16 %v3586, %v3579
    %v3832 = vpack.c.b16 %v3587, %v3580
    %v3833 = vpack.c.b16 %v3595, %v3588
    %v3834 = vpack.c.b16 %v3596, %v3589
    %v3835 = vpack.c.b16 %v3597, %v3590
    %v3836 = vpack.c.b16 %v3598, %v3591
    %v3837 = vpack.c.b16 %v3599, %v3592
    %v3838 = vpack.c.b16 %v3600, %v3593
    %v3839 = vpack.c.b16 %v3601, %v3594
    %v3840 = vpack.c.b16 %v3609, %v3602
    %v3841 = vpack.c.b16 %v3610, %v3603
    %v3842 = vpack.c.b16 %v3611, %v3604
    %v3843 = vpack.c.b16 %v3612, %v3605
    %v3844 = vpack.c.b16 %v3613, %v3606
    %v3845 = vpack.c.b16 %v3614, %v3607
    %v3846 = vpack.c.b16 %v3615, %v3608
    %v3847 = vpack.c.b16 %v3623, %v3616
    %v3848 = vpack.c.b16 %v3624, %v3617
    %v3849 = vpack.c.b16 %v3625, %v3618
    %v3850 = vpack.c.b16 %v3626, %v3619
    %v3851 = vpack.c.b16 %v3627, %v3620
    %v3852 = vpack.c.b16 %v3628, %v3621
    %v3853 = vpack.c.b16 %v3629, %v3622
    %v3854 = vpack.c.b16 %v3637, %v3630
    %v3855 = vpack.c.b16 %v3638, %v3631
    %v3856 = vpack.c.b16 %v3639, %v3632
    %v3857 = vpack.c.b16 %v3640, %v3633
    %v3858 = vpack.c.b16 %v3641, %v3634
    %v3859 = vpack.c.b16 %v3642, %v3635
    %v3860 = vpack.c.b16 %v3643, %v3636
    %v3861 = vpack.c.b16 %v3651, %v3644
    %v3862 = vpack.c.b16 %v3652, %v3645
    %v3863 = vpack.c.b16 %v3653, %v3646
    %v3864 = vpack.c.b16 %v3654, %v3647
    %v3865 = vpack.c.b16 %v3655, %v3648
    %v3866 = vpack.c.b16 %v3656, %v3649
    %v3867 = vpack.c.b16 %v3657, %v3650
    %v3868 = vpack.c.b16 %v3665, %v3658
    %v3869 = vpack.c.b16 %v3666, %v3659
    %v3870 = vpack.c.b16 %v3667, %v3660
    %v3871 = vpack.c.b16 %v3668, %v3661
    %v3872 = vpack.c.b16 %v3669, %v3662
    %v3873 = vpack.c.b16 %v3670, %v3663
    %v3874 = vpack.c.b16 %v3671, %v3664
    %v3875 = vpack.c.b16 %v3679, %v3672
    %v3876 = vpack.c.b16 %v3680, %v3673
    %v3877 = vpack.c.b16 %v3681, %v3674
    %v3878 = vpack.c.b16 %v3682, %v3675
    %v3879 = vpack.c.b16 %v3683, %v3676
    %v3880 = vpack.c.b16 %v3684, %v3677
    %v3881 = vpack.c.b16 %v3685, %v3678
    %v3882 = vpack.c.b16 %v3693, %v3686
    %v3883 = vpack.c.b16 %v3694, %v3687
    %v3884 = vpack.c.b16 %v3695, %v3688
    %v3885 = vpack.c.b16 %v3696, %v3689
    %v3886 = vpack.c.b16 %v3697, %v3690
    %v3887 = vpack.c.b16 %v3698, %v3691
    %v3888 = vpack.c.b16 %v3699, %v3692
    %v3889 = vpack.c.b16 %v3707, %v3700
    %v3890 = vpack.c.b16 %v3708, %v3701
    %v3891 = vpack.c.b16 %v3709, %v3702
    %v3892 = vpack.c.b16 %v3710, %v3703
    %v3893 = vpack.c.b16 %v3711, %v3704
    %v3894 = vpack.c.b16 %v3712, %v3705
    %v3895 = vpack.c.b16 %v3713, %v3706
    %v3896 = vpack.c.b16 %v3721, %v3714
    %v3897 = vpack.c.b16 %v3722, %v3715
    %v3898 = vpack.c.b16 %v3723, %v3716
    %v3899 = vpack.c.b16 %v3724, %v3717
    %v3900 = vpack.c.b16 %v3725, %v3718
    %v3901 = vpack.c.b16 %v3726, %v3719
    %v3902 = vpack.c.b16 %v3727, %v3720
    %v4079 = vsel %vm1382, %v2940, 0
    %4081 = vmatprep.subr.bf16.mxu0 %v3729
    %4082 = vmatpush1.bf16.msra.mxu0 %v3728
    %4083 = vmatprep.subr.bf16.mxu0 %v3736
    %4084 = vmatpush1.bf16.msra.mxu0 %v3735
    %4085 = vmatprep.subr.bf16.mxu0 %v3743
    %4086 = vmatpush1.bf16.msra.mxu0 %v3742
    %4087 = vmatprep.subr.bf16.mxu0 %v3750
    %4088 = vmatpush1.bf16.msra.mxu0 %v3749
    %4089 = vmatprep.subr.bf16.mxu0 %v3757
    %4090 = vmatpush1.bf16.msra.mxu0 %v3756
    %4091 = vmatprep.subr.bf16.mxu0 %v3764
    %4092 = vmatpush1.bf16.msra.mxu0 %v3763
    %4093 = vmatprep.subr.bf16.mxu0 %v3771
    %4094 = vmatpush1.bf16.msra.mxu0 %v3770
    %4095 = vmatprep.subr.bf16.mxu0 %v3778
    %4096 = vmatpush1.bf16.msra.mxu0 %v3777
    %4097 = vmatprep.subr.bf16.mxu0 %v3785
    %4098 = vmatpush1.bf16.msra.mxu0 %v3784
    %4099 = vmatprep.subr.bf16.mxu0 %v3792
    %4100 = vmatpush1.bf16.msra.mxu0 %v3791
    %4101 = vmatprep.subr.bf16.mxu0 %v3799
    %4102 = vmatpush1.bf16.msra.mxu0 %v3798
    %4103 = vmatprep.subr.bf16.mxu0 %v3806
    %4104 = vmatpush1.bf16.msra.mxu0 %v3805
    %4105 = vmatprep.subr.bf16.mxu0 %v3813
    %4106 = vmatpush1.bf16.msra.mxu0 %v3812
    %4107 = vmatprep.subr.bf16.mxu0 %v3820
    %4108 = vmatpush1.bf16.msra.mxu0 %v3819
    %4109 = vmatprep.subr.bf16.mxu0 %v3827
    %4110 = vmatpush1.bf16.msra.mxu0 %v3826
    %4111 = vmatprep.subr.bf16.mxu0 %v3834
    %4112 = vmatpush1.bf16.msra.mxu0 %v3833
    %4113 = vmatprep.mubr.bf16.mxu0 %v2938
    %4114 = vmatmul.mubr.bf16.gmra.mrb[0].mxu0 %v2937
    %v4115 = vpop.f32.mrb[0].mxu0
    %v4116 = vadd.f32 %v3146, %v4115
    %v4117 = vpop.f32.mrb[0].mxu0
    %v4118 = vadd.f32 %v3150, %v4117
    %v4119 = vpop.f32.mrb[0].mxu0
    %v4120 = vpop.f32.mrb[0].mxu0
    %4121 = vdwg.mxu0
    %4122 = vmatprep.subr.bf16.mxu0 %v3841
    %4123 = vmatpush1.bf16.msra.mxu0 %v3840
    %4124 = vmatprep.subr.bf16.mxu0 %v3848
    %4125 = vmatpush1.bf16.msra.mxu0 %v3847
    %4126 = vmatprep.subr.bf16.mxu0 %v3855
    %4127 = vmatpush1.bf16.msra.mxu0 %v3854
    %4128 = vmatprep.subr.bf16.mxu0 %v3862
    %4129 = vmatpush1.bf16.msra.mxu0 %v3861
    %4130 = vmatprep.subr.bf16.mxu0 %v3869
    %4131 = vmatpush1.bf16.msra.mxu0 %v3868
    %4132 = vmatprep.subr.bf16.mxu0 %v3876
    %4133 = vmatpush1.bf16.msra.mxu0 %v3875
    %4134 = vmatprep.subr.bf16.mxu0 %v3883
    %4135 = vmatpush1.bf16.msra.mxu0 %v3882
    %4136 = vmatprep.subr.bf16.mxu0 %v3890
    %4137 = vmatpush1.bf16.msra.mxu0 %v3889
    %4138 = vmatprep.subr.bf16.mxu0 %v3897
    %4139 = vmatpush1.bf16.msra.mxu0 %v3896
    %4140 = vmatprep.subr.bf16.mxu0 0
    %4141 = vmatpush1.bf16.msra.mxu0 0
    %4142 = vmatprep.subr.bf16.mxu0 0
    %4143 = vmatpush1.bf16.msra.mxu0 0
    %4144 = vmatprep.subr.bf16.mxu0 0
    %4145 = vmatpush1.bf16.msra.mxu0 0
    %4146 = vmatprep.subr.bf16.mxu0 0
    %4147 = vmatpush1.bf16.msra.mxu0 0
    %4148 = vmatprep.subr.bf16.mxu0 0
    %4149 = vmatpush1.bf16.msra.mxu0 0
    %4150 = vmatprep.subr.bf16.mxu0 0
    %4151 = vmatpush1.bf16.msra.mxu0 0
    %4152 = vmatprep.subr.bf16.mxu0 0
    %4153 = vmatpush1.bf16.msra.mxu0 0
    %4154 = vmatprep.mubr.bf16.mxu0 %v4079
    %4155 = vmatmul.mubr.bf16.gmra.mrb[0].mxu0 %v2939
    %v4156 = vpop.f32.mrb[0].mxu0
    %v4157 = vadd.f32 %v4116, %v4156
    %v4158 = vpop.f32.mrb[0].mxu0
    %v4159 = vadd.f32 %v4118, %v4158
    %v4160 = vpop.f32.mrb[0].mxu0
    %v4161 = vpop.f32.mrb[0].mxu0
    %4162 = vdwg.mxu0
    %4163 = vmatprep.subr.bf16.mxu0 %v3731
    %4164 = vmatpush1.bf16.msra.mxu0 %v3730
    %4165 = vmatprep.subr.bf16.mxu0 %v3738
    %4166 = vmatpush1.bf16.msra.mxu0 %v3737
    %4167 = vmatprep.subr.bf16.mxu0 %v3745
    %4168 = vmatpush1.bf16.msra.mxu0 %v3744
    %4169 = vmatprep.subr.bf16.mxu0 %v3752
    %4170 = vmatpush1.bf16.msra.mxu0 %v3751
    %4171 = vmatprep.subr.bf16.mxu0 %v3759
    %4172 = vmatpush1.bf16.msra.mxu0 %v3758
    %4173 = vmatprep.subr.bf16.mxu0 %v3766
    %4174 = vmatpush1.bf16.msra.mxu0 %v3765
    %4175 = vmatprep.subr.bf16.mxu0 %v3773
    %4176 = vmatpush1.bf16.msra.mxu0 %v3772
    %4177 = vmatprep.subr.bf16.mxu0 %v3780
    %4178 = vmatpush1.bf16.msra.mxu0 %v3779
    %4179 = vmatprep.subr.bf16.mxu0 %v3787
    %4180 = vmatpush1.bf16.msra.mxu0 %v3786
    %4181 = vmatprep.subr.bf16.mxu0 %v3794
    %4182 = vmatpush1.bf16.msra.mxu0 %v3793
    %4183 = vmatprep.subr.bf16.mxu0 %v3801
    %4184 = vmatpush1.bf16.msra.mxu0 %v3800
    %4185 = vmatprep.subr.bf16.mxu0 %v3808
    %4186 = vmatpush1.bf16.msra.mxu0 %v3807
    %4187 = vmatprep.subr.bf16.mxu0 %v3815
    %4188 = vmatpush1.bf16.msra.mxu0 %v3814
    %4189 = vmatprep.subr.bf16.mxu0 %v3822
    %4190 = vmatpush1.bf16.msra.mxu0 %v3821
    %4191 = vmatprep.subr.bf16.mxu0 %v3829
    %4192 = vmatpush1.bf16.msra.mxu0 %v3828
    %4193 = vmatprep.subr.bf16.mxu0 %v3836
    %4194 = vmatpush1.bf16.msra.mxu0 %v3835
    %4195 = vmatprep.mubr.bf16.mxu0 %v2938
    %4196 = vmatmul.mubr.bf16.gmra.mrb[0].mxu0 %v2937
    %v4197 = vpop.f32.mrb[0].mxu0
    %v4198 = vadd.f32 %v3154, %v4197
    %v4199 = vpop.f32.mrb[0].mxu0
    %v4200 = vadd.f32 %v3158, %v4199
    %v4201 = vpop.f32.mrb[0].mxu0
    %v4202 = vpop.f32.mrb[0].mxu0
    %4203 = vdwg.mxu0
    %4204 = vmatprep.subr.bf16.mxu0 %v3843
    %4205 = vmatpush1.bf16.msra.mxu0 %v3842
    %4206 = vmatprep.subr.bf16.mxu0 %v3850
    %4207 = vmatpush1.bf16.msra.mxu0 %v3849
    %4208 = vmatprep.subr.bf16.mxu0 %v3857
    %4209 = vmatpush1.bf16.msra.mxu0 %v3856
    %4210 = vmatprep.subr.bf16.mxu0 %v3864
    %4211 = vmatpush1.bf16.msra.mxu0 %v3863
    %4212 = vmatprep.subr.bf16.mxu0 %v3871
    %4213 = vmatpush1.bf16.msra.mxu0 %v3870
    %4214 = vmatprep.subr.bf16.mxu0 %v3878
    %4215 = vmatpush1.bf16.msra.mxu0 %v3877
    %4216 = vmatprep.subr.bf16.mxu0 %v3885
    %4217 = vmatpush1.bf16.msra.mxu0 %v3884
    %4218 = vmatprep.subr.bf16.mxu0 %v3892
    %4219 = vmatpush1.bf16.msra.mxu0 %v3891
    %4220 = vmatprep.subr.bf16.mxu0 %v3899
    %4221 = vmatpush1.bf16.msra.mxu0 %v3898
    %4222 = vmatprep.subr.bf16.mxu0 0
    %4223 = vmatpush1.bf16.msra.mxu0 0
    %4224 = vmatprep.subr.bf16.mxu0 0
    %4225 = vmatpush1.bf16.msra.mxu0 0
    %4226 = vmatprep.subr.bf16.mxu0 0
    %4227 = vmatpush1.bf16.msra.mxu0 0
    %4228 = vmatprep.subr.bf16.mxu0 0
    %4229 = vmatpush1.bf16.msra.mxu0 0
    %4230 = vmatprep.subr.bf16.mxu0 0
    %4231 = vmatpush1.bf16.msra.mxu0 0
    %4232 = vmatprep.subr.bf16.mxu0 0
    %4233 = vmatpush1.bf16.msra.mxu0 0
    %4234 = vmatprep.subr.bf16.mxu0 0
    %4235 = vmatpush1.bf16.msra.mxu0 0
    %4236 = vmatprep.mubr.bf16.mxu0 %v4079
    %4237 = vmatmul.mubr.bf16.gmra.mrb[0].mxu0 %v2939
    %v4238 = vpop.f32.mrb[0].mxu0
    %v4239 = vadd.f32 %v4198, %v4238
    %v4240 = vpop.f32.mrb[0].mxu0
    %v4241 = vadd.f32 %v4200, %v4240
    %v4242 = vpop.f32.mrb[0].mxu0
    %v4243 = vpop.f32.mrb[0].mxu0
    %4244 = vdwg.mxu0
    %4245 = vmatprep.subr.bf16.mxu0 %v3733
    %4246 = vmatpush1.bf16.msra.mxu0 %v3732
    %4247 = vmatprep.subr.bf16.mxu0 %v3740
    %4248 = vmatpush1.bf16.msra.mxu0 %v3739
    %4249 = vmatprep.subr.bf16.mxu0 %v3747
    %4250 = vmatpush1.bf16.msra.mxu0 %v3746
    %4251 = vmatprep.subr.bf16.mxu0 %v3754
    %4252 = vmatpush1.bf16.msra.mxu0 %v3753
    %4253 = vmatprep.subr.bf16.mxu0 %v3761
    %4254 = vmatpush1.bf16.msra.mxu0 %v3760
    %4255 = vmatprep.subr.bf16.mxu0 %v3768
    %4256 = vmatpush1.bf16.msra.mxu0 %v3767
    %4257 = vmatprep.subr.bf16.mxu0 %v3775
    %4258 = vmatpush1.bf16.msra.mxu0 %v3774
    %4259 = vmatprep.subr.bf16.mxu0 %v3782
    %4260 = vmatpush1.bf16.msra.mxu0 %v3781
    %4261 = vmatprep.subr.bf16.mxu0 %v3789
    %4262 = vmatpush1.bf16.msra.mxu0 %v3788
    %4263 = vmatprep.subr.bf16.mxu0 %v3796
    %4264 = vmatpush1.bf16.msra.mxu0 %v3795
    %4265 = vmatprep.subr.bf16.mxu0 %v3803
    %4266 = vmatpush1.bf16.msra.mxu0 %v3802
    %4267 = vmatprep.subr.bf16.mxu0 %v3810
    %4268 = vmatpush1.bf16.msra.mxu0 %v3809
    %4269 = vmatprep.subr.bf16.mxu0 %v3817
    %4270 = vmatpush1.bf16.msra.mxu0 %v3816
    %4271 = vmatprep.subr.bf16.mxu0 %v3824
    %4272 = vmatpush1.bf16.msra.mxu0 %v3823
    %4273 = vmatprep.subr.bf16.mxu0 %v3831
    %4274 = vmatpush1.bf16.msra.mxu0 %v3830
    %4275 = vmatprep.subr.bf16.mxu0 %v3838
    %4276 = vmatpush1.bf16.msra.mxu0 %v3837
    %4277 = vmatprep.mubr.bf16.mxu0 %v2938
    %4278 = vmatmul.mubr.bf16.gmra.mrb[0].mxu0 %v2937
    %v4279 = vpop.f32.mrb[0].mxu0
    %v4280 = vadd.f32 %v3162, %v4279
    %v4281 = vpop.f32.mrb[0].mxu0
    %v4282 = vadd.f32 %v3166, %v4281
    %v4283 = vpop.f32.mrb[0].mxu0
    %v4284 = vpop.f32.mrb[0].mxu0
    %4285 = vdwg.mxu0
    %4286 = vmatprep.subr.bf16.mxu0 %v3845
    %4287 = vmatpush1.bf16.msra.mxu0 %v3844
    %4288 = vmatprep.subr.bf16.mxu0 %v3852
    %4289 = vmatpush1.bf16.msra.mxu0 %v3851
    %4290 = vmatprep.subr.bf16.mxu0 %v3859
    %4291 = vmatpush1.bf16.msra.mxu0 %v3858
    %4292 = vmatprep.subr.bf16.mxu0 %v3866
    %4293 = vmatpush1.bf16.msra.mxu0 %v3865
    %4294 = vmatprep.subr.bf16.mxu0 %v3873
    %4295 = vmatpush1.bf16.msra.mxu0 %v3872
    %4296 = vmatprep.subr.bf16.mxu0 %v3880
    %4297 = vmatpush1.bf16.msra.mxu0 %v3879
    %4298 = vmatprep.subr.bf16.mxu0 %v3887
    %4299 = vmatpush1.bf16.msra.mxu0 %v3886
    %4300 = vmatprep.subr.bf16.mxu0 %v3894
    %4301 = vmatpush1.bf16.msra.mxu0 %v3893
    %4302 = vmatprep.subr.bf16.mxu0 %v3901
    %4303 = vmatpush1.bf16.msra.mxu0 %v3900
    %4304 = vmatprep.subr.bf16.mxu0 0
    %4305 = vmatpush1.bf16.msra.mxu0 0
    %4306 = vmatprep.subr.bf16.mxu0 0
    %4307 = vmatpush1.bf16.msra.mxu0 0
    %4308 = vmatprep.subr.bf16.mxu0 0
    %4309 = vmatpush1.bf16.msra.mxu0 0
    %4310 = vmatprep.subr.bf16.mxu0 0
    %4311 = vmatpush1.bf16.msra.mxu0 0
    %4312 = vmatprep.subr.bf16.mxu0 0
    %4313 = vmatpush1.bf16.msra.mxu0 0
    %4314 = vmatprep.subr.bf16.mxu0 0
    %4315 = vmatpush1.bf16.msra.mxu0 0
    %4316 = vmatprep.subr.bf16.mxu0 0
    %4317 = vmatpush1.bf16.msra.mxu0 0
    %4318 = vmatprep.mubr.bf16.mxu0 %v4079
    %4319 = vmatmul.mubr.bf16.gmra.mrb[0].mxu0 %v2939
    %v4320 = vpop.f32.mrb[0].mxu0
    %v4321 = vadd.f32 %v4280, %v4320
    %v4322 = vpop.f32.mrb[0].mxu0
    %v4323 = vadd.f32 %v4282, %v4322
    %v4324 = vpop.f32.mrb[0].mxu0
    %v4325 = vpop.f32.mrb[0].mxu0
    %4326 = vdwg.mxu0
    %4327 = vmatprep.subr.bf16.mxu0 0
    %4328 = vmatpush1.bf16.msra.mxu0 %v3734
    %4329 = vmatprep.subr.bf16.mxu0 0
    %4330 = vmatpush1.bf16.msra.mxu0 %v3741
    %4331 = vmatprep.subr.bf16.mxu0 0
    %4332 = vmatpush1.bf16.msra.mxu0 %v3748
    %4333 = vmatprep.subr.bf16.mxu0 0
    %4334 = vmatpush1.bf16.msra.mxu0 %v3755
    %4335 = vmatprep.subr.bf16.mxu0 0
    %4336 = vmatpush1.bf16.msra.mxu0 %v3762
    %4337 = vmatprep.subr.bf16.mxu0 0
    %4338 = vmatpush1.bf16.msra.mxu0 %v3769
    %4339 = vmatprep.subr.bf16.mxu0 0
    %4340 = vmatpush1.bf16.msra.mxu0 %v3776
    %4341 = vmatprep.subr.bf16.mxu0 0
    %4342 = vmatpush1.bf16.msra.mxu0 %v3783
    %4343 = vmatprep.subr.bf16.mxu0 0
    %4344 = vmatpush1.bf16.msra.mxu0 %v3790
    %4345 = vmatprep.subr.bf16.mxu0 0
    %4346 = vmatpush1.bf16.msra.mxu0 %v3797
    %4347 = vmatprep.subr.bf16.mxu0 0
    %4348 = vmatpush1.bf16.msra.mxu0 %v3804
    %4349 = vmatprep.subr.bf16.mxu0 0
    %4350 = vmatpush1.bf16.msra.mxu0 %v3811
    %4351 = vmatprep.subr.bf16.mxu0 0
    %4352 = vmatpush1.bf16.msra.mxu0 %v3818
    %4353 = vmatprep.subr.bf16.mxu0 0
    %4354 = vmatpush1.bf16.msra.mxu0 %v3825
    %4355 = vmatprep.subr.bf16.mxu0 0
    %4356 = vmatpush1.bf16.msra.mxu0 %v3832
    %4357 = vmatprep.subr.bf16.mxu0 0
    %4358 = vmatpush1.bf16.msra.mxu0 %v3839
    %4359 = vmatprep.mubr.bf16.mxu0 %v2938
    %4360 = vmatmul.mubr.bf16.gmra.mrb[0].mxu0 %v2937
    %v4361 = vpop.f32.mrb[0].mxu0
    %v4362 = vadd.f32 %v3170, %v4361
    %v4363 = vpop.f32.mrb[0].mxu0
    %v4364 = vpop.f32.mrb[0].mxu0
    %v4365 = vpop.f32.mrb[0].mxu0
    %4366 = vdwg.mxu0
    %4367 = vmatprep.subr.bf16.mxu0 0
    %4368 = vmatpush1.bf16.msra.mxu0 %v3846
    %4369 = vmatprep.subr.bf16.mxu0 0
    %4370 = vmatpush1.bf16.msra.mxu0 %v3853
    %4371 = vmatprep.subr.bf16.mxu0 0
    %4372 = vmatpush1.bf16.msra.mxu0 %v3860
    %4373 = vmatprep.subr.bf16.mxu0 0
    %4374 = vmatpush1.bf16.msra.mxu0 %v3867
    %4375 = vmatprep.subr.bf16.mxu0 0
    %4376 = vmatpush1.bf16.msra.mxu0 %v3874
    %4377 = vmatprep.subr.bf16.mxu0 0
    %4378 = vmatpush1.bf16.msra.mxu0 %v3881
    %4379 = vmatprep.subr.bf16.mxu0 0
    %4380 = vmatpush1.bf16.msra.mxu0 %v3888
    %4381 = vmatprep.subr.bf16.mxu0 0
    %4382 = vmatpush1.bf16.msra.mxu0 %v3895
    %4383 = vmatprep.subr.bf16.mxu0 0
    %4384 = vmatpush1.bf16.msra.mxu0 %v3902
    %4385 = vmatprep.subr.bf16.mxu0 0
    %4386 = vmatpush1.bf16.msra.mxu0 0
    %4387 = vmatprep.subr.bf16.mxu0 0
    %4388 = vmatpush1.bf16.msra.mxu0 0
    %4389 = vmatprep.subr.bf16.mxu0 0
    %4390 = vmatpush1.bf16.msra.mxu0 0
    %4391 = vmatprep.subr.bf16.mxu0 0
    %4392 = vmatpush1.bf16.msra.mxu0 0
    %4393 = vmatprep.subr.bf16.mxu0 0
    %4394 = vmatpush1.bf16.msra.mxu0 0
    %4395 = vmatprep.subr.bf16.mxu0 0
    %4396 = vmatpush1.bf16.msra.mxu0 0
    %4397 = vmatprep.subr.bf16.mxu0 0
    %4398 = vmatpush1.bf16.msra.mxu0 0
    %4399 = vmatprep.mubr.bf16.mxu0 %v4079
    %4400 = vmatmul.mubr.bf16.gmra.mrb[0].mxu0 %v2939
    %v4401 = vpop.f32.mrb[0].mxu0
    %v4402 = vadd.f32 %v4362, %v4401
    %v4403 = vpop.f32.mrb[0].mxu0
    %v4404 = vpop.f32.mrb[0].mxu0
    %v4405 = vpop.f32.mrb[0].mxu0
    %4406 = vdwg.mxu0
    %v4407 = vxor.u32 %v4157, 2147483648
    %v4408 = vxor.u32 %v4159, 2147483648
    %v4409 = vxor.u32 %v4239, 2147483648
    %v4410 = vxor.u32 %v4241, 2147483648
    %v4411 = vxor.u32 %v4321, 2147483648
    %v4412 = vxor.u32 %v4323, 2147483648
    %v4413 = vxor.u32 %v4402, 2147483648
    %v4414 = vmul.f32 %v4407, 1.442695
    %v4415 = vpow.pop %v4414
    %v4416 = vmul.f32 %v4408, 1.442695
    %v4417 = vpow.pop %v4416
    %v4418 = vmul.f32 %v4409, 1.442695
    %v4419 = vpow.pop %v4418
    %v4420 = vmul.f32 %v4410, 1.442695
    %v4421 = vpow.pop %v4420
    %v4422 = vmul.f32 %v4411, 1.442695
    %v4423 = vpow.pop %v4422
    %v4424 = vmul.f32 %v4412, 1.442695
    %v4425 = vpow.pop %v4424
    %v4426 = vmul.f32 %v4413, 1.442695
    %v4427 = vpow.pop %v4426
    %v4428 = vadd.f32 %v4415, 1.0
    %v4429 = vadd.f32 %v4417, 1.0
    %v4430 = vadd.f32 %v4419, 1.0
    %v4431 = vadd.f32 %v4421, 1.0
    %v4432 = vadd.f32 %v4423, 1.0
    %v4433 = vadd.f32 %v4425, 1.0
    %v4434 = vadd.f32 %v4427, 1.0
    %v4435 = vrcp.pop %v4428
    %v4436 = vmul.f32 1.0, %v4435
    %v4437 = vrcp.pop %v4429
    %v4438 = vmul.f32 1.0, %v4437
    %v4439 = vrcp.pop %v4430
    %v4440 = vmul.f32 1.0, %v4439
    %v4441 = vrcp.pop %v4431
    %v4442 = vmul.f32 1.0, %v4441
    %v4443 = vrcp.pop %v4432
    %v4444 = vmul.f32 1.0, %v4443
    %v4445 = vrcp.pop %v4433
    %v4446 = vmul.f32 1.0, %v4445
    %v4447 = vrcp.pop %v4434
    %v4448 = vmul.f32 1.0, %v4447
    %4449 = vst [vmem:[#allocation2] sm:$0xff] %v4436
    %4450 = vst [vmem:[#allocation2 + $0x8] sm:$0xff] %v4438
    %4451 = vst [vmem:[#allocation2 + $0x10] sm:$0xff] %v4440
    %4452 = vst [vmem:[#allocation2 + $0x18] sm:$0xff] %v4442
    %4453 = vst [vmem:[#allocation2 + $0x20] sm:$0xff] %v4444
    %4454 = vst [vmem:[#allocation2 + $0x28] sm:$0xff] %v4446
    %4455 = vst.msk [vmem:[#allocation2 + $0x30] sm:$0xff] %vm1382, %v4448
    %4456 = vst.msk [vmem:[#allocation4] sm:$0xff] %vm2444, %v2357
    %4457 = vst.msk [vmem:[#allocation6] sm:$0xff] %vm2444, %v2359
    // Predicated region
    $region70: #{tpu_custom_call.1} parent=1 // pred_check
      _
    $region71: #{tpu_custom_call.1} parent=1 // pred_check_branch
      %4459 = sbr.rel (0) target = $region73
    $region72: #{tpu_custom_call.1} parent=1 // pred_region
      %s4461 = ssub.s32 896, 896
      %4462 = vsyncadd [#allocation3], %s4461
      %s4464 = sshll.u32 [#allocation2], 4
      %s4465 = int_to_ptr.vmem [resolvable:$true] %s4464
      %4467 = dma.vmem_to_hbm [thread:$0]  %s4465, 896, %s17, [#allocation3]
    $region73: #{tpu_custom_call.1} parent=1 // pred_fallthru
      _
    // Predicated region
    $region74: #{tpu_custom_call.1} parent=1 // pred_check
      _
    $region75: #{tpu_custom_call.1} parent=1 // pred_check_branch
      %4469 = sbr.rel (0) target = $region77
    $region76: #{tpu_custom_call.1} parent=1 // pred_region
      %s4471 = ssub.s32 128, 128
      %4472 = vsyncadd [#allocation5], %s4471
      %s4474 = sshll.u32 [#allocation4], 4
      %s4475 = int_to_ptr.vmem [resolvable:$true] %s4474
      %4477 = dma.vmem_to_hbm [thread:$0]  %s4475, 128, %s18, [#allocation5]
    $region77: #{tpu_custom_call.1} parent=1 // pred_fallthru
      _
    // Predicated region
    $region78: #{tpu_custom_call.1} parent=1 // pred_check
      _
    $region79: #{tpu_custom_call.1} parent=1 // pred_check_branch
      %4479 = sbr.rel (0) target = $region81
    $region80: #{tpu_custom_call.1} parent=1 // pred_region
      %s4481 = ssub.s32 128, 128
      %4482 = vsyncadd [#allocation5], %s4481
      %s4484 = sshll.u32 [#allocation6], 4
      %s4485 = int_to_ptr.vmem [resolvable:$true] %s4484
      %4487 = dma.vmem_to_hbm [thread:$0]  %s4485, 128, %s19, [#allocation5]
    $region81: #{tpu_custom_call.1} parent=1 // pred_fallthru
      _
    // Predicated region
    $region82: #{tpu_custom_call.1} parent=1 // pred_check
      _
    $region83: #{tpu_custom_call.1} parent=1 // pred_check_branch
      %4489 = sbr.rel (0) target = $region85
    $region84: #{tpu_custom_call.1} parent=1 // pred_region
      %4490 = dma.done [#allocation3], 896
    $region85: #{tpu_custom_call.1} parent=1 // pred_fallthru
      _
    // Predicated region
    $region86: #{tpu_custom_call.1} parent=1 // pred_check
      _
    $region87: #{tpu_custom_call.1} parent=1 // pred_check_branch
      %4492 = sbr.rel (0) target = $region89
    $region88: #{tpu_custom_call.1} parent=1 // pred_region
      %4493 = dma.done [#allocation5], 128
    $region89: #{tpu_custom_call.1} parent=1 // pred_fallthru
      _
    // Predicated region
    $region90: #{tpu_custom_call.1} parent=1 // pred_check
      _
    $region91: #{tpu_custom_call.1} parent=1 // pred_check_branch
      %4495 = sbr.rel (0) target = $region93
    $region92: #{tpu_custom_call.1} parent=1 // pred_region
      %4496 = dma.done [#allocation5], 128
    $region93: #{tpu_custom_call.1} parent=1 // pred_fallthru
      _
    %4497 = vsyncpa [#allocation3], 1
    %4498 = vsyncpa [#allocation5], 1

</llo_original>
